<compile_context>
chip_gen: v6e
topology: v6e:2x2x1
jax: 0.10.0
libtpu: 0.0.40
codegen_flags: <defaults>
</compile_context>

<pallas_src>
import functools

import jax
import jax.numpy as jnp
from jax import lax
from jax.experimental import pallas as pl
from jax.experimental.pallas import tpu as pltpu

_MXU_DTYPE = jnp.bfloat16          # MXU-native input dtype (v5e/v6e/v7x); f32 accumulation.
_DEFAULT_SCOPED_VMEM = 32 * 1024 * 1024


# ----------------------------- Pallas kernels ------------------------------ #

def _conv_tap_accumulate(x_ref, w_ref, H, Wp, KH, KW):
    """KH*KW shifted MXU dots with f32 accumulation.

    x_ref block: (1, Cin, L) -- padded image flattened row-major over the
    padded width Wp (plus one zero slack row), so tap (kh, kw) is the static
    lane window starting at kh*Wp + kw.  Returns f32 (Cout, H*Wp).
    """
    cout = w_ref.shape[1]
    hwp = H * Wp
    x = x_ref[0]                                        # (Cin, L), bf16
    acc = jnp.zeros((cout, hwp), jnp.float32)
    for kh in range(KH):
        for kw in range(KW):
            tap = kh * KW + kw
            start = kh * Wp + kw
            xs = x[:, start:start + hwp]                # (Cin, H*Wp) lane slice
            acc = acc + jnp.dot(w_ref[tap], xs,
                                preferred_element_type=jnp.float32)
    return acc


def _conv_kernel(x_ref, w_ref, b_ref, y_ref, *, H, Wp, KH, KW):
    acc = _conv_tap_accumulate(x_ref, w_ref, H, Wp, KH, KW)
    y_ref[0] = (acc + b_ref[...]).astype(y_ref.dtype)   # lane-dense (Cout, H*Wp) store


def _conv_stats_kernel(x_ref, w_ref, b_ref, mask_ref, y_ref, ssum_ref, ssq_ref,
                       *, H, Wp, KH, KW):
    """conv + fused per-channel sum / sum-of-squares for BatchNorm batch stats.

    The stats outputs use a constant block index across the batch grid axis
    (axis marked 'arbitrary'), i.e. they stay resident in VMEM and accumulate.
    """
    acc = _conv_tap_accumulate(x_ref, w_ref, H, Wp, KH, KW)
    y = acc + b_ref[...]                                # f32 (Cout, H*Wp)
    y_ref[0] = y.astype(y_ref.dtype)

    @pl.when(pl.program_id(0) == 0)
    def _init():
        ssum_ref[...] = jnp.zeros_like(ssum_ref)
        ssq_ref[...] = jnp.zeros_like(ssq_ref)

    # mask zeroes the padded garbage columns; reduction runs over the (long,
    # lane-dense) spatial axis.
    m = mask_ref[...]                                   # (1, H*Wp), 1.0 on valid cols
    ym = y * m
    ssum_ref[...] += jnp.sum(ym, axis=1, keepdims=True)       # (Cout, 1)
    ssq_ref[...] += jnp.sum(ym * y, axis=1, keepdims=True)    # (Cout, 1)


def _scale_act_kernel(y_ref, sc_ref, sh_ref, o_ref, *, act):
    # y_ref: (1, C, tile) lane-dense; sc/sh: per-channel scale/shift (C, 1)
    z = y_ref[0].astype(jnp.float32) * sc_ref[...] + sh_ref[...]
    if act == "relu":                 # F.leaky_relu, default negative_slope=0.01
        z = jnp.where(z >= 0, z, 0.01 * z)
    elif act == "tanh":
        z = jnp.tanh(z)
    elif act == "sigmoid":
        z = jax.nn.sigmoid(z)
    o_ref[0] = z.astype(o_ref.dtype)


# ------------------------------- wrappers ---------------------------------- #

def _maybe_vmem_limit(block_bytes):
    """Only raise the scoped-VMEM limit when the double-buffered working set
    needs it; stay inside the v7x 64 MiB physical budget."""
    need = 2 * int(block_bytes)
    if need <= _DEFAULT_SCOPED_VMEM:
        return None
    return min(need * 5 // 4, 60 * 1024 * 1024)


def _pick_hw_tile(hw, max_tile=4096):
    """Largest lane-dense tile (multiple of 128) dividing hw, capped at max_tile."""
    if hw <= max_tile:
        return hw
    for t in range(max_tile, 127, -128):
        if hw % t == 0:
            return t
    return hw


def conv2d_pallas(x_nchw, w_oihw, b, *, with_stats=False, out_dtype=jnp.float32):
    """Odd-kernel, stride-1, 'same' conv on NCHW data via shifted-dot Pallas kernel.

    Returns (N, Cout, H, W); if with_stats, also returns per-channel
    (sum, sum_sq) over the batch for BatchNorm training statistics.
    """
    N, Cin, H, W = x_nchw.shape
    Cout, _, KH, KW = w_oihw.shape
    ph, pw = (KH - 1) // 2, (KW - 1) // 2
    Hp, Wp = H + 2 * ph, W + 2 * pw
    HWp = H * Wp                       # flattened output length (incl. pad columns)
    L = (Hp + 1) * Wp                  # one extra zero row so every tap slice is in range

    # pad spatially (extra zero row at the bottom) and flatten over padded width
    xp = jnp.pad(x_nchw.astype(_MXU_DTYPE),
                 ((0, 0), (0, 0), (ph, ph + 1), (pw, pw)))
    xf = xp.reshape(N, Cin, L)

    # (Cout, Cin, KH, KW) -> (KH*KW, Cout, Cin): one (Cout, Cin) matrix per tap
    wt = jnp.transpose(w_oihw, (2, 3, 0, 1)).reshape(KH * KW, Cout, Cin)
    wt = wt.astype(_MXU_DTYPE)
    b2 = b.reshape(Cout, 1).astype(jnp.float32)

    in_item = jnp.dtype(_MXU_DTYPE).itemsize
    out_item = jnp.dtype(out_dtype).itemsize
    flops = 2 * N * HWp * (KH * KW * Cin) * Cout
    bytes_accessed = (N * Cin * L * in_item + KH * KW * Cout * Cin * in_item
                      + Cout * 4 + N * Cout * HWp * out_item)
    cost = pl.CostEstimate(flops=flops, transcendentals=0,
                           bytes_accessed=int(bytes_accessed))
    block_bytes = (Cin * L * in_item + KH * KW * Cout * Cin * in_item + Cout * 4
                   + Cout * HWp * max(out_item, 4) + Cout * HWp * 4)
    vmem_limit = _maybe_vmem_limit(block_bytes)

    x_spec = pl.BlockSpec((1, Cin, L), lambda n: (n, 0, 0))
    w_spec = pl.BlockSpec((KH * KW, Cout, Cin), lambda n: (0, 0, 0))
    b_spec = pl.BlockSpec((Cout, 1), lambda n: (0, 0))
    y_spec = pl.BlockSpec((1, Cout, HWp), lambda n: (n, 0, 0))

    if not with_stats:
        out = pl.pallas_call(
            functools.partial(_conv_kernel, H=H, Wp=Wp, KH=KH, KW=KW),
            out_shape=jax.ShapeDtypeStruct((N, Cout, HWp), out_dtype),
            grid=(N,),
            in_specs=[x_spec, w_spec, b_spec],
            out_specs=y_spec,
            compiler_params=pltpu.CompilerParams(
                dimension_semantics=("parallel",),
                vmem_limit_bytes=vmem_limit),
            cost_estimate=cost,
        )(xf, wt, b2)
        return out.reshape(N, Cout, H, Wp)[:, :, :, :W]

    # conv2 path: fuse per-channel sum / sum-of-squares into the epilogue so h2
    # is not re-read from HBM for BatchNorm statistics.
    mask = ((jnp.arange(HWp) % Wp) < W).astype(jnp.float32).reshape(1, HWp)
    y, ssum, ssq = pl.pallas_call(
        functools.partial(_conv_stats_kernel, H=H, Wp=Wp, KH=KH, KW=KW),
        out_shape=(jax.ShapeDtypeStruct((N, Cout, HWp), out_dtype),
                   jax.ShapeDtypeStruct((Cout, 1), jnp.float32),
                   jax.ShapeDtypeStruct((Cout, 1), jnp.float32)),
        grid=(N,),
        in_specs=[x_spec, w_spec, b_spec,
                  pl.BlockSpec((1, HWp), lambda n: (0, 0))],
        out_specs=(y_spec,
                   pl.BlockSpec((Cout, 1), lambda n: (0, 0)),
                   pl.BlockSpec((Cout, 1), lambda n: (0, 0))),
        compiler_params=pltpu.CompilerParams(
            dimension_semantics=("arbitrary",),   # stats accumulate across batch steps
            vmem_limit_bytes=vmem_limit),
        cost_estimate=cost,
    )(xf, wt, b2, mask)
    return y.reshape(N, Cout, H, Wp)[:, :, :, :W], ssum[:, 0], ssq[:, 0]


def bn_act_pallas(x_nchw, scale, shift, act):
    """Per-channel affine normalize + activation, tiled & lane-dense."""
    N, C, H, W = x_nchw.shape
    HW = H * W
    x3 = x_nchw.reshape(N, C, HW)
    tile = _pick_hw_tile(HW)
    grid = (N, HW // tile)
    trans = N * C * HW if act in ("tanh", "sigmoid") else 0
    cost = pl.CostEstimate(flops=2 * N * C * HW, transcendentals=trans,
                           bytes_accessed=2 * N * C * HW * 4 + 2 * C * 4)
    out = pl.pallas_call(
        functools.partial(_scale_act_kernel, act=act),
        out_shape=jax.ShapeDtypeStruct((N, C, HW), jnp.float32),
        grid=grid,
        in_specs=[pl.BlockSpec((1, C, tile), lambda n, j: (n, 0, j)),
                  pl.BlockSpec((C, 1), lambda n, j: (0, 0)),
                  pl.BlockSpec((C, 1), lambda n, j: (0, 0))],
        out_specs=pl.BlockSpec((1, C, tile), lambda n, j: (n, 0, j)),
        compiler_params=pltpu.CompilerParams(
            dimension_semantics=("parallel", "parallel")),
        cost_estimate=cost,
    )(x3, scale.reshape(C, 1).astype(jnp.float32),
      shift.reshape(C, 1).astype(jnp.float32))
    return out.reshape(N, C, H, W)


def _bilinear_matrix(size_in, scale=2):
    """1-D interpolation matrix matching nn.Upsample(scale_factor=2,
    mode='bilinear', align_corners=False); shape (scale*size_in, size_in)."""
    size_out = scale * size_in
    dst = jnp.arange(size_out, dtype=jnp.float32)
    src = jnp.maximum((dst + 0.5) / scale - 0.5, 0.0)
    i0 = jnp.floor(src).astype(jnp.int32)
    lam = src - i0.astype(jnp.float32)
    i1 = jnp.minimum(i0 + 1, size_in - 1)
    return (jax.nn.one_hot(i0, size_in, dtype=jnp.float32) * (1.0 - lam)[:, None]
            + jax.nn.one_hot(i1, size_in, dtype=jnp.float32) * lam[:, None])


def upsample_bilinear_x2(x_nchw):
    """Separable 2x bilinear upsample as two small dense matmuls (MXU-friendly
    replacement for the gather-based formulation); NCHW in/out."""
    _, _, H, W = x_nchw.shape
    mh = _bilinear_matrix(H)
    mw = _bilinear_matrix(W)
    return jnp.einsum('Hh,nchw,Ww->ncHW', mh, x_nchw, mw)


def up_block_skip_forward(params, x_in, x_up, func="relu", eps=1e-5):
    """UpBlockSkip.forward.  x_in: (N, C1, H, W); x_up: (N, C2, 2H, 2W); NCHW."""
    x = upsample_bilinear_x2(x_in.astype(jnp.float32))
    x_cat = jnp.concatenate([x, x_up.astype(jnp.float32)], axis=1)   # torch.cat(dim=1)

    # conv1 (+Dropout2d(p=0)==identity); intermediate kept bf16 for the next MXU stage
    h1 = conv2d_pallas(x_cat, params["w1"], params["b1"], out_dtype=_MXU_DTYPE)

    if func in ("tanh", "relu", "sigmoid"):
        # conv2 with fused BatchNorm batch statistics (training mode, biased var)
        h2, ssum, ssq = conv2d_pallas(h1, params["w2"], params["b2"],
                                      with_stats=True, out_dtype=jnp.float32)
        n_elems = h2.shape[0] * h2.shape[2] * h2.shape[3]
        mean = ssum / n_elems
        var = jnp.maximum(ssq / n_elems - mean * mean, 0.0)
        scale = params["gamma"] * lax.rsqrt(var + eps)
        shift = params["beta"] - mean * scale
        return bn_act_pallas(h2, scale, shift, act=func)
    # func is None: return x1 (no BN / activation)
    return conv2d_pallas(h1, params["w2"], params["b2"], out_dtype=jnp.float32)


def init_params(key, in_channels, out_channels, k=3):
    k1, k2, k3, k4 = jax.random.split(key, 4)
    fan1 = in_channels * k * k
    fan2 = out_channels * k * k
    b1 = 1.0 / jnp.sqrt(fan1)
    b2 = 1.0 / jnp.sqrt(fan2)
    return {
        # torch Conv2d layout: (out_channels, in_channels, kh, kw)
        "w1": jax.random.uniform(k1, (out_channels, in_channels, k, k), jnp.float32, -b1, b1),
        "b1": jax.random.uniform(k2, (out_channels,), jnp.float32, -b1, b1),
        "w2": jax.random.uniform(k3, (out_channels, out_channels, k, k), jnp.float32, -b2, b2),
        "b2": jax.random.uniform(k4, (out_channels,), jnp.float32, -b2, b2),
        "gamma": jnp.ones((out_channels,), jnp.float32),   # BN weight init
        "beta": jnp.zeros((out_channels,), jnp.float32),   # BN bias init
    }


if __name__ == "__main__":
    key = jax.random.PRNGKey(0)
    kx, ku, kp = jax.random.split(key, 3)

    N, C_low, H, W = 2, 4, 8, 8          # x_in (upsampled 2x -> 16x16)
    C_up = 4                             # skip-connection channels
    in_channels = C_low + C_up           # conv1 input channels after concat
    out_channels = 4

    x_in = jax.random.normal(kx, (N, C_low, H, W), jnp.float32)
    x_up = jax.random.normal(ku, (N, C_up, 2 * H, 2 * W), jnp.float32)
    params = init_params(kp, in_channels, out_channels, k=3)

    fwd_relu = jax.jit(functools.partial(up_block_skip_forward, func="relu"))
    fwd_tanh = jax.jit(functools.partial(up_block_skip_forward, func="tanh"))
    fwd_none = jax.jit(functools.partial(up_block_skip_forward, func=None))

    out = jax.block_until_ready(fwd_relu(params, x_in, x_up))
    assert out.shape == (N, out_channels, 2 * H, 2 * W), out.shape
    assert jnp.all(jnp.isfinite(out))

    out_t = jax.block_until_ready(fwd_tanh(params, x_in, x_up))
    assert out_t.shape == (N, out_channels, 2 * H, 2 * W)
    assert jnp.all(jnp.isfinite(out_t))

    out_n = jax.block_until_ready(fwd_none(params, x_in, x_up))
    assert out_n.shape == (N, out_channels, 2 * H, 2 * W)
    assert jnp.all(jnp.isfinite(out_n))

    print("KERNEL_OK")
</pallas_src>

<mosaic_0001>
module attributes {stable_mosaic.version = 11 : i64} {
  func.func @_conv_kernel(%arg0: i32, %arg1: memref<1x8x342xbf16, #tpu.memory_space<vmem>>, %arg2: memref<9x4x8xbf16, #tpu.memory_space<vmem>>, %arg3: memref<4x1xf32, #tpu.memory_space<vmem>>, %arg4: memref<1x4x288xbf16, #tpu.memory_space<vmem>>) attributes {dimension_semantics = [#tpu.dimension_semantics<parallel>], iteration_bounds = array<i64: 2>, scalar_prefetch = 0 : i64, scratch_operands = 0 : i64, tpu.core_type = #tpu.core_type<tc>, window_params = [{transform_indices = @transform_0, window_bounds = array<i64: 1, 8, 342>}, {pipeline_mode = #tpu.pipeline_mode<synchronous>, transform_indices = @transform_1, window_bounds = array<i64: 9, 4, 8>}, {pipeline_mode = #tpu.pipeline_mode<synchronous>, transform_indices = @transform_2, window_bounds = array<i64: 4, 1>}, {transform_indices = @transform_3, window_bounds = array<i64: 1, 4, 288>}]} {
    %c0 = arith.constant 0 : index
    %c0_0 = arith.constant 0 : index
    %c0_1 = arith.constant 0 : index
    %0 = vector.load %arg1[%c0, %c0_0, %c0_1] : memref<1x8x342xbf16, #tpu.memory_space<vmem>>, vector<1x8x342xbf16>
    %1 = vector.shape_cast %0 : vector<1x8x342xbf16> to vector<8x342xbf16>
    %cst = arith.constant 0.000000e+00 : f32
    %2 = vector.broadcast %cst : f32 to vector<4x288xf32>
    %3 = vector.extract_strided_slice %1 {offsets = [0, 0], sizes = [8, 288], strides = [1, 1]} : vector<8x342xbf16> to vector<8x288xbf16>
    %c0_2 = arith.constant 0 : index
    %c0_3 = arith.constant 0 : index
    %c0_4 = arith.constant 0 : index
    %4 = vector.load %arg2[%c0_2, %c0_3, %c0_4] : memref<9x4x8xbf16, #tpu.memory_space<vmem>>, vector<1x4x8xbf16>
    %5 = vector.shape_cast %4 : vector<1x4x8xbf16> to vector<4x8xbf16>
    %cst_5 = arith.constant dense<0.000000e+00> : vector<4x288xf32>
    %6 = tpu.matmul %5, %3, %cst_5 {dimension_numbers = #tpu.dot_dimension_numbers<[1], [0], [0], [1], [0, 0, 1, 1], [], []>} : vector<4x8xbf16>, vector<8x288xbf16>, vector<4x288xf32> -> vector<4x288xf32>
    %7 = arith.addf %2, %6 : vector<4x288xf32>
    %8 = vector.extract_strided_slice %1 {offsets = [0, 1], sizes = [8, 288], strides = [1, 1]} : vector<8x342xbf16> to vector<8x288xbf16>
    %c1 = arith.constant 1 : index
    %c0_6 = arith.constant 0 : index
    %c0_7 = arith.constant 0 : index
    %9 = vector.load %arg2[%c1, %c0_6, %c0_7] : memref<9x4x8xbf16, #tpu.memory_space<vmem>>, vector<1x4x8xbf16>
    %10 = vector.shape_cast %9 : vector<1x4x8xbf16> to vector<4x8xbf16>
    %cst_8 = arith.constant dense<0.000000e+00> : vector<4x288xf32>
    %11 = tpu.matmul %10, %8, %cst_8 {dimension_numbers = #tpu.dot_dimension_numbers<[1], [0], [0], [1], [0, 0, 1, 1], [], []>} : vector<4x8xbf16>, vector<8x288xbf16>, vector<4x288xf32> -> vector<4x288xf32>
    %12 = arith.addf %7, %11 : vector<4x288xf32>
    %13 = vector.extract_strided_slice %1 {offsets = [0, 2], sizes = [8, 288], strides = [1, 1]} : vector<8x342xbf16> to vector<8x288xbf16>
    %c2 = arith.constant 2 : index
    %c0_9 = arith.constant 0 : index
    %c0_10 = arith.constant 0 : index
    %14 = vector.load %arg2[%c2, %c0_9, %c0_10] : memref<9x4x8xbf16, #tpu.memory_space<vmem>>, vector<1x4x8xbf16>
    %15 = vector.shape_cast %14 : vector<1x4x8xbf16> to vector<4x8xbf16>
    %cst_11 = arith.constant dense<0.000000e+00> : vector<4x288xf32>
    %16 = tpu.matmul %15, %13, %cst_11 {dimension_numbers = #tpu.dot_dimension_numbers<[1], [0], [0], [1], [0, 0, 1, 1], [], []>} : vector<4x8xbf16>, vector<8x288xbf16>, vector<4x288xf32> -> vector<4x288xf32>
    %17 = arith.addf %12, %16 : vector<4x288xf32>
    %18 = vector.extract_strided_slice %1 {offsets = [0, 18], sizes = [8, 288], strides = [1, 1]} : vector<8x342xbf16> to vector<8x288xbf16>
    %c3 = arith.constant 3 : index
    %c0_12 = arith.constant 0 : index
    %c0_13 = arith.constant 0 : index
    %19 = vector.load %arg2[%c3, %c0_12, %c0_13] : memref<9x4x8xbf16, #tpu.memory_space<vmem>>, vector<1x4x8xbf16>
    %20 = vector.shape_cast %19 : vector<1x4x8xbf16> to vector<4x8xbf16>
    %cst_14 = arith.constant dense<0.000000e+00> : vector<4x288xf32>
    %21 = tpu.matmul %20, %18, %cst_14 {dimension_numbers = #tpu.dot_dimension_numbers<[1], [0], [0], [1], [0, 0, 1, 1], [], []>} : vector<4x8xbf16>, vector<8x288xbf16>, vector<4x288xf32> -> vector<4x288xf32>
    %22 = arith.addf %17, %21 : vector<4x288xf32>
    %23 = vector.extract_strided_slice %1 {offsets = [0, 19], sizes = [8, 288], strides = [1, 1]} : vector<8x342xbf16> to vector<8x288xbf16>
    %c4 = arith.constant 4 : index
    %c0_15 = arith.constant 0 : index
    %c0_16 = arith.constant 0 : index
    %24 = vector.load %arg2[%c4, %c0_15, %c0_16] : memref<9x4x8xbf16, #tpu.memory_space<vmem>>, vector<1x4x8xbf16>
    %25 = vector.shape_cast %24 : vector<1x4x8xbf16> to vector<4x8xbf16>
    %cst_17 = arith.constant dense<0.000000e+00> : vector<4x288xf32>
    %26 = tpu.matmul %25, %23, %cst_17 {dimension_numbers = #tpu.dot_dimension_numbers<[1], [0], [0], [1], [0, 0, 1, 1], [], []>} : vector<4x8xbf16>, vector<8x288xbf16>, vector<4x288xf32> -> vector<4x288xf32>
    %27 = arith.addf %22, %26 : vector<4x288xf32>
    %28 = vector.extract_strided_slice %1 {offsets = [0, 20], sizes = [8, 288], strides = [1, 1]} : vector<8x342xbf16> to vector<8x288xbf16>
    %c5 = arith.constant 5 : index
    %c0_18 = arith.constant 0 : index
    %c0_19 = arith.constant 0 : index
    %29 = vector.load %arg2[%c5, %c0_18, %c0_19] : memref<9x4x8xbf16, #tpu.memory_space<vmem>>, vector<1x4x8xbf16>
    %30 = vector.shape_cast %29 : vector<1x4x8xbf16> to vector<4x8xbf16>
    %cst_20 = arith.constant dense<0.000000e+00> : vector<4x288xf32>
    %31 = tpu.matmul %30, %28, %cst_20 {dimension_numbers = #tpu.dot_dimension_numbers<[1], [0], [0], [1], [0, 0, 1, 1], [], []>} : vector<4x8xbf16>, vector<8x288xbf16>, vector<4x288xf32> -> vector<4x288xf32>
    %32 = arith.addf %27, %31 : vector<4x288xf32>
    %33 = vector.extract_strided_slice %1 {offsets = [0, 36], sizes = [8, 288], strides = [1, 1]} : vector<8x342xbf16> to vector<8x288xbf16>
    %c6 = arith.constant 6 : index
    %c0_21 = arith.constant 0 : index
    %c0_22 = arith.constant 0 : index
    %34 = vector.load %arg2[%c6, %c0_21, %c0_22] : memref<9x4x8xbf16, #tpu.memory_space<vmem>>, vector<1x4x8xbf16>
    %35 = vector.shape_cast %34 : vector<1x4x8xbf16> to vector<4x8xbf16>
    %cst_23 = arith.constant dense<0.000000e+00> : vector<4x288xf32>
    %36 = tpu.matmul %35, %33, %cst_23 {dimension_numbers = #tpu.dot_dimension_numbers<[1], [0], [0], [1], [0, 0, 1, 1], [], []>} : vector<4x8xbf16>, vector<8x288xbf16>, vector<4x288xf32> -> vector<4x288xf32>
    %37 = arith.addf %32, %36 : vector<4x288xf32>
    %38 = vector.extract_strided_slice %1 {offsets = [0, 37], sizes = [8, 288], strides = [1, 1]} : vector<8x342xbf16> to vector<8x288xbf16>
    %c7 = arith.constant 7 : index
    %c0_24 = arith.constant 0 : index
    %c0_25 = arith.constant 0 : index
    %39 = vector.load %arg2[%c7, %c0_24, %c0_25] : memref<9x4x8xbf16, #tpu.memory_space<vmem>>, vector<1x4x8xbf16>
    %40 = vector.shape_cast %39 : vector<1x4x8xbf16> to vector<4x8xbf16>
    %cst_26 = arith.constant dense<0.000000e+00> : vector<4x288xf32>
    %41 = tpu.matmul %40, %38, %cst_26 {dimension_numbers = #tpu.dot_dimension_numbers<[1], [0], [0], [1], [0, 0, 1, 1], [], []>} : vector<4x8xbf16>, vector<8x288xbf16>, vector<4x288xf32> -> vector<4x288xf32>
    %42 = arith.addf %37, %41 : vector<4x288xf32>
    %43 = vector.extract_strided_slice %1 {offsets = [0, 38], sizes = [8, 288], strides = [1, 1]} : vector<8x342xbf16> to vector<8x288xbf16>
    %c8 = arith.constant 8 : index
    %c0_27 = arith.constant 0 : index
    %c0_28 = arith.constant 0 : index
    %44 = vector.load %arg2[%c8, %c0_27, %c0_28] : memref<9x4x8xbf16, #tpu.memory_space<vmem>>, vector<1x4x8xbf16>
    %45 = vector.shape_cast %44 : vector<1x4x8xbf16> to vector<4x8xbf16>
    %cst_29 = arith.constant dense<0.000000e+00> : vector<4x288xf32>
    %46 = tpu.matmul %45, %43, %cst_29 {dimension_numbers = #tpu.dot_dimension_numbers<[1], [0], [0], [1], [0, 0, 1, 1], [], []>} : vector<4x8xbf16>, vector<8x288xbf16>, vector<4x288xf32> -> vector<4x288xf32>
    %47 = arith.addf %42, %46 : vector<4x288xf32>
    %c0_30 = arith.constant 0 : index
    %c0_31 = arith.constant 0 : index
    %48 = vector.load %arg3[%c0_30, %c0_31] : memref<4x1xf32, #tpu.memory_space<vmem>>, vector<4x1xf32>
    %49 = vector.broadcast %48 : vector<4x1xf32> to vector<4x288xf32>
    %50 = arith.addf %47, %49 : vector<4x288xf32>
    %51 = arith.truncf %50 : vector<4x288xf32> to vector<4x288xbf16>
    %c0_32 = arith.constant 0 : index
    %c0_33 = arith.constant 0 : index
    %c0_34 = arith.constant 0 : index
    %52 = vector.load %arg4[%c0_32, %c0_33, %c0_34] : memref<1x4x288xbf16, #tpu.memory_space<vmem>>, vector<1x4x288xbf16>
    %53 = vector.shape_cast %52 : vector<1x4x288xbf16> to vector<4x288xbf16>
    %54 = vector.shape_cast %51 : vector<4x288xbf16> to vector<1x4x288xbf16>
    tpu.vector_store %arg4[%c0_32, %c0_33, %c0_34], %54 {strides = array<i32>} : memref<1x4x288xbf16, #tpu.memory_space<vmem>>, vector<1x4x288xbf16>,
    return
  }
  func.func @transform_0(%arg0: i32) -> (i32, i32, i32) {
    %c0_i32 = arith.constant 0 : i32
    %c0_i32_0 = arith.constant 0 : i32
    %c0_i32_1 = arith.constant 0 : i32
    return %arg0, %c0_i32, %c0_i32_0 : i32, i32, i32
  }
  func.func @transform_1(%arg0: i32) -> (i32, i32, i32) {
    %c0_i32 = arith.constant 0 : i32
    %c0_i32_0 = arith.constant 0 : i32
    %c0_i32_1 = arith.constant 0 : i32
    %c0_i32_2 = arith.constant 0 : i32
    return %c0_i32, %c0_i32_0, %c0_i32_1 : i32, i32, i32
  }
  func.func @transform_2(%arg0: i32) -> (i32, i32) {
    %c0_i32 = arith.constant 0 : i32
    %c0_i32_0 = arith.constant 0 : i32
    %c0_i32_1 = arith.constant 0 : i32
    return %c0_i32, %c0_i32_0 : i32, i32
  }
  func.func @transform_3(%arg0: i32) -> (i32, i32, i32) {
    %c0_i32 = arith.constant 0 : i32
    %c0_i32_0 = arith.constant 0 : i32
    %c0_i32_1 = arith.constant 0 : i32
    return %arg0, %c0_i32, %c0_i32_0 : i32, i32, i32
  }
}

module attributes {stable_mosaic.version = 11 : i64} {
  func.func @_conv_stats_kernel(%arg0: i32, %arg1: memref<1x4x342xbf16, #tpu.memory_space<vmem>>, %arg2: memref<9x4x4xbf16, #tpu.memory_space<vmem>>, %arg3: memref<4x1xf32, #tpu.memory_space<vmem>>, %arg4: memref<1x288xf32, #tpu.memory_space<vmem>>, %arg5: memref<1x4x288xf32, #tpu.memory_space<vmem>>, %arg6: memref<4x1xf32, #tpu.memory_space<vmem>>, %arg7: memref<4x1xf32, #tpu.memory_space<vmem>>) attributes {dimension_semantics = [#tpu.dimension_semantics<arbitrary>], iteration_bounds = array<i64: 2>, scalar_prefetch = 0 : i64, scratch_operands = 0 : i64, tpu.core_type = #tpu.core_type<tc>, window_params = [{transform_indices = @transform_0, window_bounds = array<i64: 1, 4, 342>}, {pipeline_mode = #tpu.pipeline_mode<synchronous>, transform_indices = @transform_1, window_bounds = array<i64: 9, 4, 4>}, {pipeline_mode = #tpu.pipeline_mode<synchronous>, transform_indices = @transform_2, window_bounds = array<i64: 4, 1>}, {pipeline_mode = #tpu.pipeline_mode<synchronous>, transform_indices = @transform_3, window_bounds = array<i64: 1, 288>}, {transform_indices = @transform_4, window_bounds = array<i64: 1, 4, 288>}, {pipeline_mode = #tpu.pipeline_mode<synchronous>, transform_indices = @transform_5, window_bounds = array<i64: 4, 1>}, {pipeline_mode = #tpu.pipeline_mode<synchronous>, transform_indices = @transform_6, window_bounds = array<i64: 4, 1>}]} {
    %c0 = arith.constant 0 : index
    %c0_0 = arith.constant 0 : index
    %c0_1 = arith.constant 0 : index
    %0 = vector.load %arg1[%c0, %c0_0, %c0_1] : memref<1x4x342xbf16, #tpu.memory_space<vmem>>, vector<1x4x342xbf16>
    %1 = vector.shape_cast %0 : vector<1x4x342xbf16> to vector<4x342xbf16>
    %cst = arith.constant 0.000000e+00 : f32
    %2 = vector.broadcast %cst : f32 to vector<4x288xf32>
    %3 = vector.extract_strided_slice %1 {offsets = [0, 0], sizes = [4, 288], strides = [1, 1]} : vector<4x342xbf16> to vector<4x288xbf16>
    %c0_2 = arith.constant 0 : index
    %c0_3 = arith.constant 0 : index
    %c0_4 = arith.constant 0 : index
    %4 = vector.load %arg2[%c0_2, %c0_3, %c0_4] : memref<9x4x4xbf16, #tpu.memory_space<vmem>>, vector<1x4x4xbf16>
    %5 = vector.shape_cast %4 : vector<1x4x4xbf16> to vector<4x4xbf16>
    %cst_5 = arith.constant dense<0.000000e+00> : vector<4x288xf32>
    %6 = tpu.matmul %5, %3, %cst_5 {dimension_numbers = #tpu.dot_dimension_numbers<[1], [0], [0], [1], [0, 0, 1, 1], [], []>} : vector<4x4xbf16>, vector<4x288xbf16>, vector<4x288xf32> -> vector<4x288xf32>
    %7 = arith.addf %2, %6 : vector<4x288xf32>
    %8 = vector.extract_strided_slice %1 {offsets = [0, 1], sizes = [4, 288], strides = [1, 1]} : vector<4x342xbf16> to vector<4x288xbf16>
    %c1 = arith.constant 1 : index
    %c0_6 = arith.constant 0 : index
    %c0_7 = arith.constant 0 : index
    %9 = vector.load %arg2[%c1, %c0_6, %c0_7] : memref<9x4x4xbf16, #tpu.memory_space<vmem>>, vector<1x4x4xbf16>
    %10 = vector.shape_cast %9 : vector<1x4x4xbf16> to vector<4x4xbf16>
    %cst_8 = arith.constant dense<0.000000e+00> : vector<4x288xf32>
    %11 = tpu.matmul %10, %8, %cst_8 {dimension_numbers = #tpu.dot_dimension_numbers<[1], [0], [0], [1], [0, 0, 1, 1], [], []>} : vector<4x4xbf16>, vector<4x288xbf16>, vector<4x288xf32> -> vector<4x288xf32>
    %12 = arith.addf %7, %11 : vector<4x288xf32>
    %13 = vector.extract_strided_slice %1 {offsets = [0, 2], sizes = [4, 288], strides = [1, 1]} : vector<4x342xbf16> to vector<4x288xbf16>
    %c2 = arith.constant 2 : index
    %c0_9 = arith.constant 0 : index
    %c0_10 = arith.constant 0 : index
    %14 = vector.load %arg2[%c2, %c0_9, %c0_10] : memref<9x4x4xbf16, #tpu.memory_space<vmem>>, vector<1x4x4xbf16>
    %15 = vector.shape_cast %14 : vector<1x4x4xbf16> to vector<4x4xbf16>
    %cst_11 = arith.constant dense<0.000000e+00> : vector<4x288xf32>
    %16 = tpu.matmul %15, %13, %cst_11 {dimension_numbers = #tpu.dot_dimension_numbers<[1], [0], [0], [1], [0, 0, 1, 1], [], []>} : vector<4x4xbf16>, vector<4x288xbf16>, vector<4x288xf32> -> vector<4x288xf32>
    %17 = arith.addf %12, %16 : vector<4x288xf32>
    %18 = vector.extract_strided_slice %1 {offsets = [0, 18], sizes = [4, 288], strides = [1, 1]} : vector<4x342xbf16> to vector<4x288xbf16>
    %c3 = arith.constant 3 : index
    %c0_12 = arith.constant 0 : index
    %c0_13 = arith.constant 0 : index
    %19 = vector.load %arg2[%c3, %c0_12, %c0_13] : memref<9x4x4xbf16, #tpu.memory_space<vmem>>, vector<1x4x4xbf16>
    %20 = vector.shape_cast %19 : vector<1x4x4xbf16> to vector<4x4xbf16>
    %cst_14 = arith.constant dense<0.000000e+00> : vector<4x288xf32>
    %21 = tpu.matmul %20, %18, %cst_14 {dimension_numbers = #tpu.dot_dimension_numbers<[1], [0], [0], [1], [0, 0, 1, 1], [], []>} : vector<4x4xbf16>, vector<4x288xbf16>, vector<4x288xf32> -> vector<4x288xf32>
    %22 = arith.addf %17, %21 : vector<4x288xf32>
    %23 = vector.extract_strided_slice %1 {offsets = [0, 19], sizes = [4, 288], strides = [1, 1]} : vector<4x342xbf16> to vector<4x288xbf16>
    %c4 = arith.constant 4 : index
    %c0_15 = arith.constant 0 : index
    %c0_16 = arith.constant 0 : index
    %24 = vector.load %arg2[%c4, %c0_15, %c0_16] : memref<9x4x4xbf16, #tpu.memory_space<vmem>>, vector<1x4x4xbf16>
    %25 = vector.shape_cast %24 : vector<1x4x4xbf16> to vector<4x4xbf16>
    %cst_17 = arith.constant dense<0.000000e+00> : vector<4x288xf32>
    %26 = tpu.matmul %25, %23, %cst_17 {dimension_numbers = #tpu.dot_dimension_numbers<[1], [0], [0], [1], [0, 0, 1, 1], [], []>} : vector<4x4xbf16>, vector<4x288xbf16>, vector<4x288xf32> -> vector<4x288xf32>
    %27 = arith.addf %22, %26 : vector<4x288xf32>
    %28 = vector.extract_strided_slice %1 {offsets = [0, 20], sizes = [4, 288], strides = [1, 1]} : vector<4x342xbf16> to vector<4x288xbf16>
    %c5 = arith.constant 5 : index
    %c0_18 = arith.constant 0 : index
    %c0_19 = arith.constant 0 : index
    %29 = vector.load %arg2[%c5, %c0_18, %c0_19] : memref<9x4x4xbf16, #tpu.memory_space<vmem>>, vector<1x4x4xbf16>
    %30 = vector.shape_cast %29 : vector<1x4x4xbf16> to vector<4x4xbf16>
    %cst_20 = arith.constant dense<0.000000e+00> : vector<4x288xf32>
    %31 = tpu.matmul %30, %28, %cst_20 {dimension_numbers = #tpu.dot_dimension_numbers<[1], [0], [0], [1], [0, 0, 1, 1], [], []>} : vector<4x4xbf16>, vector<4x288xbf16>, vector<4x288xf32> -> vector<4x288xf32>
    %32 = arith.addf %27, %31 : vector<4x288xf32>
    %33 = vector.extract_strided_slice %1 {offsets = [0, 36], sizes = [4, 288], strides = [1, 1]} : vector<4x342xbf16> to vector<4x288xbf16>
    %c6 = arith.constant 6 : index
    %c0_21 = arith.constant 0 : index
    %c0_22 = arith.constant 0 : index
    %34 = vector.load %arg2[%c6, %c0_21, %c0_22] : memref<9x4x4xbf16, #tpu.memory_space<vmem>>, vector<1x4x4xbf16>
    %35 = vector.shape_cast %34 : vector<1x4x4xbf16> to vector<4x4xbf16>
    %cst_23 = arith.constant dense<0.000000e+00> : vector<4x288xf32>
    %36 = tpu.matmul %35, %33, %cst_23 {dimension_numbers = #tpu.dot_dimension_numbers<[1], [0], [0], [1], [0, 0, 1, 1], [], []>} : vector<4x4xbf16>, vector<4x288xbf16>, vector<4x288xf32> -> vector<4x288xf32>
    %37 = arith.addf %32, %36 : vector<4x288xf32>
    %38 = vector.extract_strided_slice %1 {offsets = [0, 37], sizes = [4, 288], strides = [1, 1]} : vector<4x342xbf16> to vector<4x288xbf16>
    %c7 = arith.constant 7 : index
    %c0_24 = arith.constant 0 : index
    %c0_25 = arith.constant 0 : index
    %39 = vector.load %arg2[%c7, %c0_24, %c0_25] : memref<9x4x4xbf16, #tpu.memory_space<vmem>>, vector<1x4x4xbf16>
    %40 = vector.shape_cast %39 : vector<1x4x4xbf16> to vector<4x4xbf16>
    %cst_26 = arith.constant dense<0.000000e+00> : vector<4x288xf32>
    %41 = tpu.matmul %40, %38, %cst_26 {dimension_numbers = #tpu.dot_dimension_numbers<[1], [0], [0], [1], [0, 0, 1, 1], [], []>} : vector<4x4xbf16>, vector<4x288xbf16>, vector<4x288xf32> -> vector<4x288xf32>
    %42 = arith.addf %37, %41 : vector<4x288xf32>
    %43 = vector.extract_strided_slice %1 {offsets = [0, 38], sizes = [4, 288], strides = [1, 1]} : vector<4x342xbf16> to vector<4x288xbf16>
    %c8 = arith.constant 8 : index
    %c0_27 = arith.constant 0 : index
    %c0_28 = arith.constant 0 : index
    %44 = vector.load %arg2[%c8, %c0_27, %c0_28] : memref<9x4x4xbf16, #tpu.memory_space<vmem>>, vector<1x4x4xbf16>
    %45 = vector.shape_cast %44 : vector<1x4x4xbf16> to vector<4x4xbf16>
    %cst_29 = arith.constant dense<0.000000e+00> : vector<4x288xf32>
    %46 = tpu.matmul %45, %43, %cst_29 {dimension_numbers = #tpu.dot_dimension_numbers<[1], [0], [0], [1], [0, 0, 1, 1], [], []>} : vector<4x4xbf16>, vector<4x288xbf16>, vector<4x288xf32> -> vector<4x288xf32>
    %47 = arith.addf %42, %46 : vector<4x288xf32>
    %c0_30 = arith.constant 0 : index
    %c0_31 = arith.constant 0 : index
    %48 = vector.load %arg3[%c0_30, %c0_31] : memref<4x1xf32, #tpu.memory_space<vmem>>, vector<4x1xf32>
    %49 = vector.broadcast %48 : vector<4x1xf32> to vector<4x288xf32>
    %50 = arith.addf %47, %49 : vector<4x288xf32>
    %c0_32 = arith.constant 0 : index
    %c0_33 = arith.constant 0 : index
    %c0_34 = arith.constant 0 : index
    %51 = vector.load %arg5[%c0_32, %c0_33, %c0_34] : memref<1x4x288xf32, #tpu.memory_space<vmem>>, vector<1x4x288xf32>
    %52 = vector.shape_cast %51 : vector<1x4x288xf32> to vector<4x288xf32>
    %53 = vector.shape_cast %50 : vector<4x288xf32> to vector<1x4x288xf32>
    tpu.vector_store %arg5[%c0_32, %c0_33, %c0_34], %53 {strides = array<i32>} : memref<1x4x288xf32, #tpu.memory_space<vmem>>, vector<1x4x288xf32>,
    %c0_i32 = arith.constant 0 : i32
    %54 = arith.cmpi eq, %arg0, %c0_i32 : i32
    %55 = arith.extui %54 : i1 to i32
    %c0_i32_35 = arith.constant 0 : i32
    %56 = arith.cmpi ne, %55, %c0_i32_35 : i32
    scf.if %56 {
      %cst_48 = arith.constant 0.000000e+00 : f32
      %71 = vector.broadcast %cst_48 : f32 to vector<4x1xf32>
      %c0_49 = arith.constant 0 : index
      %c0_50 = arith.constant 0 : index
      %72 = vector.load %arg6[%c0_49, %c0_50] : memref<4x1xf32, #tpu.memory_space<vmem>>, vector<4x1xf32>
      tpu.vector_store %arg6[%c0_49, %c0_50], %71 {strides = array<i32>} : memref<4x1xf32, #tpu.memory_space<vmem>>, vector<4x1xf32>,
      %cst_51 = arith.constant 0.000000e+00 : f32
      %73 = vector.broadcast %cst_51 : f32 to vector<4x1xf32>
      %c0_52 = arith.constant 0 : index
      %c0_53 = arith.constant 0 : index
      %74 = vector.load %arg7[%c0_52, %c0_53] : memref<4x1xf32, #tpu.memory_space<vmem>>, vector<4x1xf32>
      tpu.vector_store %arg7[%c0_52, %c0_53], %73 {strides = array<i32>} : memref<4x1xf32, #tpu.memory_space<vmem>>, vector<4x1xf32>,
    } else {
    }
    %c0_36 = arith.constant 0 : index
    %c0_37 = arith.constant 0 : index
    %57 = vector.load %arg4[%c0_36, %c0_37] : memref<1x288xf32, #tpu.memory_space<vmem>>, vector<1x288xf32>
    %58 = vector.broadcast %57 : vector<1x288xf32> to vector<4x288xf32>
    %59 = arith.mulf %50, %58 : vector<4x288xf32>
    %c0_38 = arith.constant 0 : index
    %c0_39 = arith.constant 0 : index
    %60 = vector.load %arg6[%c0_38, %c0_39] : memref<4x1xf32, #tpu.memory_space<vmem>>, vector<4x1xf32>
    %cst_40 = arith.constant dense<0.000000e+00> : vector<4xf32>
    %61 = vector.multi_reduction <add>, %59, %cst_40 [1] : vector<4x288xf32> to vector<4xf32>
    %62 = vector.shape_cast %61 : vector<4xf32> to vector<4x1xf32>
    %63 = arith.addf %60, %62 : vector<4x1xf32>
    %c0_41 = arith.constant 0 : index
    %c0_42 = arith.constant 0 : index
    %64 = vector.load %arg6[%c0_41, %c0_42] : memref<4x1xf32, #tpu.memory_space<vmem>>, vector<4x1xf32>
    tpu.vector_store %arg6[%c0_41, %c0_42], %63 {strides = array<i32>} : memref<4x1xf32, #tpu.memory_space<vmem>>, vector<4x1xf32>,
    %c0_43 = arith.constant 0 : index
    %c0_44 = arith.constant 0 : index
    %65 = vector.load %arg7[%c0_43, %c0_44] : memref<4x1xf32, #tpu.memory_space<vmem>>, vector<4x1xf32>
    %66 = arith.mulf %59, %50 : vector<4x288xf32>
    %cst_45 = arith.constant dense<0.000000e+00> : vector<4xf32>
    %67 = vector.multi_reduction <add>, %66, %cst_45 [1] : vector<4x288xf32> to vector<4xf32>
    %68 = vector.shape_cast %67 : vector<4xf32> to vector<4x1xf32>
    %69 = arith.addf %65, %68 : vector<4x1xf32>
    %c0_46 = arith.constant 0 : index
    %c0_47 = arith.constant 0 : index
    %70 = vector.load %arg7[%c0_46, %c0_47] : memref<4x1xf32, #tpu.memory_space<vmem>>, vector<4x1xf32>
    tpu.vector_store %arg7[%c0_46, %c0_47], %69 {strides = array<i32>} : memref<4x1xf32, #tpu.memory_space<vmem>>, vector<4x1xf32>,
    return
  }
  func.func @transform_0(%arg0: i32) -> (i32, i32, i32) {
    %c0_i32 = arith.constant 0 : i32
    %c0_i32_0 = arith.constant 0 : i32
    %c0_i32_1 = arith.constant 0 : i32
    return %arg0, %c0_i32, %c0_i32_0 : i32, i32, i32
  }
  func.func @transform_1(%arg0: i32) -> (i32, i32, i32) {
    %c0_i32 = arith.constant 0 : i32
    %c0_i32_0 = arith.constant 0 : i32
    %c0_i32_1 = arith.constant 0 : i32
    %c0_i32_2 = arith.constant 0 : i32
    return %c0_i32, %c0_i32_0, %c0_i32_1 : i32, i32, i32
  }
  func.func @transform_2(%arg0: i32) -> (i32, i32) {
    %c0_i32 = arith.constant 0 : i32
    %c0_i32_0 = arith.constant 0 : i32
    %c0_i32_1 = arith.constant 0 : i32
    return %c0_i32, %c0_i32_0 : i32, i32
  }
  func.func @transform_3(%arg0: i32) -> (i32, i32) {
    %c0_i32 = arith.constant 0 : i32
    %c0_i32_0 = arith.constant 0 : i32
    %c0_i32_1 = arith.constant 0 : i32
    return %c0_i32, %c0_i32_0 : i32, i32
  }
  func.func @transform_4(%arg0: i32) -> (i32, i32, i32) {
    %c0_i32 = arith.constant 0 : i32
    %c0_i32_0 = arith.constant 0 : i32
    %c0_i32_1 = arith.constant 0 : i32
    return %arg0, %c0_i32, %c0_i32_0 : i32, i32, i32
  }
  func.func @transform_5(%arg0: i32) -> (i32, i32) {
    %c0_i32 = arith.constant 0 : i32
    %c0_i32_0 = arith.constant 0 : i32
    %c0_i32_1 = arith.constant 0 : i32
    return %c0_i32, %c0_i32_0 : i32, i32
  }
  func.func @transform_6(%arg0: i32) -> (i32, i32) {
    %c0_i32 = arith.constant 0 : i32
    %c0_i32_0 = arith.constant 0 : i32
    %c0_i32_1 = arith.constant 0 : i32
    return %c0_i32, %c0_i32_0 : i32, i32
  }
}

module attributes {stable_mosaic.version = 11 : i64} {
  func.func @_scale_act_kernel(%arg0: i32, %arg1: i32, %arg2: memref<1x4x256xf32, #tpu.memory_space<vmem>>, %arg3: memref<4x1xf32, #tpu.memory_space<vmem>>, %arg4: memref<4x1xf32, #tpu.memory_space<vmem>>, %arg5: memref<1x4x256xf32, #tpu.memory_space<vmem>>) attributes {dimension_semantics = [#tpu.dimension_semantics<parallel>, #tpu.dimension_semantics<parallel>], iteration_bounds = array<i64: 2, 1>, scalar_prefetch = 0 : i64, scratch_operands = 0 : i64, tpu.core_type = #tpu.core_type<tc>, window_params = [{transform_indices = @transform_0, window_bounds = array<i64: 1, 4, 256>}, {pipeline_mode = #tpu.pipeline_mode<synchronous>, transform_indices = @transform_1, window_bounds = array<i64: 4, 1>}, {pipeline_mode = #tpu.pipeline_mode<synchronous>, transform_indices = @transform_2, window_bounds = array<i64: 4, 1>}, {transform_indices = @transform_3, window_bounds = array<i64: 1, 4, 256>}]} {
    %c0 = arith.constant 0 : index
    %c0_0 = arith.constant 0 : index
    %c0_1 = arith.constant 0 : index
    %0 = vector.load %arg2[%c0, %c0_0, %c0_1] : memref<1x4x256xf32, #tpu.memory_space<vmem>>, vector<1x4x256xf32>
    %1 = vector.shape_cast %0 : vector<1x4x256xf32> to vector<4x256xf32>
    %c0_2 = arith.constant 0 : index
    %c0_3 = arith.constant 0 : index
    %2 = vector.load %arg3[%c0_2, %c0_3] : memref<4x1xf32, #tpu.memory_space<vmem>>, vector<4x1xf32>
    %3 = vector.broadcast %2 : vector<4x1xf32> to vector<4x256xf32>
    %4 = arith.mulf %1, %3 : vector<4x256xf32>
    %c0_4 = arith.constant 0 : index
    %c0_5 = arith.constant 0 : index
    %5 = vector.load %arg4[%c0_4, %c0_5] : memref<4x1xf32, #tpu.memory_space<vmem>>, vector<4x1xf32>
    %6 = vector.broadcast %5 : vector<4x1xf32> to vector<4x256xf32>
    %7 = arith.addf %4, %6 : vector<4x256xf32>
    %cst = arith.constant 0.000000e+00 : f32
    %8 = vector.broadcast %cst : f32 to vector<4x256xf32>
    %9 = arith.cmpf oge, %7, %8 : vector<4x256xf32>
    %cst_6 = arith.constant 0.00999999977 : f32
    %10 = vector.broadcast %cst_6 : f32 to vector<4x256xf32>
    %11 = arith.mulf %10, %7 : vector<4x256xf32>
    %12 = arith.select %9, %7, %11 : vector<4x256xi1>, vector<4x256xf32>
    %c0_7 = arith.constant 0 : index
    %c0_8 = arith.constant 0 : index
    %c0_9 = arith.constant 0 : index
    %13 = vector.load %arg5[%c0_7, %c0_8, %c0_9] : memref<1x4x256xf32, #tpu.memory_space<vmem>>, vector<1x4x256xf32>
    %14 = vector.shape_cast %13 : vector<1x4x256xf32> to vector<4x256xf32>
    %15 = vector.shape_cast %12 : vector<4x256xf32> to vector<1x4x256xf32>
    tpu.vector_store %arg5[%c0_7, %c0_8, %c0_9], %15 {strides = array<i32>} : memref<1x4x256xf32, #tpu.memory_space<vmem>>, vector<1x4x256xf32>,
    return
  }
  func.func @transform_0(%arg0: i32, %arg1: i32) -> (i32, i32, i32) {
    %c0_i32 = arith.constant 0 : i32
    %c0_i32_0 = arith.constant 0 : i32
    return %arg0, %c0_i32, %arg1 : i32, i32, i32
  }
  func.func @transform_1(%arg0: i32, %arg1: i32) -> (i32, i32) {
    %c0_i32 = arith.constant 0 : i32
    %c0_i32_0 = arith.constant 0 : i32
    %c0_i32_1 = arith.constant 0 : i32
    return %c0_i32, %c0_i32_0 : i32, i32
  }
  func.func @transform_2(%arg0: i32, %arg1: i32) -> (i32, i32) {
    %c0_i32 = arith.constant 0 : i32
    %c0_i32_0 = arith.constant 0 : i32
    %c0_i32_1 = arith.constant 0 : i32
    return %c0_i32, %c0_i32_0 : i32, i32
  }
  func.func @transform_3(%arg0: i32, %arg1: i32) -> (i32, i32, i32) {
    %c0_i32 = arith.constant 0 : i32
    %c0_i32_0 = arith.constant 0 : i32
    return %arg0, %c0_i32, %arg1 : i32, i32, i32
  }
}

</mosaic_0001>

<llo_original>
// kernel: up_block_skip_forward.5
$region0: #{up_block_skip_forward.5}
  #allocation0 [shape = 'u32[]', space=smem, size = 0x4, offset = 0x4, fixed_abs, tag = 'smem constant byte address 0x4 - core index']
  #allocation1 [shape = 'u32[144,128]{1,0:T(1,128)}', space=vmem, size = 0x12000, scoped, tag = 'internal scratch']
  %s0 = inlined_call_operand.vmem [shape: f32[2,4,256], index: 0, kind: input, shape index: {}]
  %s1 = inlined_call_operand.vmem [shape: f32[4,1], index: 1, kind: input, shape index: {}]
  %s2 = inlined_call_operand.vmem [shape: f32[4,1], index: 2, kind: input, shape index: {}]
  %s3 = inlined_call_operand.vmem [shape: f32[2,4,256], index: 3, kind: output, shape index: {}]
  %s4 = sld [smem:[#allocation0]]
  $region45: #{up_block_skip_forward.5} parent=0
    _
  %s6 = ssub.s32 1, %s4
  %s7 = scalar_select 0, %s6, %s4
  loop: start=0, step=1, limit=4
  $region2: #{up_block_skip_forward.5} parent=0 // loop_pre_header
    _
  $region3: #{up_block_skip_forward.5} parent=0 // loop_header
    %s9 = sphi 0, %s13
    %p10 = scmp.ge.s32.totalorder %s9, 4
    %s16 = sphi 0, %s28
    %s17 = sphi 0, %s24
    %s18 = sphi 0, %s16
    %s19 = sphi 0, %s17
    %s20 = sphi 0, %s18
    %s21 = sphi 0, %s19
    %s33 = sphi 0, %s35
    %s36 = sphi 0, %s33
    %s37 = sphi 0, %s36
    %s53 = sphi 0, %s37
    %s57 = sphi 0, %s57
    %s59 = sphi 0, %s57
    %s60 = sphi 0, %s59
    %s74 = sphi 0, %s60
    %s78 = sphi 0, %s78
    %s80 = sphi 0, %s78
    %s81 = sphi 0, %s80
    %s95 = sphi 0, %s81
    %s103 = sphi 0, %s105
    %s106 = sphi 0, %s103
    %s107 = sphi 0, %s106
    %s123 = sphi 0, %s107
  $region4: #{up_block_skip_forward.5} parent=0 // loop_header_branch
    %12 = sbr.rel (%p10) target = $region8
  $region5: #{up_block_skip_forward.5} parent=0 // loop_body
    %s14 = ssub.s32 %s9, 1
    %s15 = ssub.s32 %s9, 2
    %s22 = sadd.s32 1, %s17
    %p23 = scmp.ge.s32.totalorder %s22, 1
    %s24 = scalar_select %p23, 0, %s22
    %s25 = sadd.s32 1, %s16
    %s26 = scalar_select %p23, %s25, %s16
    %p27 = scmp.ge.s32.totalorder %s26, 2
    %s28 = scalar_select %p27, 0, %s26
    %s29 = ssub.s32 %s16, %s28
    %s30 = ssub.s32 %s17, %s24
    %s31 = sor.u32 %s29, %s30
    %p32 = scmp.eq.s32.totalorder %s31, 0
    %s34 = sadd.s32 %s33, 1
    %s35 = scalar_select %p32, %s33, %s34
    %p38 = pneg %p32
    %p39 = scmp.eq.s32.totalorder %s9, 1
    %p40 = por %p38, %p39
    %p41 = scmp.ne.s32.totalorder %s33, %s36
    %p42 = scmp.eq.s32.totalorder %s9, 0
    %p43 = por %p41, %p42
    %p44 = scmp.ne.s32.totalorder %s33, %s36
    %p45 = scmp.eq.s32.totalorder %s14, 1
    %p46 = por %p44, %p45
    %p47 = scmp.ne.s32.totalorder %s36, %s37
    %p48 = scmp.eq.s32.totalorder %s14, 0
    %p49 = por %p47, %p48
    %p50 = scmp.ne.s32.totalorder %s36, %s37
    %p51 = scmp.eq.s32.totalorder %s15, 1
    %p52 = por %p50, %p51
    %p54 = scmp.ne.s32.totalorder %s37, %s53
    %p55 = scmp.eq.s32.totalorder %s15, 0
    %p56 = por %p54, %p55
    %s58 = sadd.s32 %s57, 1
    %p61 = scmp.eq.s32.totalorder %s9, 1
    %p62 = scmp.ne.s32.totalorder %s57, %s59
    %p63 = scmp.eq.s32.totalorder %s9, 0
    %p64 = por %p62, %p63
    %p65 = scmp.ne.s32.totalorder %s57, %s59
    %p66 = scmp.eq.s32.totalorder %s14, 1
    %p67 = por %p65, %p66
    %p68 = scmp.ne.s32.totalorder %s59, %s60
    %p69 = scmp.eq.s32.totalorder %s14, 0
    %p70 = por %p68, %p69
    %p71 = scmp.ne.s32.totalorder %s59, %s60
    %p72 = scmp.eq.s32.totalorder %s15, 1
    %p73 = por %p71, %p72
    %p75 = scmp.ne.s32.totalorder %s60, %s74
    %p76 = scmp.eq.s32.totalorder %s15, 0
    %p77 = por %p75, %p76
    %s79 = sadd.s32 %s78, 1
    %p82 = scmp.eq.s32.totalorder %s9, 1
    %p83 = scmp.ne.s32.totalorder %s78, %s80
    %p84 = scmp.eq.s32.totalorder %s9, 0
    %p85 = por %p83, %p84
    %p86 = scmp.ne.s32.totalorder %s78, %s80
    %p87 = scmp.eq.s32.totalorder %s14, 1
    %p88 = por %p86, %p87
    %p89 = scmp.ne.s32.totalorder %s80, %s81
    %p90 = scmp.eq.s32.totalorder %s14, 0
    %p91 = por %p89, %p90
    %p92 = scmp.ne.s32.totalorder %s80, %s81
    %p93 = scmp.eq.s32.totalorder %s15, 1
    %p94 = por %p92, %p93
    %p96 = scmp.ne.s32.totalorder %s81, %s95
    %p97 = scmp.eq.s32.totalorder %s15, 0
    %p98 = por %p96, %p97
    %s99 = ssub.s32 %s16, %s28
    %s100 = ssub.s32 %s17, %s24
    %s101 = sor.u32 %s99, %s100
    %p102 = scmp.eq.s32.totalorder %s101, 0
    %s104 = sadd.s32 %s103, 1
    %s105 = scalar_select %p102, %s103, %s104
    %p108 = pneg %p102
    %p109 = scmp.eq.s32.totalorder %s9, 1
    %p110 = por %p108, %p109
    %p111 = scmp.ne.s32.totalorder %s103, %s106
    %p112 = scmp.eq.s32.totalorder %s9, 0
    %p113 = por %p111, %p112
    %p114 = scmp.ne.s32.totalorder %s103, %s106
    %p115 = scmp.eq.s32.totalorder %s14, 1
    %p116 = por %p114, %p115
    %p117 = scmp.ne.s32.totalorder %s106, %s107
    %p118 = scmp.eq.s32.totalorder %s14, 0
    %p119 = por %p117, %p118
    %p120 = scmp.ne.s32.totalorder %s106, %s107
    %p121 = scmp.eq.s32.totalorder %s15, 1
    %p122 = por %p120, %p121
    %p124 = scmp.ne.s32.totalorder %s107, %s123
    %p125 = scmp.eq.s32.totalorder %s15, 0
    %p126 = por %p124, %p125
    %p127 = scmp.le.s32.totalorder 1, %s9
    %p128 = scmp.lt.s32.totalorder %s9, 3
    %p129 = pnand %p127, %p128
    %p130 = pneg %p129
    // Predicated region
    $region9: #{up_block_skip_forward.5} parent=5 // pred_check
      _
    $region10: #{up_block_skip_forward.5} parent=5 // pred_check_branch
      %132 = sbr.rel (%p129) target = $region12
    $region11: #{up_block_skip_forward.5} parent=5 // pred_region
      %s133 = ssub.s32 %s9, 1
      // Predicated region
      $region13: #{up_block_skip_forward.5} parent=11 // pred_check
        %p134 = pneg %p70
      $region14: #{up_block_skip_forward.5} parent=11 // pred_check_branch
        %136 = sbr.rel (%p134) target = $region16
      $region15: #{up_block_skip_forward.5} parent=11 // pred_region
        _
      $region16: #{up_block_skip_forward.5} parent=11 // pred_fallthru
        _
      // Predicated region
      $region17: #{up_block_skip_forward.5} parent=11 // pred_check
        %p137 = pneg %p91
      $region18: #{up_block_skip_forward.5} parent=11 // pred_check_branch
        %139 = sbr.rel (%p137) target = $region20
      $region19: #{up_block_skip_forward.5} parent=11 // pred_region
        _
      $region20: #{up_block_skip_forward.5} parent=11 // pred_fallthru
        _
    $region12: #{up_block_skip_forward.5} parent=5 // pred_fallthru
      _
    %p140 = scmp.lt.s32.totalorder %s9, 2
    // Predicated region
    $region21: #{up_block_skip_forward.5} parent=5 // pred_check
      %p141 = pneg %p140
    $region22: #{up_block_skip_forward.5} parent=5 // pred_check_branch
      %143 = sbr.rel (%p141) target = $region24
    $region23: #{up_block_skip_forward.5} parent=5 // pred_region
      // Predicated region
      $region25: #{up_block_skip_forward.5} parent=23 // pred_check
        %p144 = pneg %p43
      $region26: #{up_block_skip_forward.5} parent=23 // pred_check_branch
        %146 = sbr.rel (%p144) target = $region28
      $region27: #{up_block_skip_forward.5} parent=23 // pred_region
        %s147 = smul.u32 2, %s17
        %p148 = scmp.lt.s32.totalorder %s16, 1
        %s149 = scalar_select %p148, %s16, 1
        %p150 = scmp.lt.s32.totalorder %s147, 1
        %s151 = scalar_select %p150, %s147, 1
        %s152 = smul.addr %s149, 2
        %s153 = sadd.s32 %s151, %s152
        %s154 = smul.addr %s153, 4
        %s155 = scalar_lea.vmem %s0, %s154
        %s156 = smul.u32 2, %s17
      $region28: #{up_block_skip_forward.5} parent=23 // pred_fallthru
        _
    $region24: #{up_block_skip_forward.5} parent=5 // pred_fallthru
      _
    %p157 = scmp.le.s32.totalorder 1, %s9
    %p158 = scmp.lt.s32.totalorder %s9, 3
    %p159 = pnand %p157, %p158
    %p160 = pneg %p159
    // Predicated region
    $region29: #{up_block_skip_forward.5} parent=5 // pred_check
      _
    $region30: #{up_block_skip_forward.5} parent=5 // pred_check_branch
      %162 = sbr.rel (%p159) target = $region32
    $region31: #{up_block_skip_forward.5} parent=5 // pred_region
      %s163 = ssub.s32 %s9, 1
      %s164 = smul.u32 2, %s19
      %p165 = scmp.lt.s32.totalorder %s18, 1
      %s166 = scalar_select %p165, %s18, 1
      %p167 = scmp.lt.s32.totalorder %s164, 1
      %s168 = scalar_select %p167, %s164, 1
      %s169 = smul.addr %s166, 2
      %s170 = sadd.s32 %s168, %s169
      %s171 = smul.addr %s170, 4
      %s172 = scalar_lea.vmem %s0, %s171
      %p173 = pneg %p49
      %p174 = pneg %p46
      %p175 = pneg %p70
      %p176 = pneg %p67
      %p177 = pneg %p91
      %p178 = pneg %p88
      %p179 = pneg %p119
      %p180 = pneg %p116
      %s181 = smul.u32 2, %s19
      %p182 = scmp.lt.s32.totalorder %s18, 1
      %s183 = scalar_select %p182, %s18, 1
      %p184 = scmp.lt.s32.totalorder %s181, 1
      %s185 = scalar_select %p184, %s181, 1
      %s186 = smul.addr %s183, 2
      %s187 = sadd.s32 %s185, %s186
      %s188 = smul.addr %s187, 4
      %s189 = scalar_lea.vmem %s3, %s188
      %s190 = smul.u32 2, %s19
      %p191 = scmp.lt.s32.totalorder %s18, 1
      %s192 = scalar_select %p191, %s18, 1
      %p193 = scmp.lt.s32.totalorder %s190, 1
      %s194 = scalar_select %p193, %s190, 1
      %s195 = smul.addr %s192, 2
      %s196 = sadd.s32 %s194, %s195
      %s197 = smul.addr %s196, 4
      %s198 = scalar_lea.vmem %s0, %s197
      %s199 = smul.u32 2, %s19
      %s200 = smul.u32 2, %s19
      %p201 = scmp.lt.s32.totalorder %s18, 1
      %s202 = scalar_select %p201, %s18, 1
      %p203 = scmp.lt.s32.totalorder %s200, 1
      %s204 = scalar_select %p203, %s200, 1
      %s205 = smul.addr %s202, 2
      %s206 = sadd.s32 %s204, %s205
      %s207 = smul.addr %s206, 4
      %s208 = scalar_lea.vmem %s3, %s207
      %s209 = smul.u32 2, %s19
      %v210 = vld [vmem:[%s198] sm:$0xff]
      %v211 = vld [vmem:[%s1] sm:$0xf]
      %213 = vset.pattern.permute.xlu0 0
      %214 = vperm.xlu0 %213, %v211
      %v215 = vpop.permute.xlu0 %214
      %v217 = vunpack.c.l.s4 839922192
      %v218 = vunpack.c.0.s8 %v217
      %v219 = vlaneseq
      %v220 = vshrl.u32 %v219, 7
      %v221 = vsub.s32 %v218, %v220
      %v222 = vrot.slane %v215, %v221
      %v224 = vmul.f32 %v210, %v222
      %v225 = vld [vmem:[%s2] sm:$0xf]
      %227 = vset.pattern.permute.xlu0 0
      %228 = vperm.xlu0 %227, %v225
      %v229 = vpop.permute.xlu0 %228
      %v231 = vunpack.c.l.s4 839922192
      %v232 = vunpack.c.0.s8 %v231
      %v233 = vlaneseq
      %v234 = vshrl.u32 %v233, 7
      %v235 = vsub.s32 %v232, %v234
      %v236 = vrot.slane %v229, %v235
      %v238 = vadd.f32 %v224, %v236
      %vm239 = vcmp.ge.f32.partialorder %v238, 0.0
      %v240 = vmul.f32 %v238, 0.01
      %v241 = vsel %vm239, %v238, %v240
      %242 = vst [vmem:[%s208] sm:$0xff] %v241
      %s243 = smul.u32 2, %s19
      %p244 = scmp.lt.s32.totalorder %s18, 1
      %s245 = scalar_select %p244, %s18, 1
      %p246 = scmp.lt.s32.totalorder %s243, 1
      %s247 = scalar_select %p246, %s243, 1
      %s248 = smul.addr %s245, 2
      %s249 = sadd.s32 %s247, %s248
      %s250 = smul.addr %s249, 4
      %s251 = scalar_lea.vmem %s3, %s250
      // Predicated region
      $region33: #{up_block_skip_forward.5} parent=31 // pred_check
        %p252 = pneg %p116
      $region34: #{up_block_skip_forward.5} parent=31 // pred_check_branch
        %254 = sbr.rel (%p252) target = $region36
      $region35: #{up_block_skip_forward.5} parent=31 // pred_region
        %s255 = smul.u32 2, %s19
      $region36: #{up_block_skip_forward.5} parent=31 // pred_fallthru
        _
    $region32: #{up_block_skip_forward.5} parent=5 // pred_fallthru
      _
    %p256 = scmp.le.s32.totalorder 2, %s9
    // Predicated region
    $region37: #{up_block_skip_forward.5} parent=5 // pred_check
      %p257 = pneg %p256
    $region38: #{up_block_skip_forward.5} parent=5 // pred_check_branch
      %259 = sbr.rel (%p257) target = $region40
    $region39: #{up_block_skip_forward.5} parent=5 // pred_region
      %s260 = ssub.s32 %s9, 2
      // Predicated region
      $region41: #{up_block_skip_forward.5} parent=39 // pred_check
        %p261 = pneg %p122
      $region42: #{up_block_skip_forward.5} parent=39 // pred_check_branch
        %263 = sbr.rel (%p261) target = $region44
      $region43: #{up_block_skip_forward.5} parent=39 // pred_region
        %s264 = smul.u32 2, %s21
        %p265 = scmp.lt.s32.totalorder %s20, 1
        %s266 = scalar_select %p265, %s20, 1
        %p267 = scmp.lt.s32.totalorder %s264, 1
        %s268 = scalar_select %p267, %s264, 1
        %s269 = smul.addr %s266, 2
        %s270 = sadd.s32 %s268, %s269
        %s271 = smul.addr %s270, 4
        %s272 = scalar_lea.vmem %s3, %s271
      $region44: #{up_block_skip_forward.5} parent=39 // pred_fallthru
        _
    $region40: #{up_block_skip_forward.5} parent=5 // pred_fallthru
      _
  $region6: #{up_block_skip_forward.5} parent=0 // loop_footer
    %s13 = sadd.s32 1, %s9
  $region7: #{up_block_skip_forward.5} parent=0 // loop_footer_branch
    %8 = sbr.rel target = $region3
  $region8: #{up_block_skip_forward.5} parent=0 // loop_exit
    _

// kernel: up_block_skip_forward.3
$region0: #{up_block_skip_forward.3}
  #allocation0 [shape = 'u32[]', space=smem, size = 0x4, offset = 0x4, fixed_abs, tag = 'smem constant byte address 0x4 - core index']
  #allocation1 [shape = 'u32[144,128]{1,0:T(1,128)}', space=vmem, size = 0x12000, scoped, tag = 'internal scratch']
  %s0 = inlined_call_operand.vmem [shape: bf16[2,8,342], index: 0, kind: input, shape index: {}]
  %s1 = inlined_call_operand.vmem [shape: bf16[9,4,8], index: 1, kind: input, shape index: {}]
  %s2 = inlined_call_operand.vmem [shape: f32[4,1], index: 2, kind: input, shape index: {}]
  %s3 = inlined_call_operand.vmem [shape: bf16[2,4,288], index: 3, kind: output, shape index: {}]
  %s4 = sld [smem:[#allocation0]]
  $region45: #{up_block_skip_forward.3} parent=0
    _
  %s6 = ssub.s32 1, %s4
  %s7 = scalar_select 0, %s6, %s4
  loop: start=0, step=1, limit=4
  $region2: #{up_block_skip_forward.3} parent=0 // loop_pre_header
    _
  $region3: #{up_block_skip_forward.3} parent=0 // loop_header
    %s9 = sphi 0, %s13
    %p10 = scmp.ge.s32.totalorder %s9, 4
    %s19 = sphi 0, %s21
    %s22 = sphi 0, %s19
    %s23 = sphi 0, %s22
    %s39 = sphi 0, %s23
    %s43 = sphi 0, %s43
    %s45 = sphi 0, %s43
    %s46 = sphi 0, %s45
    %s60 = sphi 0, %s46
    %s64 = sphi 0, %s64
    %s66 = sphi 0, %s64
    %s67 = sphi 0, %s66
    %s81 = sphi 0, %s67
    %s87 = sphi 0, %s89
    %s90 = sphi 0, %s87
    %s91 = sphi 0, %s90
    %s107 = sphi 0, %s91
  $region4: #{up_block_skip_forward.3} parent=0 // loop_header_branch
    %12 = sbr.rel (%p10) target = $region8
  $region5: #{up_block_skip_forward.3} parent=0 // loop_body
    %s14 = ssub.s32 %s9, 1
    %s15 = ssub.s32 %s9, 2
    %s16 = sadd.s32 %s9, 1
    %s17 = ssub.s32 %s9, %s16
    %p18 = scmp.eq.s32.totalorder %s17, 0
    %s20 = sadd.s32 %s19, 1
    %s21 = scalar_select %p18, %s19, %s20
    %p24 = pneg %p18
    %p25 = scmp.eq.s32.totalorder %s9, 1
    %p26 = por %p24, %p25
    %p27 = scmp.ne.s32.totalorder %s19, %s22
    %p28 = scmp.eq.s32.totalorder %s9, 0
    %p29 = por %p27, %p28
    %p30 = scmp.ne.s32.totalorder %s19, %s22
    %p31 = scmp.eq.s32.totalorder %s14, 1
    %p32 = por %p30, %p31
    %p33 = scmp.ne.s32.totalorder %s22, %s23
    %p34 = scmp.eq.s32.totalorder %s14, 0
    %p35 = por %p33, %p34
    %p36 = scmp.ne.s32.totalorder %s22, %s23
    %p37 = scmp.eq.s32.totalorder %s15, 1
    %p38 = por %p36, %p37
    %p40 = scmp.ne.s32.totalorder %s23, %s39
    %p41 = scmp.eq.s32.totalorder %s15, 0
    %p42 = por %p40, %p41
    %s44 = sadd.s32 %s43, 1
    %p47 = scmp.eq.s32.totalorder %s9, 1
    %p48 = scmp.ne.s32.totalorder %s43, %s45
    %p49 = scmp.eq.s32.totalorder %s9, 0
    %p50 = por %p48, %p49
    %p51 = scmp.ne.s32.totalorder %s43, %s45
    %p52 = scmp.eq.s32.totalorder %s14, 1
    %p53 = por %p51, %p52
    %p54 = scmp.ne.s32.totalorder %s45, %s46
    %p55 = scmp.eq.s32.totalorder %s14, 0
    %p56 = por %p54, %p55
    %p57 = scmp.ne.s32.totalorder %s45, %s46
    %p58 = scmp.eq.s32.totalorder %s15, 1
    %p59 = por %p57, %p58
    %p61 = scmp.ne.s32.totalorder %s46, %s60
    %p62 = scmp.eq.s32.totalorder %s15, 0
    %p63 = por %p61, %p62
    %s65 = sadd.s32 %s64, 1
    %p68 = scmp.eq.s32.totalorder %s9, 1
    %p69 = scmp.ne.s32.totalorder %s64, %s66
    %p70 = scmp.eq.s32.totalorder %s9, 0
    %p71 = por %p69, %p70
    %p72 = scmp.ne.s32.totalorder %s64, %s66
    %p73 = scmp.eq.s32.totalorder %s14, 1
    %p74 = por %p72, %p73
    %p75 = scmp.ne.s32.totalorder %s66, %s67
    %p76 = scmp.eq.s32.totalorder %s14, 0
    %p77 = por %p75, %p76
    %p78 = scmp.ne.s32.totalorder %s66, %s67
    %p79 = scmp.eq.s32.totalorder %s15, 1
    %p80 = por %p78, %p79
    %p82 = scmp.ne.s32.totalorder %s67, %s81
    %p83 = scmp.eq.s32.totalorder %s15, 0
    %p84 = por %p82, %p83
    %s85 = ssub.s32 %s9, %s16
    %p86 = scmp.eq.s32.totalorder %s85, 0
    %s88 = sadd.s32 %s87, 1
    %s89 = scalar_select %p86, %s87, %s88
    %p92 = pneg %p86
    %p93 = scmp.eq.s32.totalorder %s9, 1
    %p94 = por %p92, %p93
    %p95 = scmp.ne.s32.totalorder %s87, %s90
    %p96 = scmp.eq.s32.totalorder %s9, 0
    %p97 = por %p95, %p96
    %p98 = scmp.ne.s32.totalorder %s87, %s90
    %p99 = scmp.eq.s32.totalorder %s14, 1
    %p100 = por %p98, %p99
    %p101 = scmp.ne.s32.totalorder %s90, %s91
    %p102 = scmp.eq.s32.totalorder %s14, 0
    %p103 = por %p101, %p102
    %p104 = scmp.ne.s32.totalorder %s90, %s91
    %p105 = scmp.eq.s32.totalorder %s15, 1
    %p106 = por %p104, %p105
    %p108 = scmp.ne.s32.totalorder %s91, %s107
    %p109 = scmp.eq.s32.totalorder %s15, 0
    %p110 = por %p108, %p109
    %p111 = scmp.le.s32.totalorder 1, %s9
    %p112 = scmp.lt.s32.totalorder %s9, 3
    %p113 = pnand %p111, %p112
    %p114 = pneg %p113
    // Predicated region
    $region9: #{up_block_skip_forward.3} parent=5 // pred_check
      _
    $region10: #{up_block_skip_forward.3} parent=5 // pred_check_branch
      %116 = sbr.rel (%p113) target = $region12
    $region11: #{up_block_skip_forward.3} parent=5 // pred_region
      %s117 = ssub.s32 %s9, 1
      // Predicated region
      $region13: #{up_block_skip_forward.3} parent=11 // pred_check
        %p118 = pneg %p56
      $region14: #{up_block_skip_forward.3} parent=11 // pred_check_branch
        %120 = sbr.rel (%p118) target = $region16
      $region15: #{up_block_skip_forward.3} parent=11 // pred_region
        _
      $region16: #{up_block_skip_forward.3} parent=11 // pred_fallthru
        _
      // Predicated region
      $region17: #{up_block_skip_forward.3} parent=11 // pred_check
        %p121 = pneg %p77
      $region18: #{up_block_skip_forward.3} parent=11 // pred_check_branch
        %123 = sbr.rel (%p121) target = $region20
      $region19: #{up_block_skip_forward.3} parent=11 // pred_region
        _
      $region20: #{up_block_skip_forward.3} parent=11 // pred_fallthru
        _
    $region12: #{up_block_skip_forward.3} parent=5 // pred_fallthru
      _
    %p124 = scmp.lt.s32.totalorder %s9, 2
    // Predicated region
    $region21: #{up_block_skip_forward.3} parent=5 // pred_check
      %p125 = pneg %p124
    $region22: #{up_block_skip_forward.3} parent=5 // pred_check_branch
      %127 = sbr.rel (%p125) target = $region24
    $region23: #{up_block_skip_forward.3} parent=5 // pred_region
      // Predicated region
      $region25: #{up_block_skip_forward.3} parent=23 // pred_check
        %p128 = pneg %p29
      $region26: #{up_block_skip_forward.3} parent=23 // pred_check_branch
        %130 = sbr.rel (%p128) target = $region28
      $region27: #{up_block_skip_forward.3} parent=23 // pred_region
        %p131 = scmp.lt.s32.totalorder %s9, 1
        %s132 = scalar_select %p131, %s9, 1
        %s133 = smul.addr %s132, 3
        %s134 = smul.addr %s133, 4
        %s135 = scalar_lea.vmem %s0, %s134
      $region28: #{up_block_skip_forward.3} parent=23 // pred_fallthru
        _
    $region24: #{up_block_skip_forward.3} parent=5 // pred_fallthru
      _
    %p136 = scmp.le.s32.totalorder 1, %s9
    %p137 = scmp.lt.s32.totalorder %s9, 3
    %p138 = pnand %p136, %p137
    %p139 = pneg %p138
    // Predicated region
    $region29: #{up_block_skip_forward.3} parent=5 // pred_check
      _
    $region30: #{up_block_skip_forward.3} parent=5 // pred_check_branch
      %141 = sbr.rel (%p138) target = $region32
    $region31: #{up_block_skip_forward.3} parent=5 // pred_region
      %s142 = ssub.s32 %s9, 1
      %p143 = scmp.lt.s32.totalorder %s14, 1
      %s144 = scalar_select %p143, %s14, 1
      %s145 = smul.addr %s144, 3
      %s146 = smul.addr %s145, 4
      %s147 = scalar_lea.vmem %s0, %s146
      %p148 = pneg %p35
      %p149 = pneg %p32
      %p150 = pneg %p56
      %p151 = pneg %p53
      %p152 = pneg %p77
      %p153 = pneg %p74
      %p154 = pneg %p103
      %p155 = pneg %p100
      %p156 = scmp.lt.s32.totalorder %s14, 1
      %s157 = scalar_select %p156, %s14, 1
      %s158 = smul.addr %s157, 3
      %s159 = smul.addr %s158, 2
      %s160 = scalar_lea.vmem %s3, %s159
      %p161 = scmp.lt.s32.totalorder %s14, 1
      %s162 = scalar_select %p161, %s14, 1
      %s163 = smul.addr %s162, 3
      %s164 = smul.addr %s163, 4
      %s165 = scalar_lea.vmem %s0, %s164
      %p166 = scmp.lt.s32.totalorder %s14, 1
      %s167 = scalar_select %p166, %s14, 1
      %s168 = smul.addr %s167, 3
      %s169 = smul.addr %s168, 2
      %s170 = scalar_lea.vmem %s3, %s169
      %v172 = vld [vmem:[%s165] sm:$0xff]
      %v173 = vld [vmem:[%s165 + $0x8] sm:$0xf]
      %v174 = vld [vmem:[%s1] sm:$0x3]
      %s175 = scalar_lea.vmem %s1, 2
      %v176 = vld [vmem:[%s175] sm:$0x3]
      %v179 = vunpack.c.l.b16 %v172
      %v180 = vunpack.c.h.b16 %v172
      %v181 = vunpack.c.l.b16 %v173
      %v182 = vpack.c.b16 %v179, %v179
      %v183 = vpack.c.b16 %v180, %v180
      %v184 = vpack.c.b16 %v181, %v181
      %185 = vrot.lane.b32.xlu0 %v182, 127
      %v186 = vpop.permute.xlu0 %185
      %187 = vrot.lane.b32.xlu0 %v183, 127
      %v188 = vpop.permute.xlu0 %187
      %189 = vrot.lane.b32.xlu0 %v184, 127
      %v190 = vpop.permute.xlu0 %189
      %vm191 = vcmask 1039360
      %v192 = vsel %vm191, %v186, %v188
      %v193 = vsel %vm191, %v188, %v190
      %vm194 = vcmask 64512
      %v196 = vsel %vm194, %v176, 0
      %vm198 = vcmask 1043456
      %v200 = vsel %vm198, %v192, 0
      %v203 = vsel %vm198, %v193, 0
      %v206 = vsel %vm198, %v190, 0
      %208 = vmatprep.subr.bf16.mxu0 0
      %209 = vmatpush1.bf16.msra.mxu0 0
      %210 = vmatprep.subr.bf16.mxu0 0
      %211 = vmatpush1.bf16.msra.mxu0 0
      %212 = vmatprep.subr.bf16.mxu0 0
      %213 = vmatpush1.bf16.msra.mxu0 0
      %214 = vmatprep.subr.bf16.mxu0 0
      %215 = vmatpush1.bf16.msra.mxu0 0
      %216 = vmatprep.subr.bf16.mxu0 0
      %217 = vmatpush1.bf16.msra.mxu0 0
      %218 = vmatprep.subr.bf16.mxu0 0
      %219 = vmatpush1.bf16.msra.mxu0 0
      %220 = vmatprep.subr.bf16.mxu0 0
      %221 = vmatpush1.bf16.msra.mxu0 0
      %222 = vmatprep.subr.bf16.mxu0 %v203
      %223 = vmatpush1.bf16.msra.mxu0 %v200
      %224 = vmatprep.subr.bf16.mxu0 0
      %225 = vmatpush2.bf16.msra.mxu0 0
      %226 = vmatprep.subr.bf16.mxu0 0
      %227 = vmatpush2.bf16.msra.mxu0 0
      %228 = vmatprep.subr.bf16.mxu0 0
      %229 = vmatpush2.bf16.msra.mxu0 0
      %230 = vmatprep.subr.bf16.mxu0 0
      %231 = vmatpush2.bf16.msra.mxu0 0
      %232 = vmatprep.subr.bf16.mxu0 0
      %233 = vmatpush2.bf16.msra.mxu0 0
      %234 = vmatprep.subr.bf16.mxu0 0
      %235 = vmatpush2.bf16.msra.mxu0 0
      %236 = vmatprep.subr.bf16.mxu0 0
      %237 = vmatpush2.bf16.msra.mxu0 0
      %238 = vmatprep.subr.bf16.mxu0 0
      %239 = vmatpush2.bf16.msra.mxu0 0
      %240 = vmatprep.mubr.bf16.mxu0 0
      %241 = vmatmul.mubr.bf16.gmra.mxu0 %v196
      %v242 = vpop.f32.mrf.mxu0
      %v243 = vadd.f32 0.0, %v242
      %v244 = vpop.f32.mrf.mxu0
      %v245 = vadd.f32 0.0, %v244
      %v246 = vpop.f32.mrf.mxu0
      %v247 = vpop.f32.mrf.mxu0
      %248 = vdwg.mxu0
      %249 = vmatprep.subr.bf16.mxu0 0
      %250 = vmatpush1.bf16.msra.mxu0 0
      %251 = vmatprep.subr.bf16.mxu0 0
      %252 = vmatpush1.bf16.msra.mxu0 0
      %253 = vmatprep.subr.bf16.mxu0 0
      %254 = vmatpush1.bf16.msra.mxu0 0
      %255 = vmatprep.subr.bf16.mxu0 0
      %256 = vmatpush1.bf16.msra.mxu0 0
      %257 = vmatprep.subr.bf16.mxu0 0
      %258 = vmatpush1.bf16.msra.mxu0 0
      %259 = vmatprep.subr.bf16.mxu0 0
      %260 = vmatpush1.bf16.msra.mxu0 0
      %261 = vmatprep.subr.bf16.mxu0 0
      %262 = vmatpush1.bf16.msra.mxu0 0
      %263 = vmatprep.subr.bf16.mxu0 0
      %264 = vmatpush1.bf16.msra.mxu0 %v206
      %265 = vmatprep.subr.bf16.mxu0 0
      %266 = vmatpush2.bf16.msra.mxu0 0
      %267 = vmatprep.subr.bf16.mxu0 0
      %268 = vmatpush2.bf16.msra.mxu0 0
      %269 = vmatprep.subr.bf16.mxu0 0
      %270 = vmatpush2.bf16.msra.mxu0 0
      %271 = vmatprep.subr.bf16.mxu0 0
      %272 = vmatpush2.bf16.msra.mxu0 0
      %273 = vmatprep.subr.bf16.mxu0 0
      %274 = vmatpush2.bf16.msra.mxu0 0
      %275 = vmatprep.subr.bf16.mxu0 0
      %276 = vmatpush2.bf16.msra.mxu0 0
      %277 = vmatprep.subr.bf16.mxu0 0
      %278 = vmatpush2.bf16.msra.mxu0 0
      %279 = vmatprep.subr.bf16.mxu0 0
      %280 = vmatpush2.bf16.msra.mxu0 0
      %281 = vmatprep.mubr.bf16.mxu0 0
      %282 = vmatmul.mubr.bf16.gmra.mxu0 %v196
      %v283 = vpop.f32.mrf.mxu0
      %v284 = vadd.f32 0.0, %v283
      %v285 = vpop.f32.mrf.mxu0
      %v286 = vpop.f32.mrf.mxu0
      %v287 = vpop.f32.mrf.mxu0
      %288 = vdwg.mxu0
      %v290 = vsel %vm194, %v174, 0
      %v293 = vsel %vm198, %v182, 0
      %v296 = vsel %vm198, %v183, 0
      %v299 = vsel %vm198, %v184, 0
      %301 = vmatprep.subr.bf16.mxu0 0
      %302 = vmatpush1.bf16.msra.mxu0 0
      %303 = vmatprep.subr.bf16.mxu0 0
      %304 = vmatpush1.bf16.msra.mxu0 0
      %305 = vmatprep.subr.bf16.mxu0 0
      %306 = vmatpush1.bf16.msra.mxu0 0
      %307 = vmatprep.subr.bf16.mxu0 0
      %308 = vmatpush1.bf16.msra.mxu0 0
      %309 = vmatprep.subr.bf16.mxu0 0
      %310 = vmatpush1.bf16.msra.mxu0 0
      %311 = vmatprep.subr.bf16.mxu0 0
      %312 = vmatpush1.bf16.msra.mxu0 0
      %313 = vmatprep.subr.bf16.mxu0 0
      %314 = vmatpush1.bf16.msra.mxu0 0
      %315 = vmatprep.subr.bf16.mxu0 %v296
      %316 = vmatpush1.bf16.msra.mxu0 %v293
      %317 = vmatprep.subr.bf16.mxu0 0
      %318 = vmatpush2.bf16.msra.mxu0 0
      %319 = vmatprep.subr.bf16.mxu0 0
      %320 = vmatpush2.bf16.msra.mxu0 0
      %321 = vmatprep.subr.bf16.mxu0 0
      %322 = vmatpush2.bf16.msra.mxu0 0
      %323 = vmatprep.subr.bf16.mxu0 0
      %324 = vmatpush2.bf16.msra.mxu0 0
      %325 = vmatprep.subr.bf16.mxu0 0
      %326 = vmatpush2.bf16.msra.mxu0 0
      %327 = vmatprep.subr.bf16.mxu0 0
      %328 = vmatpush2.bf16.msra.mxu0 0
      %329 = vmatprep.subr.bf16.mxu0 0
      %330 = vmatpush2.bf16.msra.mxu0 0
      %331 = vmatprep.subr.bf16.mxu0 0
      %332 = vmatpush2.bf16.msra.mxu0 0
      %333 = vmatprep.mubr.bf16.mxu0 0
      %334 = vmatmul.mubr.bf16.gmra.mxu0 %v290
      %v335 = vpop.f32.mrf.mxu0
      %v336 = vadd.f32 %v243, %v335
      %v337 = vpop.f32.mrf.mxu0
      %v338 = vadd.f32 %v245, %v337
      %v339 = vpop.f32.mrf.mxu0
      %v340 = vpop.f32.mrf.mxu0
      %341 = vdwg.mxu0
      %342 = vmatprep.subr.bf16.mxu0 0
      %343 = vmatpush1.bf16.msra.mxu0 0
      %344 = vmatprep.subr.bf16.mxu0 0
      %345 = vmatpush1.bf16.msra.mxu0 0
      %346 = vmatprep.subr.bf16.mxu0 0
      %347 = vmatpush1.bf16.msra.mxu0 0
      %348 = vmatprep.subr.bf16.mxu0 0
      %349 = vmatpush1.bf16.msra.mxu0 0
      %350 = vmatprep.subr.bf16.mxu0 0
      %351 = vmatpush1.bf16.msra.mxu0 0
      %352 = vmatprep.subr.bf16.mxu0 0
      %353 = vmatpush1.bf16.msra.mxu0 0
      %354 = vmatprep.subr.bf16.mxu0 0
      %355 = vmatpush1.bf16.msra.mxu0 0
      %356 = vmatprep.subr.bf16.mxu0 0
      %357 = vmatpush1.bf16.msra.mxu0 %v299
      %358 = vmatprep.subr.bf16.mxu0 0
      %359 = vmatpush2.bf16.msra.mxu0 0
      %360 = vmatprep.subr.bf16.mxu0 0
      %361 = vmatpush2.bf16.msra.mxu0 0
      %362 = vmatprep.subr.bf16.mxu0 0
      %363 = vmatpush2.bf16.msra.mxu0 0
      %364 = vmatprep.subr.bf16.mxu0 0
      %365 = vmatpush2.bf16.msra.mxu0 0
      %366 = vmatprep.subr.bf16.mxu0 0
      %367 = vmatpush2.bf16.msra.mxu0 0
      %368 = vmatprep.subr.bf16.mxu0 0
      %369 = vmatpush2.bf16.msra.mxu0 0
      %370 = vmatprep.subr.bf16.mxu0 0
      %371 = vmatpush2.bf16.msra.mxu0 0
      %372 = vmatprep.subr.bf16.mxu0 0
      %373 = vmatpush2.bf16.msra.mxu0 0
      %374 = vmatprep.mubr.bf16.mxu0 0
      %375 = vmatmul.mubr.bf16.gmra.mxu0 %v290
      %v376 = vpop.f32.mrf.mxu0
      %v377 = vadd.f32 %v284, %v376
      %v378 = vpop.f32.mrf.mxu0
      %v379 = vpop.f32.mrf.mxu0
      %v380 = vpop.f32.mrf.mxu0
      %381 = vdwg.mxu0
      %s382 = scalar_lea.vmem %s1, 4
      %v383 = vld [vmem:[%s382] sm:$0x3]
      %384 = vrot.lane.b32.xlu0 %v182, 126
      %v385 = vpop.permute.xlu0 %384
      %386 = vrot.lane.b32.xlu0 %v183, 126
      %v387 = vpop.permute.xlu0 %386
      %388 = vrot.lane.b32.xlu0 %v184, 126
      %v389 = vpop.permute.xlu0 %388
      %vm390 = vcmask 1031168
      %v391 = vsel %vm390, %v385, %v387
      %v392 = vsel %vm390, %v387, %v389
      %v394 = vsel %vm194, %v383, 0
      %v397 = vsel %vm198, %v391, 0
      %v400 = vsel %vm198, %v392, 0
      %v403 = vsel %vm198, %v389, 0
      %405 = vmatprep.subr.bf16.mxu0 0
      %406 = vmatpush1.bf16.msra.mxu0 0
      %407 = vmatprep.subr.bf16.mxu0 0
      %408 = vmatpush1.bf16.msra.mxu0 0
      %409 = vmatprep.subr.bf16.mxu0 0
      %410 = vmatpush1.bf16.msra.mxu0 0
      %411 = vmatprep.subr.bf16.mxu0 0
      %412 = vmatpush1.bf16.msra.mxu0 0
      %413 = vmatprep.subr.bf16.mxu0 0
      %414 = vmatpush1.bf16.msra.mxu0 0
      %415 = vmatprep.subr.bf16.mxu0 0
      %416 = vmatpush1.bf16.msra.mxu0 0
      %417 = vmatprep.subr.bf16.mxu0 0
      %418 = vmatpush1.bf16.msra.mxu0 0
      %419 = vmatprep.subr.bf16.mxu0 %v400
      %420 = vmatpush1.bf16.msra.mxu0 %v397
      %421 = vmatprep.subr.bf16.mxu0 0
      %422 = vmatpush2.bf16.msra.mxu0 0
      %423 = vmatprep.subr.bf16.mxu0 0
      %424 = vmatpush2.bf16.msra.mxu0 0
      %425 = vmatprep.subr.bf16.mxu0 0
      %426 = vmatpush2.bf16.msra.mxu0 0
      %427 = vmatprep.subr.bf16.mxu0 0
      %428 = vmatpush2.bf16.msra.mxu0 0
      %429 = vmatprep.subr.bf16.mxu0 0
      %430 = vmatpush2.bf16.msra.mxu0 0
      %431 = vmatprep.subr.bf16.mxu0 0
      %432 = vmatpush2.bf16.msra.mxu0 0
      %433 = vmatprep.subr.bf16.mxu0 0
      %434 = vmatpush2.bf16.msra.mxu0 0
      %435 = vmatprep.subr.bf16.mxu0 0
      %436 = vmatpush2.bf16.msra.mxu0 0
      %437 = vmatprep.mubr.bf16.mxu0 0
      %438 = vmatmul.mubr.bf16.gmra.mxu0 %v394
      %v439 = vpop.f32.mrf.mxu0
      %v440 = vadd.f32 0.0, %v439
      %v441 = vpop.f32.mrf.mxu0
      %v442 = vadd.f32 0.0, %v441
      %v443 = vpop.f32.mrf.mxu0
      %v444 = vpop.f32.mrf.mxu0
      %445 = vdwg.mxu0
      %446 = vmatprep.subr.bf16.mxu0 0
      %447 = vmatpush1.bf16.msra.mxu0 0
      %448 = vmatprep.subr.bf16.mxu0 0
      %449 = vmatpush1.bf16.msra.mxu0 0
      %450 = vmatprep.subr.bf16.mxu0 0
      %451 = vmatpush1.bf16.msra.mxu0 0
      %452 = vmatprep.subr.bf16.mxu0 0
      %453 = vmatpush1.bf16.msra.mxu0 0
      %454 = vmatprep.subr.bf16.mxu0 0
      %455 = vmatpush1.bf16.msra.mxu0 0
      %456 = vmatprep.subr.bf16.mxu0 0
      %457 = vmatpush1.bf16.msra.mxu0 0
      %458 = vmatprep.subr.bf16.mxu0 0
      %459 = vmatpush1.bf16.msra.mxu0 0
      %460 = vmatprep.subr.bf16.mxu0 0
      %461 = vmatpush1.bf16.msra.mxu0 %v403
      %462 = vmatprep.subr.bf16.mxu0 0
      %463 = vmatpush2.bf16.msra.mxu0 0
      %464 = vmatprep.subr.bf16.mxu0 0
      %465 = vmatpush2.bf16.msra.mxu0 0
      %466 = vmatprep.subr.bf16.mxu0 0
      %467 = vmatpush2.bf16.msra.mxu0 0
      %468 = vmatprep.subr.bf16.mxu0 0
      %469 = vmatpush2.bf16.msra.mxu0 0
      %470 = vmatprep.subr.bf16.mxu0 0
      %471 = vmatpush2.bf16.msra.mxu0 0
      %472 = vmatprep.subr.bf16.mxu0 0
      %473 = vmatpush2.bf16.msra.mxu0 0
      %474 = vmatprep.subr.bf16.mxu0 0
      %475 = vmatpush2.bf16.msra.mxu0 0
      %476 = vmatprep.subr.bf16.mxu0 0
      %477 = vmatpush2.bf16.msra.mxu0 0
      %478 = vmatprep.mubr.bf16.mxu0 0
      %479 = vmatmul.mubr.bf16.gmra.mxu0 %v394
      %v480 = vpop.f32.mrf.mxu0
      %v481 = vadd.f32 0.0, %v480
      %v482 = vpop.f32.mrf.mxu0
      %v483 = vpop.f32.mrf.mxu0
      %v484 = vpop.f32.mrf.mxu0
      %485 = vdwg.mxu0
      %v486 = vadd.f32 %v336, %v440
      %v487 = vadd.f32 %v338, %v442
      %v488 = vadd.f32 %v377, %v481
      %s489 = scalar_lea.vmem %s1, 6
      %v490 = vld [vmem:[%s489] sm:$0x3]
      %491 = vrot.lane.b32.xlu0 %v182, 110
      %v492 = vpop.permute.xlu0 %491
      %493 = vrot.lane.b32.xlu0 %v183, 110
      %v494 = vpop.permute.xlu0 %493
      %495 = vrot.lane.b32.xlu0 %v184, 110
      %v496 = vpop.permute.xlu0 %495
      %vm497 = vcmask 900096
      %v498 = vsel %vm497, %v492, %v494
      %v499 = vsel %vm497, %v494, %v496
      %v501 = vsel %vm194, %v490, 0
      %v504 = vsel %vm198, %v498, 0
      %v507 = vsel %vm198, %v499, 0
      %v510 = vsel %vm198, %v496, 0
      %512 = vmatprep.subr.bf16.mxu0 0
      %513 = vmatpush1.bf16.msra.mxu0 0
      %514 = vmatprep.subr.bf16.mxu0 0
      %515 = vmatpush1.bf16.msra.mxu0 0
      %516 = vmatprep.subr.bf16.mxu0 0
      %517 = vmatpush1.bf16.msra.mxu0 0
      %518 = vmatprep.subr.bf16.mxu0 0
      %519 = vmatpush1.bf16.msra.mxu0 0
      %520 = vmatprep.subr.bf16.mxu0 0
      %521 = vmatpush1.bf16.msra.mxu0 0
      %522 = vmatprep.subr.bf16.mxu0 0
      %523 = vmatpush1.bf16.msra.mxu0 0
      %524 = vmatprep.subr.bf16.mxu0 0
      %525 = vmatpush1.bf16.msra.mxu0 0
      %526 = vmatprep.subr.bf16.mxu0 %v507
      %527 = vmatpush1.bf16.msra.mxu0 %v504
      %528 = vmatprep.subr.bf16.mxu0 0
      %529 = vmatpush2.bf16.msra.mxu0 0
      %530 = vmatprep.subr.bf16.mxu0 0
      %531 = vmatpush2.bf16.msra.mxu0 0
      %532 = vmatprep.subr.bf16.mxu0 0
      %533 = vmatpush2.bf16.msra.mxu0 0
      %534 = vmatprep.subr.bf16.mxu0 0
      %535 = vmatpush2.bf16.msra.mxu0 0
      %536 = vmatprep.subr.bf16.mxu0 0
      %537 = vmatpush2.bf16.msra.mxu0 0
      %538 = vmatprep.subr.bf16.mxu0 0
      %539 = vmatpush2.bf16.msra.mxu0 0
      %540 = vmatprep.subr.bf16.mxu0 0
      %541 = vmatpush2.bf16.msra.mxu0 0
      %542 = vmatprep.subr.bf16.mxu0 0
      %543 = vmatpush2.bf16.msra.mxu0 0
      %544 = vmatprep.mubr.bf16.mxu0 0
      %545 = vmatmul.mubr.bf16.gmra.mxu0 %v501
      %v546 = vpop.f32.mrf.mxu0
      %v547 = vadd.f32 0.0, %v546
      %v548 = vpop.f32.mrf.mxu0
      %v549 = vadd.f32 0.0, %v548
      %v550 = vpop.f32.mrf.mxu0
      %v551 = vpop.f32.mrf.mxu0
      %552 = vdwg.mxu0
      %553 = vmatprep.subr.bf16.mxu0 0
      %554 = vmatpush1.bf16.msra.mxu0 0
      %555 = vmatprep.subr.bf16.mxu0 0
      %556 = vmatpush1.bf16.msra.mxu0 0
      %557 = vmatprep.subr.bf16.mxu0 0
      %558 = vmatpush1.bf16.msra.mxu0 0
      %559 = vmatprep.subr.bf16.mxu0 0
      %560 = vmatpush1.bf16.msra.mxu0 0
      %561 = vmatprep.subr.bf16.mxu0 0
      %562 = vmatpush1.bf16.msra.mxu0 0
      %563 = vmatprep.subr.bf16.mxu0 0
      %564 = vmatpush1.bf16.msra.mxu0 0
      %565 = vmatprep.subr.bf16.mxu0 0
      %566 = vmatpush1.bf16.msra.mxu0 0
      %567 = vmatprep.subr.bf16.mxu0 0
      %568 = vmatpush1.bf16.msra.mxu0 %v510
      %569 = vmatprep.subr.bf16.mxu0 0
      %570 = vmatpush2.bf16.msra.mxu0 0
      %571 = vmatprep.subr.bf16.mxu0 0
      %572 = vmatpush2.bf16.msra.mxu0 0
      %573 = vmatprep.subr.bf16.mxu0 0
      %574 = vmatpush2.bf16.msra.mxu0 0
      %575 = vmatprep.subr.bf16.mxu0 0
      %576 = vmatpush2.bf16.msra.mxu0 0
      %577 = vmatprep.subr.bf16.mxu0 0
      %578 = vmatpush2.bf16.msra.mxu0 0
      %579 = vmatprep.subr.bf16.mxu0 0
      %580 = vmatpush2.bf16.msra.mxu0 0
      %581 = vmatprep.subr.bf16.mxu0 0
      %582 = vmatpush2.bf16.msra.mxu0 0
      %583 = vmatprep.subr.bf16.mxu0 0
      %584 = vmatpush2.bf16.msra.mxu0 0
      %585 = vmatprep.mubr.bf16.mxu0 0
      %586 = vmatmul.mubr.bf16.gmra.mxu0 %v501
      %v587 = vpop.f32.mrf.mxu0
      %v588 = vadd.f32 0.0, %v587
      %v589 = vpop.f32.mrf.mxu0
      %v590 = vpop.f32.mrf.mxu0
      %v591 = vpop.f32.mrf.mxu0
      %592 = vdwg.mxu0
      %v593 = vadd.f32 %v486, %v547
      %v594 = vadd.f32 %v487, %v549
      %v595 = vadd.f32 %v488, %v588
      %s596 = scalar_lea.vmem %s1, 8
      %v597 = vld [vmem:[%s596] sm:$0x3]
      %598 = vrot.lane.b32.xlu0 %v182, 109
      %v599 = vpop.permute.xlu0 %598
      %600 = vrot.lane.b32.xlu0 %v183, 109
      %v601 = vpop.permute.xlu0 %600
      %602 = vrot.lane.b32.xlu0 %v184, 109
      %v603 = vpop.permute.xlu0 %602
      %vm604 = vcmask 891904
      %v605 = vsel %vm604, %v599, %v601
      %v606 = vsel %vm604, %v601, %v603
      %v608 = vsel %vm194, %v597, 0
      %v611 = vsel %vm198, %v605, 0
      %v614 = vsel %vm198, %v606, 0
      %v617 = vsel %vm198, %v603, 0
      %619 = vmatprep.subr.bf16.mxu0 0
      %620 = vmatpush1.bf16.msra.mxu0 0
      %621 = vmatprep.subr.bf16.mxu0 0
      %622 = vmatpush1.bf16.msra.mxu0 0
      %623 = vmatprep.subr.bf16.mxu0 0
      %624 = vmatpush1.bf16.msra.mxu0 0
      %625 = vmatprep.subr.bf16.mxu0 0
      %626 = vmatpush1.bf16.msra.mxu0 0
      %627 = vmatprep.subr.bf16.mxu0 0
      %628 = vmatpush1.bf16.msra.mxu0 0
      %629 = vmatprep.subr.bf16.mxu0 0
      %630 = vmatpush1.bf16.msra.mxu0 0
      %631 = vmatprep.subr.bf16.mxu0 0
      %632 = vmatpush1.bf16.msra.mxu0 0
      %633 = vmatprep.subr.bf16.mxu0 %v614
      %634 = vmatpush1.bf16.msra.mxu0 %v611
      %635 = vmatprep.subr.bf16.mxu0 0
      %636 = vmatpush2.bf16.msra.mxu0 0
      %637 = vmatprep.subr.bf16.mxu0 0
      %638 = vmatpush2.bf16.msra.mxu0 0
      %639 = vmatprep.subr.bf16.mxu0 0
      %640 = vmatpush2.bf16.msra.mxu0 0
      %641 = vmatprep.subr.bf16.mxu0 0
      %642 = vmatpush2.bf16.msra.mxu0 0
      %643 = vmatprep.subr.bf16.mxu0 0
      %644 = vmatpush2.bf16.msra.mxu0 0
      %645 = vmatprep.subr.bf16.mxu0 0
      %646 = vmatpush2.bf16.msra.mxu0 0
      %647 = vmatprep.subr.bf16.mxu0 0
      %648 = vmatpush2.bf16.msra.mxu0 0
      %649 = vmatprep.subr.bf16.mxu0 0
      %650 = vmatpush2.bf16.msra.mxu0 0
      %651 = vmatprep.mubr.bf16.mxu0 0
      %652 = vmatmul.mubr.bf16.gmra.mxu0 %v608
      %v653 = vpop.f32.mrf.mxu0
      %v654 = vadd.f32 0.0, %v653
      %v655 = vpop.f32.mrf.mxu0
      %v656 = vadd.f32 0.0, %v655
      %v657 = vpop.f32.mrf.mxu0
      %v658 = vpop.f32.mrf.mxu0
      %659 = vdwg.mxu0
      %660 = vmatprep.subr.bf16.mxu0 0
      %661 = vmatpush1.bf16.msra.mxu0 0
      %662 = vmatprep.subr.bf16.mxu0 0
      %663 = vmatpush1.bf16.msra.mxu0 0
      %664 = vmatprep.subr.bf16.mxu0 0
      %665 = vmatpush1.bf16.msra.mxu0 0
      %666 = vmatprep.subr.bf16.mxu0 0
      %667 = vmatpush1.bf16.msra.mxu0 0
      %668 = vmatprep.subr.bf16.mxu0 0
      %669 = vmatpush1.bf16.msra.mxu0 0
      %670 = vmatprep.subr.bf16.mxu0 0
      %671 = vmatpush1.bf16.msra.mxu0 0
      %672 = vmatprep.subr.bf16.mxu0 0
      %673 = vmatpush1.bf16.msra.mxu0 0
      %674 = vmatprep.subr.bf16.mxu0 0
      %675 = vmatpush1.bf16.msra.mxu0 %v617
      %676 = vmatprep.subr.bf16.mxu0 0
      %677 = vmatpush2.bf16.msra.mxu0 0
      %678 = vmatprep.subr.bf16.mxu0 0
      %679 = vmatpush2.bf16.msra.mxu0 0
      %680 = vmatprep.subr.bf16.mxu0 0
      %681 = vmatpush2.bf16.msra.mxu0 0
      %682 = vmatprep.subr.bf16.mxu0 0
      %683 = vmatpush2.bf16.msra.mxu0 0
      %684 = vmatprep.subr.bf16.mxu0 0
      %685 = vmatpush2.bf16.msra.mxu0 0
      %686 = vmatprep.subr.bf16.mxu0 0
      %687 = vmatpush2.bf16.msra.mxu0 0
      %688 = vmatprep.subr.bf16.mxu0 0
      %689 = vmatpush2.bf16.msra.mxu0 0
      %690 = vmatprep.subr.bf16.mxu0 0
      %691 = vmatpush2.bf16.msra.mxu0 0
      %692 = vmatprep.mubr.bf16.mxu0 0
      %693 = vmatmul.mubr.bf16.gmra.mxu0 %v608
      %v694 = vpop.f32.mrf.mxu0
      %v695 = vadd.f32 0.0, %v694
      %v696 = vpop.f32.mrf.mxu0
      %v697 = vpop.f32.mrf.mxu0
      %v698 = vpop.f32.mrf.mxu0
      %699 = vdwg.mxu0
      %v700 = vadd.f32 %v593, %v654
      %v701 = vadd.f32 %v594, %v656
      %v702 = vadd.f32 %v595, %v695
      %s703 = scalar_lea.vmem %s1, 10
      %v704 = vld [vmem:[%s703] sm:$0x3]
      %705 = vrot.lane.b32.xlu0 %v182, 108
      %v706 = vpop.permute.xlu0 %705
      %707 = vrot.lane.b32.xlu0 %v183, 108
      %v708 = vpop.permute.xlu0 %707
      %709 = vrot.lane.b32.xlu0 %v184, 108
      %v710 = vpop.permute.xlu0 %709
      %vm711 = vcmask 883712
      %v712 = vsel %vm711, %v706, %v708
      %v713 = vsel %vm711, %v708, %v710
      %v715 = vsel %vm194, %v704, 0
      %v718 = vsel %vm198, %v712, 0
      %v721 = vsel %vm198, %v713, 0
      %v724 = vsel %vm198, %v710, 0
      %726 = vmatprep.subr.bf16.mxu0 0
      %727 = vmatpush1.bf16.msra.mxu0 0
      %728 = vmatprep.subr.bf16.mxu0 0
      %729 = vmatpush1.bf16.msra.mxu0 0
      %730 = vmatprep.subr.bf16.mxu0 0
      %731 = vmatpush1.bf16.msra.mxu0 0
      %732 = vmatprep.subr.bf16.mxu0 0
      %733 = vmatpush1.bf16.msra.mxu0 0
      %734 = vmatprep.subr.bf16.mxu0 0
      %735 = vmatpush1.bf16.msra.mxu0 0
      %736 = vmatprep.subr.bf16.mxu0 0
      %737 = vmatpush1.bf16.msra.mxu0 0
      %738 = vmatprep.subr.bf16.mxu0 0
      %739 = vmatpush1.bf16.msra.mxu0 0
      %740 = vmatprep.subr.bf16.mxu0 %v721
      %741 = vmatpush1.bf16.msra.mxu0 %v718
      %742 = vmatprep.subr.bf16.mxu0 0
      %743 = vmatpush2.bf16.msra.mxu0 0
      %744 = vmatprep.subr.bf16.mxu0 0
      %745 = vmatpush2.bf16.msra.mxu0 0
      %746 = vmatprep.subr.bf16.mxu0 0
      %747 = vmatpush2.bf16.msra.mxu0 0
      %748 = vmatprep.subr.bf16.mxu0 0
      %749 = vmatpush2.bf16.msra.mxu0 0
      %750 = vmatprep.subr.bf16.mxu0 0
      %751 = vmatpush2.bf16.msra.mxu0 0
      %752 = vmatprep.subr.bf16.mxu0 0
      %753 = vmatpush2.bf16.msra.mxu0 0
      %754 = vmatprep.subr.bf16.mxu0 0
      %755 = vmatpush2.bf16.msra.mxu0 0
      %756 = vmatprep.subr.bf16.mxu0 0
      %757 = vmatpush2.bf16.msra.mxu0 0
      %758 = vmatprep.mubr.bf16.mxu0 0
      %759 = vmatmul.mubr.bf16.gmra.mxu0 %v715
      %v760 = vpop.f32.mrf.mxu0
      %v761 = vadd.f32 0.0, %v760
      %v762 = vpop.f32.mrf.mxu0
      %v763 = vadd.f32 0.0, %v762
      %v764 = vpop.f32.mrf.mxu0
      %v765 = vpop.f32.mrf.mxu0
      %766 = vdwg.mxu0
      %767 = vmatprep.subr.bf16.mxu0 0
      %768 = vmatpush1.bf16.msra.mxu0 0
      %769 = vmatprep.subr.bf16.mxu0 0
      %770 = vmatpush1.bf16.msra.mxu0 0
      %771 = vmatprep.subr.bf16.mxu0 0
      %772 = vmatpush1.bf16.msra.mxu0 0
      %773 = vmatprep.subr.bf16.mxu0 0
      %774 = vmatpush1.bf16.msra.mxu0 0
      %775 = vmatprep.subr.bf16.mxu0 0
      %776 = vmatpush1.bf16.msra.mxu0 0
      %777 = vmatprep.subr.bf16.mxu0 0
      %778 = vmatpush1.bf16.msra.mxu0 0
      %779 = vmatprep.subr.bf16.mxu0 0
      %780 = vmatpush1.bf16.msra.mxu0 0
      %781 = vmatprep.subr.bf16.mxu0 0
      %782 = vmatpush1.bf16.msra.mxu0 %v724
      %783 = vmatprep.subr.bf16.mxu0 0
      %784 = vmatpush2.bf16.msra.mxu0 0
      %785 = vmatprep.subr.bf16.mxu0 0
      %786 = vmatpush2.bf16.msra.mxu0 0
      %787 = vmatprep.subr.bf16.mxu0 0
      %788 = vmatpush2.bf16.msra.mxu0 0
      %789 = vmatprep.subr.bf16.mxu0 0
      %790 = vmatpush2.bf16.msra.mxu0 0
      %791 = vmatprep.subr.bf16.mxu0 0
      %792 = vmatpush2.bf16.msra.mxu0 0
      %793 = vmatprep.subr.bf16.mxu0 0
      %794 = vmatpush2.bf16.msra.mxu0 0
      %795 = vmatprep.subr.bf16.mxu0 0
      %796 = vmatpush2.bf16.msra.mxu0 0
      %797 = vmatprep.subr.bf16.mxu0 0
      %798 = vmatpush2.bf16.msra.mxu0 0
      %799 = vmatprep.mubr.bf16.mxu0 0
      %800 = vmatmul.mubr.bf16.gmra.mxu0 %v715
      %v801 = vpop.f32.mrf.mxu0
      %v802 = vadd.f32 0.0, %v801
      %v803 = vpop.f32.mrf.mxu0
      %v804 = vpop.f32.mrf.mxu0
      %v805 = vpop.f32.mrf.mxu0
      %806 = vdwg.mxu0
      %v807 = vadd.f32 %v700, %v761
      %v808 = vadd.f32 %v701, %v763
      %v809 = vadd.f32 %v702, %v802
      %s810 = scalar_lea.vmem %s1, 12
      %v811 = vld [vmem:[%s810] sm:$0x3]
      %812 = vrot.lane.b32.xlu0 %v182, 92
      %v813 = vpop.permute.xlu0 %812
      %814 = vrot.lane.b32.xlu0 %v183, 92
      %v815 = vpop.permute.xlu0 %814
      %816 = vrot.lane.b32.xlu0 %v184, 92
      %v817 = vpop.permute.xlu0 %816
      %vm818 = vcmask 752640
      %v819 = vsel %vm818, %v813, %v815
      %v820 = vsel %vm818, %v815, %v817
      %v822 = vsel %vm194, %v811, 0
      %v825 = vsel %vm198, %v819, 0
      %v828 = vsel %vm198, %v820, 0
      %v831 = vsel %vm198, %v817, 0
      %833 = vmatprep.subr.bf16.mxu0 0
      %834 = vmatpush1.bf16.msra.mxu0 0
      %835 = vmatprep.subr.bf16.mxu0 0
      %836 = vmatpush1.bf16.msra.mxu0 0
      %837 = vmatprep.subr.bf16.mxu0 0
      %838 = vmatpush1.bf16.msra.mxu0 0
      %839 = vmatprep.subr.bf16.mxu0 0
      %840 = vmatpush1.bf16.msra.mxu0 0
      %841 = vmatprep.subr.bf16.mxu0 0
      %842 = vmatpush1.bf16.msra.mxu0 0
      %843 = vmatprep.subr.bf16.mxu0 0
      %844 = vmatpush1.bf16.msra.mxu0 0
      %845 = vmatprep.subr.bf16.mxu0 0
      %846 = vmatpush1.bf16.msra.mxu0 0
      %847 = vmatprep.subr.bf16.mxu0 %v828
      %848 = vmatpush1.bf16.msra.mxu0 %v825
      %849 = vmatprep.subr.bf16.mxu0 0
      %850 = vmatpush2.bf16.msra.mxu0 0
      %851 = vmatprep.subr.bf16.mxu0 0
      %852 = vmatpush2.bf16.msra.mxu0 0
      %853 = vmatprep.subr.bf16.mxu0 0
      %854 = vmatpush2.bf16.msra.mxu0 0
      %855 = vmatprep.subr.bf16.mxu0 0
      %856 = vmatpush2.bf16.msra.mxu0 0
      %857 = vmatprep.subr.bf16.mxu0 0
      %858 = vmatpush2.bf16.msra.mxu0 0
      %859 = vmatprep.subr.bf16.mxu0 0
      %860 = vmatpush2.bf16.msra.mxu0 0
      %861 = vmatprep.subr.bf16.mxu0 0
      %862 = vmatpush2.bf16.msra.mxu0 0
      %863 = vmatprep.subr.bf16.mxu0 0
      %864 = vmatpush2.bf16.msra.mxu0 0
      %865 = vmatprep.mubr.bf16.mxu0 0
      %866 = vmatmul.mubr.bf16.gmra.mxu0 %v822
      %v867 = vpop.f32.mrf.mxu0
      %v868 = vadd.f32 0.0, %v867
      %v869 = vpop.f32.mrf.mxu0
      %v870 = vadd.f32 0.0, %v869
      %v871 = vpop.f32.mrf.mxu0
      %v872 = vpop.f32.mrf.mxu0
      %873 = vdwg.mxu0
      %874 = vmatprep.subr.bf16.mxu0 0
      %875 = vmatpush1.bf16.msra.mxu0 0
      %876 = vmatprep.subr.bf16.mxu0 0
      %877 = vmatpush1.bf16.msra.mxu0 0
      %878 = vmatprep.subr.bf16.mxu0 0
      %879 = vmatpush1.bf16.msra.mxu0 0
      %880 = vmatprep.subr.bf16.mxu0 0
      %881 = vmatpush1.bf16.msra.mxu0 0
      %882 = vmatprep.subr.bf16.mxu0 0
      %883 = vmatpush1.bf16.msra.mxu0 0
      %884 = vmatprep.subr.bf16.mxu0 0
      %885 = vmatpush1.bf16.msra.mxu0 0
      %886 = vmatprep.subr.bf16.mxu0 0
      %887 = vmatpush1.bf16.msra.mxu0 0
      %888 = vmatprep.subr.bf16.mxu0 0
      %889 = vmatpush1.bf16.msra.mxu0 %v831
      %890 = vmatprep.subr.bf16.mxu0 0
      %891 = vmatpush2.bf16.msra.mxu0 0
      %892 = vmatprep.subr.bf16.mxu0 0
      %893 = vmatpush2.bf16.msra.mxu0 0
      %894 = vmatprep.subr.bf16.mxu0 0
      %895 = vmatpush2.bf16.msra.mxu0 0
      %896 = vmatprep.subr.bf16.mxu0 0
      %897 = vmatpush2.bf16.msra.mxu0 0
      %898 = vmatprep.subr.bf16.mxu0 0
      %899 = vmatpush2.bf16.msra.mxu0 0
      %900 = vmatprep.subr.bf16.mxu0 0
      %901 = vmatpush2.bf16.msra.mxu0 0
      %902 = vmatprep.subr.bf16.mxu0 0
      %903 = vmatpush2.bf16.msra.mxu0 0
      %904 = vmatprep.subr.bf16.mxu0 0
      %905 = vmatpush2.bf16.msra.mxu0 0
      %906 = vmatprep.mubr.bf16.mxu0 0
      %907 = vmatmul.mubr.bf16.gmra.mxu0 %v822
      %v908 = vpop.f32.mrf.mxu0
      %v909 = vadd.f32 0.0, %v908
      %v910 = vpop.f32.mrf.mxu0
      %v911 = vpop.f32.mrf.mxu0
      %v912 = vpop.f32.mrf.mxu0
      %913 = vdwg.mxu0
      %v914 = vadd.f32 %v807, %v868
      %v915 = vadd.f32 %v808, %v870
      %v916 = vadd.f32 %v809, %v909
      %s917 = scalar_lea.vmem %s1, 14
      %v918 = vld [vmem:[%s917] sm:$0x3]
      %919 = vrot.lane.b32.xlu0 %v182, 91
      %v920 = vpop.permute.xlu0 %919
      %921 = vrot.lane.b32.xlu0 %v183, 91
      %v922 = vpop.permute.xlu0 %921
      %923 = vrot.lane.b32.xlu0 %v184, 91
      %v924 = vpop.permute.xlu0 %923
      %vm925 = vcmask 744448
      %v926 = vsel %vm925, %v920, %v922
      %v927 = vsel %vm925, %v922, %v924
      %v929 = vsel %vm194, %v918, 0
      %v932 = vsel %vm198, %v926, 0
      %v935 = vsel %vm198, %v927, 0
      %v938 = vsel %vm198, %v924, 0
      %940 = vmatprep.subr.bf16.mxu0 0
      %941 = vmatpush1.bf16.msra.mxu0 0
      %942 = vmatprep.subr.bf16.mxu0 0
      %943 = vmatpush1.bf16.msra.mxu0 0
      %944 = vmatprep.subr.bf16.mxu0 0
      %945 = vmatpush1.bf16.msra.mxu0 0
      %946 = vmatprep.subr.bf16.mxu0 0
      %947 = vmatpush1.bf16.msra.mxu0 0
      %948 = vmatprep.subr.bf16.mxu0 0
      %949 = vmatpush1.bf16.msra.mxu0 0
      %950 = vmatprep.subr.bf16.mxu0 0
      %951 = vmatpush1.bf16.msra.mxu0 0
      %952 = vmatprep.subr.bf16.mxu0 0
      %953 = vmatpush1.bf16.msra.mxu0 0
      %954 = vmatprep.subr.bf16.mxu0 %v935
      %955 = vmatpush1.bf16.msra.mxu0 %v932
      %956 = vmatprep.subr.bf16.mxu0 0
      %957 = vmatpush2.bf16.msra.mxu0 0
      %958 = vmatprep.subr.bf16.mxu0 0
      %959 = vmatpush2.bf16.msra.mxu0 0
      %960 = vmatprep.subr.bf16.mxu0 0
      %961 = vmatpush2.bf16.msra.mxu0 0
      %962 = vmatprep.subr.bf16.mxu0 0
      %963 = vmatpush2.bf16.msra.mxu0 0
      %964 = vmatprep.subr.bf16.mxu0 0
      %965 = vmatpush2.bf16.msra.mxu0 0
      %966 = vmatprep.subr.bf16.mxu0 0
      %967 = vmatpush2.bf16.msra.mxu0 0
      %968 = vmatprep.subr.bf16.mxu0 0
      %969 = vmatpush2.bf16.msra.mxu0 0
      %970 = vmatprep.subr.bf16.mxu0 0
      %971 = vmatpush2.bf16.msra.mxu0 0
      %972 = vmatprep.mubr.bf16.mxu0 0
      %973 = vmatmul.mubr.bf16.gmra.mxu0 %v929
      %v974 = vpop.f32.mrf.mxu0
      %v975 = vadd.f32 0.0, %v974
      %v976 = vpop.f32.mrf.mxu0
      %v977 = vadd.f32 0.0, %v976
      %v978 = vpop.f32.mrf.mxu0
      %v979 = vpop.f32.mrf.mxu0
      %980 = vdwg.mxu0
      %981 = vmatprep.subr.bf16.mxu0 0
      %982 = vmatpush1.bf16.msra.mxu0 0
      %983 = vmatprep.subr.bf16.mxu0 0
      %984 = vmatpush1.bf16.msra.mxu0 0
      %985 = vmatprep.subr.bf16.mxu0 0
      %986 = vmatpush1.bf16.msra.mxu0 0
      %987 = vmatprep.subr.bf16.mxu0 0
      %988 = vmatpush1.bf16.msra.mxu0 0
      %989 = vmatprep.subr.bf16.mxu0 0
      %990 = vmatpush1.bf16.msra.mxu0 0
      %991 = vmatprep.subr.bf16.mxu0 0
      %992 = vmatpush1.bf16.msra.mxu0 0
      %993 = vmatprep.subr.bf16.mxu0 0
      %994 = vmatpush1.bf16.msra.mxu0 0
      %995 = vmatprep.subr.bf16.mxu0 0
      %996 = vmatpush1.bf16.msra.mxu0 %v938
      %997 = vmatprep.subr.bf16.mxu0 0
      %998 = vmatpush2.bf16.msra.mxu0 0
      %999 = vmatprep.subr.bf16.mxu0 0
      %1000 = vmatpush2.bf16.msra.mxu0 0
      %1001 = vmatprep.subr.bf16.mxu0 0
      %1002 = vmatpush2.bf16.msra.mxu0 0
      %1003 = vmatprep.subr.bf16.mxu0 0
      %1004 = vmatpush2.bf16.msra.mxu0 0
      %1005 = vmatprep.subr.bf16.mxu0 0
      %1006 = vmatpush2.bf16.msra.mxu0 0
      %1007 = vmatprep.subr.bf16.mxu0 0
      %1008 = vmatpush2.bf16.msra.mxu0 0
      %1009 = vmatprep.subr.bf16.mxu0 0
      %1010 = vmatpush2.bf16.msra.mxu0 0
      %1011 = vmatprep.subr.bf16.mxu0 0
      %1012 = vmatpush2.bf16.msra.mxu0 0
      %1013 = vmatprep.mubr.bf16.mxu0 0
      %1014 = vmatmul.mubr.bf16.gmra.mxu0 %v929
      %v1015 = vpop.f32.mrf.mxu0
      %v1016 = vadd.f32 0.0, %v1015
      %v1017 = vpop.f32.mrf.mxu0
      %v1018 = vpop.f32.mrf.mxu0
      %v1019 = vpop.f32.mrf.mxu0
      %1020 = vdwg.mxu0
      %v1021 = vadd.f32 %v914, %v975
      %v1022 = vadd.f32 %v915, %v977
      %v1023 = vadd.f32 %v916, %v1016
      %s1024 = scalar_lea.vmem %s1, 16
      %v1025 = vld [vmem:[%s1024] sm:$0x3]
      %1026 = vrot.lane.b32.xlu0 %v182, 90
      %v1027 = vpop.permute.xlu0 %1026
      %1028 = vrot.lane.b32.xlu0 %v183, 90
      %v1029 = vpop.permute.xlu0 %1028
      %1030 = vrot.lane.b32.xlu0 %v184, 90
      %v1031 = vpop.permute.xlu0 %1030
      %vm1032 = vcmask 736256
      %v1033 = vsel %vm1032, %v1027, %v1029
      %v1034 = vsel %vm1032, %v1029, %v1031
      %v1036 = vsel %vm194, %v1025, 0
      %v1039 = vsel %vm198, %v1033, 0
      %v1042 = vsel %vm198, %v1034, 0
      %v1045 = vsel %vm198, %v1031, 0
      %1047 = vmatprep.subr.bf16.mxu0 0
      %1048 = vmatpush1.bf16.msra.mxu0 0
      %1049 = vmatprep.subr.bf16.mxu0 0
      %1050 = vmatpush1.bf16.msra.mxu0 0
      %1051 = vmatprep.subr.bf16.mxu0 0
      %1052 = vmatpush1.bf16.msra.mxu0 0
      %1053 = vmatprep.subr.bf16.mxu0 0
      %1054 = vmatpush1.bf16.msra.mxu0 0
      %1055 = vmatprep.subr.bf16.mxu0 0
      %1056 = vmatpush1.bf16.msra.mxu0 0
      %1057 = vmatprep.subr.bf16.mxu0 0
      %1058 = vmatpush1.bf16.msra.mxu0 0
      %1059 = vmatprep.subr.bf16.mxu0 0
      %1060 = vmatpush1.bf16.msra.mxu0 0
      %1061 = vmatprep.subr.bf16.mxu0 %v1042
      %1062 = vmatpush1.bf16.msra.mxu0 %v1039
      %1063 = vmatprep.subr.bf16.mxu0 0
      %1064 = vmatpush2.bf16.msra.mxu0 0
      %1065 = vmatprep.subr.bf16.mxu0 0
      %1066 = vmatpush2.bf16.msra.mxu0 0
      %1067 = vmatprep.subr.bf16.mxu0 0
      %1068 = vmatpush2.bf16.msra.mxu0 0
      %1069 = vmatprep.subr.bf16.mxu0 0
      %1070 = vmatpush2.bf16.msra.mxu0 0
      %1071 = vmatprep.subr.bf16.mxu0 0
      %1072 = vmatpush2.bf16.msra.mxu0 0
      %1073 = vmatprep.subr.bf16.mxu0 0
      %1074 = vmatpush2.bf16.msra.mxu0 0
      %1075 = vmatprep.subr.bf16.mxu0 0
      %1076 = vmatpush2.bf16.msra.mxu0 0
      %1077 = vmatprep.subr.bf16.mxu0 0
      %1078 = vmatpush2.bf16.msra.mxu0 0
      %1079 = vmatprep.mubr.bf16.mxu0 0
      %1080 = vmatmul.mubr.bf16.gmra.mxu0 %v1036
      %v1081 = vpop.f32.mrf.mxu0
      %v1082 = vadd.f32 0.0, %v1081
      %v1083 = vpop.f32.mrf.mxu0
      %v1084 = vadd.f32 0.0, %v1083
      %v1085 = vpop.f32.mrf.mxu0
      %v1086 = vpop.f32.mrf.mxu0
      %1087 = vdwg.mxu0
      %1088 = vmatprep.subr.bf16.mxu0 0
      %1089 = vmatpush1.bf16.msra.mxu0 0
      %1090 = vmatprep.subr.bf16.mxu0 0
      %1091 = vmatpush1.bf16.msra.mxu0 0
      %1092 = vmatprep.subr.bf16.mxu0 0
      %1093 = vmatpush1.bf16.msra.mxu0 0
      %1094 = vmatprep.subr.bf16.mxu0 0
      %1095 = vmatpush1.bf16.msra.mxu0 0
      %1096 = vmatprep.subr.bf16.mxu0 0
      %1097 = vmatpush1.bf16.msra.mxu0 0
      %1098 = vmatprep.subr.bf16.mxu0 0
      %1099 = vmatpush1.bf16.msra.mxu0 0
      %1100 = vmatprep.subr.bf16.mxu0 0
      %1101 = vmatpush1.bf16.msra.mxu0 0
      %1102 = vmatprep.subr.bf16.mxu0 0
      %1103 = vmatpush1.bf16.msra.mxu0 %v1045
      %1104 = vmatprep.subr.bf16.mxu0 0
      %1105 = vmatpush2.bf16.msra.mxu0 0
      %1106 = vmatprep.subr.bf16.mxu0 0
      %1107 = vmatpush2.bf16.msra.mxu0 0
      %1108 = vmatprep.subr.bf16.mxu0 0
      %1109 = vmatpush2.bf16.msra.mxu0 0
      %1110 = vmatprep.subr.bf16.mxu0 0
      %1111 = vmatpush2.bf16.msra.mxu0 0
      %1112 = vmatprep.subr.bf16.mxu0 0
      %1113 = vmatpush2.bf16.msra.mxu0 0
      %1114 = vmatprep.subr.bf16.mxu0 0
      %1115 = vmatpush2.bf16.msra.mxu0 0
      %1116 = vmatprep.subr.bf16.mxu0 0
      %1117 = vmatpush2.bf16.msra.mxu0 0
      %1118 = vmatprep.subr.bf16.mxu0 0
      %1119 = vmatpush2.bf16.msra.mxu0 0
      %1120 = vmatprep.mubr.bf16.mxu0 0
      %1121 = vmatmul.mubr.bf16.gmra.mxu0 %v1036
      %v1122 = vpop.f32.mrf.mxu0
      %v1123 = vadd.f32 0.0, %v1122
      %v1124 = vpop.f32.mrf.mxu0
      %v1125 = vpop.f32.mrf.mxu0
      %v1126 = vpop.f32.mrf.mxu0
      %1127 = vdwg.mxu0
      %v1128 = vadd.f32 %v1021, %v1082
      %v1129 = vadd.f32 %v1022, %v1084
      %v1130 = vadd.f32 %v1023, %v1123
      %v1131 = vld [vmem:[%s2] sm:$0xf]
      %1133 = vset.pattern.permute.xlu0 0
      %1134 = vperm.xlu0 %1133, %v1131
      %v1135 = vpop.permute.xlu0 %1134
      %v1137 = vadd.f32 %v1128, %v1135
      %v1138 = vadd.f32 %v1129, %v1135
      %v1139 = vadd.f32 %v1130, %v1135
      %v1140 = vpack.c.bf16 %v1137, %v1137
      %v1141 = vpack.c.bf16 %v1138, %v1138
      %v1142 = vpack.c.bf16 %v1139, %v1139
      %v1146 = vcombine.low %v1140, %v1141
      %v1148 = vunpack.c.l.s4 1983009808
      %v1149 = vunpack.c.0.s8 %v1148
      %v1150 = vlaneseq
      %v1151 = vshrl.u32 %v1150, 7
      %v1152 = vsub.s32 %v1149, %v1151
      %v1153 = vrot.slane %v1146, %v1152
      %v1155 = vunpack.c.l.s4 1983009808
      %v1156 = vunpack.c.0.s8 %v1155
      %v1157 = vlaneseq
      %v1158 = vshrl.u32 %v1157, 7
      %v1159 = vsub.s32 %v1156, %v1158
      %v1160 = vrot.slane %v1142, %v1159
      %v1161 = vcombine.low %v1153, %v1160
      %vm1163 = vcmask 1041408
      %vm1164 = vcmask 1043458
      %vm1165 = vmor %vm1164, %vm1163
      %vm1166 = vcmask 259076
      %vm1167 = vmor %vm1166, %vm1165
      %1168 = vst.msk [vmem:[%s170] sm:$0x3f] %vm1167, %v1161
      %p1169 = scmp.lt.s32.totalorder %s14, 1
      %s1170 = scalar_select %p1169, %s14, 1
      %s1171 = smul.addr %s1170, 3
      %s1172 = smul.addr %s1171, 2
      %s1173 = scalar_lea.vmem %s3, %s1172
      // Predicated region
      $region33: #{up_block_skip_forward.3} parent=31 // pred_check
        %p1174 = pneg %p100
      $region34: #{up_block_skip_forward.3} parent=31 // pred_check_branch
        %1176 = sbr.rel (%p1174) target = $region36
      $region35: #{up_block_skip_forward.3} parent=31 // pred_region
        _
      $region36: #{up_block_skip_forward.3} parent=31 // pred_fallthru
        _
    $region32: #{up_block_skip_forward.3} parent=5 // pred_fallthru
      _
    %p1177 = scmp.le.s32.totalorder 2, %s9
    // Predicated region
    $region37: #{up_block_skip_forward.3} parent=5 // pred_check
      %p1178 = pneg %p1177
    $region38: #{up_block_skip_forward.3} parent=5 // pred_check_branch
      %1180 = sbr.rel (%p1178) target = $region40
    $region39: #{up_block_skip_forward.3} parent=5 // pred_region
      %s1181 = ssub.s32 %s9, 2
      // Predicated region
      $region41: #{up_block_skip_forward.3} parent=39 // pred_check
        %p1182 = pneg %p106
      $region42: #{up_block_skip_forward.3} parent=39 // pred_check_branch
        %1184 = sbr.rel (%p1182) target = $region44
      $region43: #{up_block_skip_forward.3} parent=39 // pred_region
        %p1185 = scmp.lt.s32.totalorder %s15, 1
        %s1186 = scalar_select %p1185, %s15, 1
        %s1187 = smul.addr %s1186, 3
        %s1188 = smul.addr %s1187, 2
        %s1189 = scalar_lea.vmem %s3, %s1188
      $region44: #{up_block_skip_forward.3} parent=39 // pred_fallthru
        _
    $region40: #{up_block_skip_forward.3} parent=5 // pred_fallthru
      _
  $region6: #{up_block_skip_forward.3} parent=0 // loop_footer
    %s13 = sadd.s32 1, %s9
  $region7: #{up_block_skip_forward.3} parent=0 // loop_footer_branch
    %8 = sbr.rel target = $region3
  $region8: #{up_block_skip_forward.3} parent=0 // loop_exit
    _

// kernel: up_block_skip_forward.4
$region0: #{up_block_skip_forward.4}
  #allocation0 [shape = 'u32[]', space=smem, size = 0x4, offset = 0x4, fixed_abs, tag = 'smem constant byte address 0x4 - core index']
  #allocation1 [shape = 'u32[144,128]{1,0:T(1,128)}', space=vmem, size = 0x12000, scoped, tag = 'internal scratch']
  %s0 = inlined_call_operand.vmem [shape: bf16[2,4,342], index: 0, kind: input, shape index: {}]
  %s1 = inlined_call_operand.vmem [shape: bf16[9,4,4], index: 1, kind: input, shape index: {}]
  %s2 = inlined_call_operand.vmem [shape: f32[4,1], index: 2, kind: input, shape index: {}]
  %s3 = inlined_call_operand.vmem [shape: f32[1,288], index: 3, kind: input, shape index: {}]
  %s4 = inlined_call_operand.vmem [shape: f32[2,4,288], index: 4, kind: output, shape index: {0}]
  %s5 = inlined_call_operand.vmem [shape: f32[4,1], index: 5, kind: output, shape index: {1}]
  %s6 = inlined_call_operand.vmem [shape: f32[4,1], index: 6, kind: output, shape index: {2}]
  %7 = xla_tuple %s4, %s5, %s6
  %s8 = sld [smem:[#allocation0]]
  $region69: #{up_block_skip_forward.4} parent=0
    _
  %s10 = ssub.s32 1, %s8
  %s11 = scalar_select 0, %s10, %s8
  loop: start=0, step=1, limit=4
  $region2: #{up_block_skip_forward.4} parent=0 // loop_pre_header
    _
  $region3: #{up_block_skip_forward.4} parent=0 // loop_header
    %s13 = sphi 0, %s17
    %p14 = scmp.ge.s32.totalorder %s13, 4
    %s23 = sphi 0, %s25
    %s26 = sphi 0, %s23
    %s27 = sphi 0, %s26
    %s43 = sphi 0, %s27
    %s47 = sphi 0, %s47
    %s49 = sphi 0, %s47
    %s50 = sphi 0, %s49
    %s64 = sphi 0, %s50
    %s68 = sphi 0, %s68
    %s70 = sphi 0, %s68
    %s71 = sphi 0, %s70
    %s85 = sphi 0, %s71
    %s89 = sphi 0, %s89
    %s91 = sphi 0, %s89
    %s92 = sphi 0, %s91
    %s106 = sphi 0, %s92
    %s112 = sphi 0, %s114
    %s115 = sphi 0, %s112
    %s116 = sphi 0, %s115
    %s132 = sphi 0, %s116
    %s136 = sphi 0, %s136
    %s138 = sphi 0, %s136
    %s139 = sphi 0, %s138
    %s153 = sphi 0, %s139
    %s157 = sphi 0, %s157
    %s159 = sphi 0, %s157
    %s160 = sphi 0, %s159
    %s174 = sphi 0, %s160
  $region4: #{up_block_skip_forward.4} parent=0 // loop_header_branch
    %16 = sbr.rel (%p14) target = $region8
  $region5: #{up_block_skip_forward.4} parent=0 // loop_body
    %s18 = ssub.s32 %s13, 1
    %s19 = ssub.s32 %s13, 2
    %s20 = sadd.s32 %s13, 1
    %s21 = ssub.s32 %s13, %s20
    %p22 = scmp.eq.s32.totalorder %s21, 0
    %s24 = sadd.s32 %s23, 1
    %s25 = scalar_select %p22, %s23, %s24
    %p28 = pneg %p22
    %p29 = scmp.eq.s32.totalorder %s13, 1
    %p30 = por %p28, %p29
    %p31 = scmp.ne.s32.totalorder %s23, %s26
    %p32 = scmp.eq.s32.totalorder %s13, 0
    %p33 = por %p31, %p32
    %p34 = scmp.ne.s32.totalorder %s23, %s26
    %p35 = scmp.eq.s32.totalorder %s18, 1
    %p36 = por %p34, %p35
    %p37 = scmp.ne.s32.totalorder %s26, %s27
    %p38 = scmp.eq.s32.totalorder %s18, 0
    %p39 = por %p37, %p38
    %p40 = scmp.ne.s32.totalorder %s26, %s27
    %p41 = scmp.eq.s32.totalorder %s19, 1
    %p42 = por %p40, %p41
    %p44 = scmp.ne.s32.totalorder %s27, %s43
    %p45 = scmp.eq.s32.totalorder %s19, 0
    %p46 = por %p44, %p45
    %s48 = sadd.s32 %s47, 1
    %p51 = scmp.eq.s32.totalorder %s13, 1
    %p52 = scmp.ne.s32.totalorder %s47, %s49
    %p53 = scmp.eq.s32.totalorder %s13, 0
    %p54 = por %p52, %p53
    %p55 = scmp.ne.s32.totalorder %s47, %s49
    %p56 = scmp.eq.s32.totalorder %s18, 1
    %p57 = por %p55, %p56
    %p58 = scmp.ne.s32.totalorder %s49, %s50
    %p59 = scmp.eq.s32.totalorder %s18, 0
    %p60 = por %p58, %p59
    %p61 = scmp.ne.s32.totalorder %s49, %s50
    %p62 = scmp.eq.s32.totalorder %s19, 1
    %p63 = por %p61, %p62
    %p65 = scmp.ne.s32.totalorder %s50, %s64
    %p66 = scmp.eq.s32.totalorder %s19, 0
    %p67 = por %p65, %p66
    %s69 = sadd.s32 %s68, 1
    %p72 = scmp.eq.s32.totalorder %s13, 1
    %p73 = scmp.ne.s32.totalorder %s68, %s70
    %p74 = scmp.eq.s32.totalorder %s13, 0
    %p75 = por %p73, %p74
    %p76 = scmp.ne.s32.totalorder %s68, %s70
    %p77 = scmp.eq.s32.totalorder %s18, 1
    %p78 = por %p76, %p77
    %p79 = scmp.ne.s32.totalorder %s70, %s71
    %p80 = scmp.eq.s32.totalorder %s18, 0
    %p81 = por %p79, %p80
    %p82 = scmp.ne.s32.totalorder %s70, %s71
    %p83 = scmp.eq.s32.totalorder %s19, 1
    %p84 = por %p82, %p83
    %p86 = scmp.ne.s32.totalorder %s71, %s85
    %p87 = scmp.eq.s32.totalorder %s19, 0
    %p88 = por %p86, %p87
    %s90 = sadd.s32 %s89, 1
    %p93 = scmp.eq.s32.totalorder %s13, 1
    %p94 = scmp.ne.s32.totalorder %s89, %s91
    %p95 = scmp.eq.s32.totalorder %s13, 0
    %p96 = por %p94, %p95
    %p97 = scmp.ne.s32.totalorder %s89, %s91
    %p98 = scmp.eq.s32.totalorder %s18, 1
    %p99 = por %p97, %p98
    %p100 = scmp.ne.s32.totalorder %s91, %s92
    %p101 = scmp.eq.s32.totalorder %s18, 0
    %p102 = por %p100, %p101
    %p103 = scmp.ne.s32.totalorder %s91, %s92
    %p104 = scmp.eq.s32.totalorder %s19, 1
    %p105 = por %p103, %p104
    %p107 = scmp.ne.s32.totalorder %s92, %s106
    %p108 = scmp.eq.s32.totalorder %s19, 0
    %p109 = por %p107, %p108
    %s110 = ssub.s32 %s13, %s20
    %p111 = scmp.eq.s32.totalorder %s110, 0
    %s113 = sadd.s32 %s112, 1
    %s114 = scalar_select %p111, %s112, %s113
    %p117 = pneg %p111
    %p118 = scmp.eq.s32.totalorder %s13, 1
    %p119 = por %p117, %p118
    %p120 = scmp.ne.s32.totalorder %s112, %s115
    %p121 = scmp.eq.s32.totalorder %s13, 0
    %p122 = por %p120, %p121
    %p123 = scmp.ne.s32.totalorder %s112, %s115
    %p124 = scmp.eq.s32.totalorder %s18, 1
    %p125 = por %p123, %p124
    %p126 = scmp.ne.s32.totalorder %s115, %s116
    %p127 = scmp.eq.s32.totalorder %s18, 0
    %p128 = por %p126, %p127
    %p129 = scmp.ne.s32.totalorder %s115, %s116
    %p130 = scmp.eq.s32.totalorder %s19, 1
    %p131 = por %p129, %p130
    %p133 = scmp.ne.s32.totalorder %s116, %s132
    %p134 = scmp.eq.s32.totalorder %s19, 0
    %p135 = por %p133, %p134
    %s137 = sadd.s32 %s136, 1
    %p140 = scmp.eq.s32.totalorder %s13, 1
    %p141 = scmp.ne.s32.totalorder %s136, %s138
    %p142 = scmp.eq.s32.totalorder %s13, 0
    %p143 = por %p141, %p142
    %p144 = scmp.ne.s32.totalorder %s136, %s138
    %p145 = scmp.eq.s32.totalorder %s18, 1
    %p146 = por %p144, %p145
    %p147 = scmp.ne.s32.totalorder %s138, %s139
    %p148 = scmp.eq.s32.totalorder %s18, 0
    %p149 = por %p147, %p148
    %p150 = scmp.ne.s32.totalorder %s138, %s139
    %p151 = scmp.eq.s32.totalorder %s19, 1
    %p152 = por %p150, %p151
    %p154 = scmp.ne.s32.totalorder %s139, %s153
    %p155 = scmp.eq.s32.totalorder %s19, 0
    %p156 = por %p154, %p155
    %s158 = sadd.s32 %s157, 1
    %p161 = scmp.eq.s32.totalorder %s13, 1
    %p162 = scmp.ne.s32.totalorder %s157, %s159
    %p163 = scmp.eq.s32.totalorder %s13, 0
    %p164 = por %p162, %p163
    %p165 = scmp.ne.s32.totalorder %s157, %s159
    %p166 = scmp.eq.s32.totalorder %s18, 1
    %p167 = por %p165, %p166
    %p168 = scmp.ne.s32.totalorder %s159, %s160
    %p169 = scmp.eq.s32.totalorder %s18, 0
    %p170 = por %p168, %p169
    %p171 = scmp.ne.s32.totalorder %s159, %s160
    %p172 = scmp.eq.s32.totalorder %s19, 1
    %p173 = por %p171, %p172
    %p175 = scmp.ne.s32.totalorder %s160, %s174
    %p176 = scmp.eq.s32.totalorder %s19, 0
    %p177 = por %p175, %p176
    %p178 = scmp.le.s32.totalorder 1, %s13
    %p179 = scmp.lt.s32.totalorder %s13, 3
    %p180 = pnand %p178, %p179
    %p181 = pneg %p180
    // Predicated region
    $region9: #{up_block_skip_forward.4} parent=5 // pred_check
      _
    $region10: #{up_block_skip_forward.4} parent=5 // pred_check_branch
      %183 = sbr.rel (%p180) target = $region12
    $region11: #{up_block_skip_forward.4} parent=5 // pred_region
      %s184 = ssub.s32 %s13, 1
      // Predicated region
      $region13: #{up_block_skip_forward.4} parent=11 // pred_check
        %p185 = pneg %p60
      $region14: #{up_block_skip_forward.4} parent=11 // pred_check_branch
        %187 = sbr.rel (%p185) target = $region16
      $region15: #{up_block_skip_forward.4} parent=11 // pred_region
        _
      $region16: #{up_block_skip_forward.4} parent=11 // pred_fallthru
        _
      // Predicated region
      $region17: #{up_block_skip_forward.4} parent=11 // pred_check
        %p188 = pneg %p81
      $region18: #{up_block_skip_forward.4} parent=11 // pred_check_branch
        %190 = sbr.rel (%p188) target = $region20
      $region19: #{up_block_skip_forward.4} parent=11 // pred_region
        _
      $region20: #{up_block_skip_forward.4} parent=11 // pred_fallthru
        _
      // Predicated region
      $region21: #{up_block_skip_forward.4} parent=11 // pred_check
        %p191 = pneg %p102
      $region22: #{up_block_skip_forward.4} parent=11 // pred_check_branch
        %193 = sbr.rel (%p191) target = $region24
      $region23: #{up_block_skip_forward.4} parent=11 // pred_region
        _
      $region24: #{up_block_skip_forward.4} parent=11 // pred_fallthru
        _
    $region12: #{up_block_skip_forward.4} parent=5 // pred_fallthru
      _
    %p194 = scmp.lt.s32.totalorder %s13, 2
    // Predicated region
    $region25: #{up_block_skip_forward.4} parent=5 // pred_check
      %p195 = pneg %p194
    $region26: #{up_block_skip_forward.4} parent=5 // pred_check_branch
      %197 = sbr.rel (%p195) target = $region28
    $region27: #{up_block_skip_forward.4} parent=5 // pred_region
      // Predicated region
      $region29: #{up_block_skip_forward.4} parent=27 // pred_check
        %p198 = pneg %p33
      $region30: #{up_block_skip_forward.4} parent=27 // pred_check_branch
        %200 = sbr.rel (%p198) target = $region32
      $region31: #{up_block_skip_forward.4} parent=27 // pred_region
        %p201 = scmp.lt.s32.totalorder %s13, 1
        %s202 = scalar_select %p201, %s13, 1
        %s203 = smul.addr %s202, 3
        %s204 = smul.addr %s203, 2
        %s205 = scalar_lea.vmem %s0, %s204
      $region32: #{up_block_skip_forward.4} parent=27 // pred_fallthru
        _
    $region28: #{up_block_skip_forward.4} parent=5 // pred_fallthru
      _
    %p206 = scmp.le.s32.totalorder 1, %s13
    %p207 = scmp.lt.s32.totalorder %s13, 3
    %p208 = pnand %p206, %p207
    %p209 = pneg %p208
    // Predicated region
    $region33: #{up_block_skip_forward.4} parent=5 // pred_check
      _
    $region34: #{up_block_skip_forward.4} parent=5 // pred_check_branch
      %211 = sbr.rel (%p208) target = $region36
    $region35: #{up_block_skip_forward.4} parent=5 // pred_region
      %s212 = ssub.s32 %s13, 1
      %p213 = scmp.lt.s32.totalorder %s18, 1
      %s214 = scalar_select %p213, %s18, 1
      %s215 = smul.addr %s214, 3
      %s216 = smul.addr %s215, 2
      %s217 = scalar_lea.vmem %s0, %s216
      %p218 = pneg %p39
      %p219 = pneg %p36
      %p220 = pneg %p60
      %p221 = pneg %p57
      %p222 = pneg %p81
      %p223 = pneg %p78
      %p224 = pneg %p102
      %p225 = pneg %p99
      %p226 = pneg %p128
      %p227 = pneg %p125
      %p228 = scmp.lt.s32.totalorder %s18, 1
      %s229 = scalar_select %p228, %s18, 1
      %s230 = smul.addr %s229, 3
      %s231 = smul.addr %s230, 4
      %s232 = scalar_lea.vmem %s4, %s231
      %p233 = pneg %p149
      %p234 = pneg %p146
      %p235 = pneg %p170
      %p236 = pneg %p167
      %p237 = scmp.lt.s32.totalorder %s18, 1
      %s238 = scalar_select %p237, %s18, 1
      %s239 = smul.addr %s238, 3
      %s240 = smul.addr %s239, 2
      %s241 = scalar_lea.vmem %s0, %s240
      %p242 = scmp.lt.s32.totalorder %s18, 1
      %s243 = scalar_select %p242, %s18, 1
      %s244 = smul.addr %s243, 3
      %s245 = smul.addr %s244, 4
      %s246 = scalar_lea.vmem %s4, %s245
      %v248 = vld [vmem:[%s241] sm:$0x3f]
      %v249 = vld [vmem:[%s1] sm:$0x3]
      %s250 = scalar_lea.vmem %s1, 2
      %v251 = vld [vmem:[%s250] sm:$0x3]
      %v253 = vcombine.high %v248, %v248
      %v255 = vunpack.c.l.s4 1983009808
      %v256 = vunpack.c.0.s8 %v255
      %v257 = vlaneseq
      %v258 = vshrl.u32 %v257, 7
      %v259 = vsub.s32 %v256, %v258
      %v260 = vrot.slane %v248, %v259
      %v262 = vunpack.c.l.s4 1983009808
      %v263 = vunpack.c.0.s8 %v262
      %v264 = vlaneseq
      %v265 = vshrl.u32 %v264, 7
      %v266 = vsub.s32 %v263, %v265
      %v267 = vrot.slane %v253, %v266
      %v268 = vcombine.high %v260, %v260
      %269 = vrot.lane.b32.xlu0 %v260, 127
      %v270 = vpop.permute.xlu0 %269
      %271 = vrot.lane.b32.xlu0 %v268, 127
      %v272 = vpop.permute.xlu0 %271
      %273 = vrot.lane.b32.xlu0 %v267, 127
      %v274 = vpop.permute.xlu0 %273
      %vm275 = vcmask 1039360
      %v276 = vsel %vm275, %v270, %v272
      %v277 = vsel %vm275, %v272, %v274
      %vm278 = vcmask 31744
      %v280 = vsel %vm278, %v251, 0
      %vm282 = vcmask 1041408
      %v284 = vsel %vm282, %v276, 0
      %v287 = vsel %vm282, %v277, 0
      %v290 = vsel %vm282, %v274, 0
      %292 = vmatprep.subr.bf16.mxu0 0
      %293 = vmatpush1.bf16.msra.mxu0 0
      %294 = vmatprep.subr.bf16.mxu0 0
      %295 = vmatpush1.bf16.msra.mxu0 0
      %296 = vmatprep.subr.bf16.mxu0 0
      %297 = vmatpush1.bf16.msra.mxu0 0
      %298 = vmatprep.subr.bf16.mxu0 0
      %299 = vmatpush1.bf16.msra.mxu0 0
      %300 = vmatprep.subr.bf16.mxu0 0
      %301 = vmatpush1.bf16.msra.mxu0 0
      %302 = vmatprep.subr.bf16.mxu0 0
      %303 = vmatpush1.bf16.msra.mxu0 0
      %304 = vmatprep.subr.bf16.mxu0 0
      %305 = vmatpush1.bf16.msra.mxu0 0
      %306 = vmatprep.subr.bf16.mxu0 %v287
      %307 = vmatpush1.bf16.msra.mxu0 %v284
      %308 = vmatprep.subr.bf16.mxu0 0
      %309 = vmatpush2.bf16.msra.mxu0 0
      %310 = vmatprep.subr.bf16.mxu0 0
      %311 = vmatpush2.bf16.msra.mxu0 0
      %312 = vmatprep.subr.bf16.mxu0 0
      %313 = vmatpush2.bf16.msra.mxu0 0
      %314 = vmatprep.subr.bf16.mxu0 0
      %315 = vmatpush2.bf16.msra.mxu0 0
      %316 = vmatprep.subr.bf16.mxu0 0
      %317 = vmatpush2.bf16.msra.mxu0 0
      %318 = vmatprep.subr.bf16.mxu0 0
      %319 = vmatpush2.bf16.msra.mxu0 0
      %320 = vmatprep.subr.bf16.mxu0 0
      %321 = vmatpush2.bf16.msra.mxu0 0
      %322 = vmatprep.subr.bf16.mxu0 0
      %323 = vmatpush2.bf16.msra.mxu0 0
      %324 = vmatprep.mubr.bf16.mxu0 0
      %325 = vmatmul.mubr.bf16.gmra.mxu0 %v280
      %v326 = vpop.f32.mrf.mxu0
      %v327 = vadd.f32 0.0, %v326
      %v328 = vpop.f32.mrf.mxu0
      %v329 = vadd.f32 0.0, %v328
      %v330 = vpop.f32.mrf.mxu0
      %v331 = vpop.f32.mrf.mxu0
      %332 = vdwg.mxu0
      %333 = vmatprep.subr.bf16.mxu0 0
      %334 = vmatpush1.bf16.msra.mxu0 0
      %335 = vmatprep.subr.bf16.mxu0 0
      %336 = vmatpush1.bf16.msra.mxu0 0
      %337 = vmatprep.subr.bf16.mxu0 0
      %338 = vmatpush1.bf16.msra.mxu0 0
      %339 = vmatprep.subr.bf16.mxu0 0
      %340 = vmatpush1.bf16.msra.mxu0 0
      %341 = vmatprep.subr.bf16.mxu0 0
      %342 = vmatpush1.bf16.msra.mxu0 0
      %343 = vmatprep.subr.bf16.mxu0 0
      %344 = vmatpush1.bf16.msra.mxu0 0
      %345 = vmatprep.subr.bf16.mxu0 0
      %346 = vmatpush1.bf16.msra.mxu0 0
      %347 = vmatprep.subr.bf16.mxu0 0
      %348 = vmatpush1.bf16.msra.mxu0 %v290
      %349 = vmatprep.subr.bf16.mxu0 0
      %350 = vmatpush2.bf16.msra.mxu0 0
      %351 = vmatprep.subr.bf16.mxu0 0
      %352 = vmatpush2.bf16.msra.mxu0 0
      %353 = vmatprep.subr.bf16.mxu0 0
      %354 = vmatpush2.bf16.msra.mxu0 0
      %355 = vmatprep.subr.bf16.mxu0 0
      %356 = vmatpush2.bf16.msra.mxu0 0
      %357 = vmatprep.subr.bf16.mxu0 0
      %358 = vmatpush2.bf16.msra.mxu0 0
      %359 = vmatprep.subr.bf16.mxu0 0
      %360 = vmatpush2.bf16.msra.mxu0 0
      %361 = vmatprep.subr.bf16.mxu0 0
      %362 = vmatpush2.bf16.msra.mxu0 0
      %363 = vmatprep.subr.bf16.mxu0 0
      %364 = vmatpush2.bf16.msra.mxu0 0
      %365 = vmatprep.mubr.bf16.mxu0 0
      %366 = vmatmul.mubr.bf16.gmra.mxu0 %v280
      %v367 = vpop.f32.mrf.mxu0
      %v368 = vadd.f32 0.0, %v367
      %v369 = vpop.f32.mrf.mxu0
      %v370 = vpop.f32.mrf.mxu0
      %v371 = vpop.f32.mrf.mxu0
      %372 = vdwg.mxu0
      %v374 = vsel %vm278, %v249, 0
      %v377 = vsel %vm282, %v260, 0
      %v380 = vsel %vm282, %v268, 0
      %v383 = vsel %vm282, %v267, 0
      %385 = vmatprep.subr.bf16.mxu0 0
      %386 = vmatpush1.bf16.msra.mxu0 0
      %387 = vmatprep.subr.bf16.mxu0 0
      %388 = vmatpush1.bf16.msra.mxu0 0
      %389 = vmatprep.subr.bf16.mxu0 0
      %390 = vmatpush1.bf16.msra.mxu0 0
      %391 = vmatprep.subr.bf16.mxu0 0
      %392 = vmatpush1.bf16.msra.mxu0 0
      %393 = vmatprep.subr.bf16.mxu0 0
      %394 = vmatpush1.bf16.msra.mxu0 0
      %395 = vmatprep.subr.bf16.mxu0 0
      %396 = vmatpush1.bf16.msra.mxu0 0
      %397 = vmatprep.subr.bf16.mxu0 0
      %398 = vmatpush1.bf16.msra.mxu0 0
      %399 = vmatprep.subr.bf16.mxu0 %v380
      %400 = vmatpush1.bf16.msra.mxu0 %v377
      %401 = vmatprep.subr.bf16.mxu0 0
      %402 = vmatpush2.bf16.msra.mxu0 0
      %403 = vmatprep.subr.bf16.mxu0 0
      %404 = vmatpush2.bf16.msra.mxu0 0
      %405 = vmatprep.subr.bf16.mxu0 0
      %406 = vmatpush2.bf16.msra.mxu0 0
      %407 = vmatprep.subr.bf16.mxu0 0
      %408 = vmatpush2.bf16.msra.mxu0 0
      %409 = vmatprep.subr.bf16.mxu0 0
      %410 = vmatpush2.bf16.msra.mxu0 0
      %411 = vmatprep.subr.bf16.mxu0 0
      %412 = vmatpush2.bf16.msra.mxu0 0
      %413 = vmatprep.subr.bf16.mxu0 0
      %414 = vmatpush2.bf16.msra.mxu0 0
      %415 = vmatprep.subr.bf16.mxu0 0
      %416 = vmatpush2.bf16.msra.mxu0 0
      %417 = vmatprep.mubr.bf16.mxu0 0
      %418 = vmatmul.mubr.bf16.gmra.mxu0 %v374
      %v419 = vpop.f32.mrf.mxu0
      %v420 = vadd.f32 %v327, %v419
      %v421 = vpop.f32.mrf.mxu0
      %v422 = vadd.f32 %v329, %v421
      %v423 = vpop.f32.mrf.mxu0
      %v424 = vpop.f32.mrf.mxu0
      %425 = vdwg.mxu0
      %426 = vmatprep.subr.bf16.mxu0 0
      %427 = vmatpush1.bf16.msra.mxu0 0
      %428 = vmatprep.subr.bf16.mxu0 0
      %429 = vmatpush1.bf16.msra.mxu0 0
      %430 = vmatprep.subr.bf16.mxu0 0
      %431 = vmatpush1.bf16.msra.mxu0 0
      %432 = vmatprep.subr.bf16.mxu0 0
      %433 = vmatpush1.bf16.msra.mxu0 0
      %434 = vmatprep.subr.bf16.mxu0 0
      %435 = vmatpush1.bf16.msra.mxu0 0
      %436 = vmatprep.subr.bf16.mxu0 0
      %437 = vmatpush1.bf16.msra.mxu0 0
      %438 = vmatprep.subr.bf16.mxu0 0
      %439 = vmatpush1.bf16.msra.mxu0 0
      %440 = vmatprep.subr.bf16.mxu0 0
      %441 = vmatpush1.bf16.msra.mxu0 %v383
      %442 = vmatprep.subr.bf16.mxu0 0
      %443 = vmatpush2.bf16.msra.mxu0 0
      %444 = vmatprep.subr.bf16.mxu0 0
      %445 = vmatpush2.bf16.msra.mxu0 0
      %446 = vmatprep.subr.bf16.mxu0 0
      %447 = vmatpush2.bf16.msra.mxu0 0
      %448 = vmatprep.subr.bf16.mxu0 0
      %449 = vmatpush2.bf16.msra.mxu0 0
      %450 = vmatprep.subr.bf16.mxu0 0
      %451 = vmatpush2.bf16.msra.mxu0 0
      %452 = vmatprep.subr.bf16.mxu0 0
      %453 = vmatpush2.bf16.msra.mxu0 0
      %454 = vmatprep.subr.bf16.mxu0 0
      %455 = vmatpush2.bf16.msra.mxu0 0
      %456 = vmatprep.subr.bf16.mxu0 0
      %457 = vmatpush2.bf16.msra.mxu0 0
      %458 = vmatprep.mubr.bf16.mxu0 0
      %459 = vmatmul.mubr.bf16.gmra.mxu0 %v374
      %v460 = vpop.f32.mrf.mxu0
      %v461 = vadd.f32 %v368, %v460
      %v462 = vpop.f32.mrf.mxu0
      %v463 = vpop.f32.mrf.mxu0
      %v464 = vpop.f32.mrf.mxu0
      %465 = vdwg.mxu0
      %s466 = scalar_lea.vmem %s1, 4
      %v467 = vld [vmem:[%s466] sm:$0x3]
      %468 = vrot.lane.b32.xlu0 %v260, 126
      %v469 = vpop.permute.xlu0 %468
      %470 = vrot.lane.b32.xlu0 %v268, 126
      %v471 = vpop.permute.xlu0 %470
      %472 = vrot.lane.b32.xlu0 %v267, 126
      %v473 = vpop.permute.xlu0 %472
      %vm474 = vcmask 1031168
      %v475 = vsel %vm474, %v469, %v471
      %v476 = vsel %vm474, %v471, %v473
      %v478 = vsel %vm278, %v467, 0
      %v481 = vsel %vm282, %v475, 0
      %v484 = vsel %vm282, %v476, 0
      %v487 = vsel %vm282, %v473, 0
      %489 = vmatprep.subr.bf16.mxu0 0
      %490 = vmatpush1.bf16.msra.mxu0 0
      %491 = vmatprep.subr.bf16.mxu0 0
      %492 = vmatpush1.bf16.msra.mxu0 0
      %493 = vmatprep.subr.bf16.mxu0 0
      %494 = vmatpush1.bf16.msra.mxu0 0
      %495 = vmatprep.subr.bf16.mxu0 0
      %496 = vmatpush1.bf16.msra.mxu0 0
      %497 = vmatprep.subr.bf16.mxu0 0
      %498 = vmatpush1.bf16.msra.mxu0 0
      %499 = vmatprep.subr.bf16.mxu0 0
      %500 = vmatpush1.bf16.msra.mxu0 0
      %501 = vmatprep.subr.bf16.mxu0 0
      %502 = vmatpush1.bf16.msra.mxu0 0
      %503 = vmatprep.subr.bf16.mxu0 %v484
      %504 = vmatpush1.bf16.msra.mxu0 %v481
      %505 = vmatprep.subr.bf16.mxu0 0
      %506 = vmatpush2.bf16.msra.mxu0 0
      %507 = vmatprep.subr.bf16.mxu0 0
      %508 = vmatpush2.bf16.msra.mxu0 0
      %509 = vmatprep.subr.bf16.mxu0 0
      %510 = vmatpush2.bf16.msra.mxu0 0
      %511 = vmatprep.subr.bf16.mxu0 0
      %512 = vmatpush2.bf16.msra.mxu0 0
      %513 = vmatprep.subr.bf16.mxu0 0
      %514 = vmatpush2.bf16.msra.mxu0 0
      %515 = vmatprep.subr.bf16.mxu0 0
      %516 = vmatpush2.bf16.msra.mxu0 0
      %517 = vmatprep.subr.bf16.mxu0 0
      %518 = vmatpush2.bf16.msra.mxu0 0
      %519 = vmatprep.subr.bf16.mxu0 0
      %520 = vmatpush2.bf16.msra.mxu0 0
      %521 = vmatprep.mubr.bf16.mxu0 0
      %522 = vmatmul.mubr.bf16.gmra.mxu0 %v478
      %v523 = vpop.f32.mrf.mxu0
      %v524 = vadd.f32 0.0, %v523
      %v525 = vpop.f32.mrf.mxu0
      %v526 = vadd.f32 0.0, %v525
      %v527 = vpop.f32.mrf.mxu0
      %v528 = vpop.f32.mrf.mxu0
      %529 = vdwg.mxu0
      %530 = vmatprep.subr.bf16.mxu0 0
      %531 = vmatpush1.bf16.msra.mxu0 0
      %532 = vmatprep.subr.bf16.mxu0 0
      %533 = vmatpush1.bf16.msra.mxu0 0
      %534 = vmatprep.subr.bf16.mxu0 0
      %535 = vmatpush1.bf16.msra.mxu0 0
      %536 = vmatprep.subr.bf16.mxu0 0
      %537 = vmatpush1.bf16.msra.mxu0 0
      %538 = vmatprep.subr.bf16.mxu0 0
      %539 = vmatpush1.bf16.msra.mxu0 0
      %540 = vmatprep.subr.bf16.mxu0 0
      %541 = vmatpush1.bf16.msra.mxu0 0
      %542 = vmatprep.subr.bf16.mxu0 0
      %543 = vmatpush1.bf16.msra.mxu0 0
      %544 = vmatprep.subr.bf16.mxu0 0
      %545 = vmatpush1.bf16.msra.mxu0 %v487
      %546 = vmatprep.subr.bf16.mxu0 0
      %547 = vmatpush2.bf16.msra.mxu0 0
      %548 = vmatprep.subr.bf16.mxu0 0
      %549 = vmatpush2.bf16.msra.mxu0 0
      %550 = vmatprep.subr.bf16.mxu0 0
      %551 = vmatpush2.bf16.msra.mxu0 0
      %552 = vmatprep.subr.bf16.mxu0 0
      %553 = vmatpush2.bf16.msra.mxu0 0
      %554 = vmatprep.subr.bf16.mxu0 0
      %555 = vmatpush2.bf16.msra.mxu0 0
      %556 = vmatprep.subr.bf16.mxu0 0
      %557 = vmatpush2.bf16.msra.mxu0 0
      %558 = vmatprep.subr.bf16.mxu0 0
      %559 = vmatpush2.bf16.msra.mxu0 0
      %560 = vmatprep.subr.bf16.mxu0 0
      %561 = vmatpush2.bf16.msra.mxu0 0
      %562 = vmatprep.mubr.bf16.mxu0 0
      %563 = vmatmul.mubr.bf16.gmra.mxu0 %v478
      %v564 = vpop.f32.mrf.mxu0
      %v565 = vadd.f32 0.0, %v564
      %v566 = vpop.f32.mrf.mxu0
      %v567 = vpop.f32.mrf.mxu0
      %v568 = vpop.f32.mrf.mxu0
      %569 = vdwg.mxu0
      %v570 = vadd.f32 %v420, %v524
      %v571 = vadd.f32 %v422, %v526
      %v572 = vadd.f32 %v461, %v565
      %s573 = scalar_lea.vmem %s1, 6
      %v574 = vld [vmem:[%s573] sm:$0x3]
      %575 = vrot.lane.b32.xlu0 %v260, 110
      %v576 = vpop.permute.xlu0 %575
      %577 = vrot.lane.b32.xlu0 %v268, 110
      %v578 = vpop.permute.xlu0 %577
      %579 = vrot.lane.b32.xlu0 %v267, 110
      %v580 = vpop.permute.xlu0 %579
      %vm581 = vcmask 900096
      %v582 = vsel %vm581, %v576, %v578
      %v583 = vsel %vm581, %v578, %v580
      %v585 = vsel %vm278, %v574, 0
      %v588 = vsel %vm282, %v582, 0
      %v591 = vsel %vm282, %v583, 0
      %v594 = vsel %vm282, %v580, 0
      %596 = vmatprep.subr.bf16.mxu0 0
      %597 = vmatpush1.bf16.msra.mxu0 0
      %598 = vmatprep.subr.bf16.mxu0 0
      %599 = vmatpush1.bf16.msra.mxu0 0
      %600 = vmatprep.subr.bf16.mxu0 0
      %601 = vmatpush1.bf16.msra.mxu0 0
      %602 = vmatprep.subr.bf16.mxu0 0
      %603 = vmatpush1.bf16.msra.mxu0 0
      %604 = vmatprep.subr.bf16.mxu0 0
      %605 = vmatpush1.bf16.msra.mxu0 0
      %606 = vmatprep.subr.bf16.mxu0 0
      %607 = vmatpush1.bf16.msra.mxu0 0
      %608 = vmatprep.subr.bf16.mxu0 0
      %609 = vmatpush1.bf16.msra.mxu0 0
      %610 = vmatprep.subr.bf16.mxu0 %v591
      %611 = vmatpush1.bf16.msra.mxu0 %v588
      %612 = vmatprep.subr.bf16.mxu0 0
      %613 = vmatpush2.bf16.msra.mxu0 0
      %614 = vmatprep.subr.bf16.mxu0 0
      %615 = vmatpush2.bf16.msra.mxu0 0
      %616 = vmatprep.subr.bf16.mxu0 0
      %617 = vmatpush2.bf16.msra.mxu0 0
      %618 = vmatprep.subr.bf16.mxu0 0
      %619 = vmatpush2.bf16.msra.mxu0 0
      %620 = vmatprep.subr.bf16.mxu0 0
      %621 = vmatpush2.bf16.msra.mxu0 0
      %622 = vmatprep.subr.bf16.mxu0 0
      %623 = vmatpush2.bf16.msra.mxu0 0
      %624 = vmatprep.subr.bf16.mxu0 0
      %625 = vmatpush2.bf16.msra.mxu0 0
      %626 = vmatprep.subr.bf16.mxu0 0
      %627 = vmatpush2.bf16.msra.mxu0 0
      %628 = vmatprep.mubr.bf16.mxu0 0
      %629 = vmatmul.mubr.bf16.gmra.mxu0 %v585
      %v630 = vpop.f32.mrf.mxu0
      %v631 = vadd.f32 0.0, %v630
      %v632 = vpop.f32.mrf.mxu0
      %v633 = vadd.f32 0.0, %v632
      %v634 = vpop.f32.mrf.mxu0
      %v635 = vpop.f32.mrf.mxu0
      %636 = vdwg.mxu0
      %637 = vmatprep.subr.bf16.mxu0 0
      %638 = vmatpush1.bf16.msra.mxu0 0
      %639 = vmatprep.subr.bf16.mxu0 0
      %640 = vmatpush1.bf16.msra.mxu0 0
      %641 = vmatprep.subr.bf16.mxu0 0
      %642 = vmatpush1.bf16.msra.mxu0 0
      %643 = vmatprep.subr.bf16.mxu0 0
      %644 = vmatpush1.bf16.msra.mxu0 0
      %645 = vmatprep.subr.bf16.mxu0 0
      %646 = vmatpush1.bf16.msra.mxu0 0
      %647 = vmatprep.subr.bf16.mxu0 0
      %648 = vmatpush1.bf16.msra.mxu0 0
      %649 = vmatprep.subr.bf16.mxu0 0
      %650 = vmatpush1.bf16.msra.mxu0 0
      %651 = vmatprep.subr.bf16.mxu0 0
      %652 = vmatpush1.bf16.msra.mxu0 %v594
      %653 = vmatprep.subr.bf16.mxu0 0
      %654 = vmatpush2.bf16.msra.mxu0 0
      %655 = vmatprep.subr.bf16.mxu0 0
      %656 = vmatpush2.bf16.msra.mxu0 0
      %657 = vmatprep.subr.bf16.mxu0 0
      %658 = vmatpush2.bf16.msra.mxu0 0
      %659 = vmatprep.subr.bf16.mxu0 0
      %660 = vmatpush2.bf16.msra.mxu0 0
      %661 = vmatprep.subr.bf16.mxu0 0
      %662 = vmatpush2.bf16.msra.mxu0 0
      %663 = vmatprep.subr.bf16.mxu0 0
      %664 = vmatpush2.bf16.msra.mxu0 0
      %665 = vmatprep.subr.bf16.mxu0 0
      %666 = vmatpush2.bf16.msra.mxu0 0
      %667 = vmatprep.subr.bf16.mxu0 0
      %668 = vmatpush2.bf16.msra.mxu0 0
      %669 = vmatprep.mubr.bf16.mxu0 0
      %670 = vmatmul.mubr.bf16.gmra.mxu0 %v585
      %v671 = vpop.f32.mrf.mxu0
      %v672 = vadd.f32 0.0, %v671
      %v673 = vpop.f32.mrf.mxu0
      %v674 = vpop.f32.mrf.mxu0
      %v675 = vpop.f32.mrf.mxu0
      %676 = vdwg.mxu0
      %v677 = vadd.f32 %v570, %v631
      %v678 = vadd.f32 %v571, %v633
      %v679 = vadd.f32 %v572, %v672
      %s680 = scalar_lea.vmem %s1, 8
      %v681 = vld [vmem:[%s680] sm:$0x3]
      %682 = vrot.lane.b32.xlu0 %v260, 109
      %v683 = vpop.permute.xlu0 %682
      %684 = vrot.lane.b32.xlu0 %v268, 109
      %v685 = vpop.permute.xlu0 %684
      %686 = vrot.lane.b32.xlu0 %v267, 109
      %v687 = vpop.permute.xlu0 %686
      %vm688 = vcmask 891904
      %v689 = vsel %vm688, %v683, %v685
      %v690 = vsel %vm688, %v685, %v687
      %v692 = vsel %vm278, %v681, 0
      %v695 = vsel %vm282, %v689, 0
      %v698 = vsel %vm282, %v690, 0
      %v701 = vsel %vm282, %v687, 0
      %703 = vmatprep.subr.bf16.mxu0 0
      %704 = vmatpush1.bf16.msra.mxu0 0
      %705 = vmatprep.subr.bf16.mxu0 0
      %706 = vmatpush1.bf16.msra.mxu0 0
      %707 = vmatprep.subr.bf16.mxu0 0
      %708 = vmatpush1.bf16.msra.mxu0 0
      %709 = vmatprep.subr.bf16.mxu0 0
      %710 = vmatpush1.bf16.msra.mxu0 0
      %711 = vmatprep.subr.bf16.mxu0 0
      %712 = vmatpush1.bf16.msra.mxu0 0
      %713 = vmatprep.subr.bf16.mxu0 0
      %714 = vmatpush1.bf16.msra.mxu0 0
      %715 = vmatprep.subr.bf16.mxu0 0
      %716 = vmatpush1.bf16.msra.mxu0 0
      %717 = vmatprep.subr.bf16.mxu0 %v698
      %718 = vmatpush1.bf16.msra.mxu0 %v695
      %719 = vmatprep.subr.bf16.mxu0 0
      %720 = vmatpush2.bf16.msra.mxu0 0
      %721 = vmatprep.subr.bf16.mxu0 0
      %722 = vmatpush2.bf16.msra.mxu0 0
      %723 = vmatprep.subr.bf16.mxu0 0
      %724 = vmatpush2.bf16.msra.mxu0 0
      %725 = vmatprep.subr.bf16.mxu0 0
      %726 = vmatpush2.bf16.msra.mxu0 0
      %727 = vmatprep.subr.bf16.mxu0 0
      %728 = vmatpush2.bf16.msra.mxu0 0
      %729 = vmatprep.subr.bf16.mxu0 0
      %730 = vmatpush2.bf16.msra.mxu0 0
      %731 = vmatprep.subr.bf16.mxu0 0
      %732 = vmatpush2.bf16.msra.mxu0 0
      %733 = vmatprep.subr.bf16.mxu0 0
      %734 = vmatpush2.bf16.msra.mxu0 0
      %735 = vmatprep.mubr.bf16.mxu0 0
      %736 = vmatmul.mubr.bf16.gmra.mxu0 %v692
      %v737 = vpop.f32.mrf.mxu0
      %v738 = vadd.f32 0.0, %v737
      %v739 = vpop.f32.mrf.mxu0
      %v740 = vadd.f32 0.0, %v739
      %v741 = vpop.f32.mrf.mxu0
      %v742 = vpop.f32.mrf.mxu0
      %743 = vdwg.mxu0
      %744 = vmatprep.subr.bf16.mxu0 0
      %745 = vmatpush1.bf16.msra.mxu0 0
      %746 = vmatprep.subr.bf16.mxu0 0
      %747 = vmatpush1.bf16.msra.mxu0 0
      %748 = vmatprep.subr.bf16.mxu0 0
      %749 = vmatpush1.bf16.msra.mxu0 0
      %750 = vmatprep.subr.bf16.mxu0 0
      %751 = vmatpush1.bf16.msra.mxu0 0
      %752 = vmatprep.subr.bf16.mxu0 0
      %753 = vmatpush1.bf16.msra.mxu0 0
      %754 = vmatprep.subr.bf16.mxu0 0
      %755 = vmatpush1.bf16.msra.mxu0 0
      %756 = vmatprep.subr.bf16.mxu0 0
      %757 = vmatpush1.bf16.msra.mxu0 0
      %758 = vmatprep.subr.bf16.mxu0 0
      %759 = vmatpush1.bf16.msra.mxu0 %v701
      %760 = vmatprep.subr.bf16.mxu0 0
      %761 = vmatpush2.bf16.msra.mxu0 0
      %762 = vmatprep.subr.bf16.mxu0 0
      %763 = vmatpush2.bf16.msra.mxu0 0
      %764 = vmatprep.subr.bf16.mxu0 0
      %765 = vmatpush2.bf16.msra.mxu0 0
      %766 = vmatprep.subr.bf16.mxu0 0
      %767 = vmatpush2.bf16.msra.mxu0 0
      %768 = vmatprep.subr.bf16.mxu0 0
      %769 = vmatpush2.bf16.msra.mxu0 0
      %770 = vmatprep.subr.bf16.mxu0 0
      %771 = vmatpush2.bf16.msra.mxu0 0
      %772 = vmatprep.subr.bf16.mxu0 0
      %773 = vmatpush2.bf16.msra.mxu0 0
      %774 = vmatprep.subr.bf16.mxu0 0
      %775 = vmatpush2.bf16.msra.mxu0 0
      %776 = vmatprep.mubr.bf16.mxu0 0
      %777 = vmatmul.mubr.bf16.gmra.mxu0 %v692
      %v778 = vpop.f32.mrf.mxu0
      %v779 = vadd.f32 0.0, %v778
      %v780 = vpop.f32.mrf.mxu0
      %v781 = vpop.f32.mrf.mxu0
      %v782 = vpop.f32.mrf.mxu0
      %783 = vdwg.mxu0
      %v784 = vadd.f32 %v677, %v738
      %v785 = vadd.f32 %v678, %v740
      %v786 = vadd.f32 %v679, %v779
      %s787 = scalar_lea.vmem %s1, 10
      %v788 = vld [vmem:[%s787] sm:$0x3]
      %789 = vrot.lane.b32.xlu0 %v260, 108
      %v790 = vpop.permute.xlu0 %789
      %791 = vrot.lane.b32.xlu0 %v268, 108
      %v792 = vpop.permute.xlu0 %791
      %793 = vrot.lane.b32.xlu0 %v267, 108
      %v794 = vpop.permute.xlu0 %793
      %vm795 = vcmask 883712
      %v796 = vsel %vm795, %v790, %v792
      %v797 = vsel %vm795, %v792, %v794
      %v799 = vsel %vm278, %v788, 0
      %v802 = vsel %vm282, %v796, 0
      %v805 = vsel %vm282, %v797, 0
      %v808 = vsel %vm282, %v794, 0
      %810 = vmatprep.subr.bf16.mxu0 0
      %811 = vmatpush1.bf16.msra.mxu0 0
      %812 = vmatprep.subr.bf16.mxu0 0
      %813 = vmatpush1.bf16.msra.mxu0 0
      %814 = vmatprep.subr.bf16.mxu0 0
      %815 = vmatpush1.bf16.msra.mxu0 0
      %816 = vmatprep.subr.bf16.mxu0 0
      %817 = vmatpush1.bf16.msra.mxu0 0
      %818 = vmatprep.subr.bf16.mxu0 0
      %819 = vmatpush1.bf16.msra.mxu0 0
      %820 = vmatprep.subr.bf16.mxu0 0
      %821 = vmatpush1.bf16.msra.mxu0 0
      %822 = vmatprep.subr.bf16.mxu0 0
      %823 = vmatpush1.bf16.msra.mxu0 0
      %824 = vmatprep.subr.bf16.mxu0 %v805
      %825 = vmatpush1.bf16.msra.mxu0 %v802
      %826 = vmatprep.subr.bf16.mxu0 0
      %827 = vmatpush2.bf16.msra.mxu0 0
      %828 = vmatprep.subr.bf16.mxu0 0
      %829 = vmatpush2.bf16.msra.mxu0 0
      %830 = vmatprep.subr.bf16.mxu0 0
      %831 = vmatpush2.bf16.msra.mxu0 0
      %832 = vmatprep.subr.bf16.mxu0 0
      %833 = vmatpush2.bf16.msra.mxu0 0
      %834 = vmatprep.subr.bf16.mxu0 0
      %835 = vmatpush2.bf16.msra.mxu0 0
      %836 = vmatprep.subr.bf16.mxu0 0
      %837 = vmatpush2.bf16.msra.mxu0 0
      %838 = vmatprep.subr.bf16.mxu0 0
      %839 = vmatpush2.bf16.msra.mxu0 0
      %840 = vmatprep.subr.bf16.mxu0 0
      %841 = vmatpush2.bf16.msra.mxu0 0
      %842 = vmatprep.mubr.bf16.mxu0 0
      %843 = vmatmul.mubr.bf16.gmra.mxu0 %v799
      %v844 = vpop.f32.mrf.mxu0
      %v845 = vadd.f32 0.0, %v844
      %v846 = vpop.f32.mrf.mxu0
      %v847 = vadd.f32 0.0, %v846
      %v848 = vpop.f32.mrf.mxu0
      %v849 = vpop.f32.mrf.mxu0
      %850 = vdwg.mxu0
      %851 = vmatprep.subr.bf16.mxu0 0
      %852 = vmatpush1.bf16.msra.mxu0 0
      %853 = vmatprep.subr.bf16.mxu0 0
      %854 = vmatpush1.bf16.msra.mxu0 0
      %855 = vmatprep.subr.bf16.mxu0 0
      %856 = vmatpush1.bf16.msra.mxu0 0
      %857 = vmatprep.subr.bf16.mxu0 0
      %858 = vmatpush1.bf16.msra.mxu0 0
      %859 = vmatprep.subr.bf16.mxu0 0
      %860 = vmatpush1.bf16.msra.mxu0 0
      %861 = vmatprep.subr.bf16.mxu0 0
      %862 = vmatpush1.bf16.msra.mxu0 0
      %863 = vmatprep.subr.bf16.mxu0 0
      %864 = vmatpush1.bf16.msra.mxu0 0
      %865 = vmatprep.subr.bf16.mxu0 0
      %866 = vmatpush1.bf16.msra.mxu0 %v808
      %867 = vmatprep.subr.bf16.mxu0 0
      %868 = vmatpush2.bf16.msra.mxu0 0
      %869 = vmatprep.subr.bf16.mxu0 0
      %870 = vmatpush2.bf16.msra.mxu0 0
      %871 = vmatprep.subr.bf16.mxu0 0
      %872 = vmatpush2.bf16.msra.mxu0 0
      %873 = vmatprep.subr.bf16.mxu0 0
      %874 = vmatpush2.bf16.msra.mxu0 0
      %875 = vmatprep.subr.bf16.mxu0 0
      %876 = vmatpush2.bf16.msra.mxu0 0
      %877 = vmatprep.subr.bf16.mxu0 0
      %878 = vmatpush2.bf16.msra.mxu0 0
      %879 = vmatprep.subr.bf16.mxu0 0
      %880 = vmatpush2.bf16.msra.mxu0 0
      %881 = vmatprep.subr.bf16.mxu0 0
      %882 = vmatpush2.bf16.msra.mxu0 0
      %883 = vmatprep.mubr.bf16.mxu0 0
      %884 = vmatmul.mubr.bf16.gmra.mxu0 %v799
      %v885 = vpop.f32.mrf.mxu0
      %v886 = vadd.f32 0.0, %v885
      %v887 = vpop.f32.mrf.mxu0
      %v888 = vpop.f32.mrf.mxu0
      %v889 = vpop.f32.mrf.mxu0
      %890 = vdwg.mxu0
      %v891 = vadd.f32 %v784, %v845
      %v892 = vadd.f32 %v785, %v847
      %v893 = vadd.f32 %v786, %v886
      %s894 = scalar_lea.vmem %s1, 12
      %v895 = vld [vmem:[%s894] sm:$0x3]
      %896 = vrot.lane.b32.xlu0 %v260, 92
      %v897 = vpop.permute.xlu0 %896
      %898 = vrot.lane.b32.xlu0 %v268, 92
      %v899 = vpop.permute.xlu0 %898
      %900 = vrot.lane.b32.xlu0 %v267, 92
      %v901 = vpop.permute.xlu0 %900
      %vm902 = vcmask 752640
      %v903 = vsel %vm902, %v897, %v899
      %v904 = vsel %vm902, %v899, %v901
      %v906 = vsel %vm278, %v895, 0
      %v909 = vsel %vm282, %v903, 0
      %v912 = vsel %vm282, %v904, 0
      %v915 = vsel %vm282, %v901, 0
      %917 = vmatprep.subr.bf16.mxu0 0
      %918 = vmatpush1.bf16.msra.mxu0 0
      %919 = vmatprep.subr.bf16.mxu0 0
      %920 = vmatpush1.bf16.msra.mxu0 0
      %921 = vmatprep.subr.bf16.mxu0 0
      %922 = vmatpush1.bf16.msra.mxu0 0
      %923 = vmatprep.subr.bf16.mxu0 0
      %924 = vmatpush1.bf16.msra.mxu0 0
      %925 = vmatprep.subr.bf16.mxu0 0
      %926 = vmatpush1.bf16.msra.mxu0 0
      %927 = vmatprep.subr.bf16.mxu0 0
      %928 = vmatpush1.bf16.msra.mxu0 0
      %929 = vmatprep.subr.bf16.mxu0 0
      %930 = vmatpush1.bf16.msra.mxu0 0
      %931 = vmatprep.subr.bf16.mxu0 %v912
      %932 = vmatpush1.bf16.msra.mxu0 %v909
      %933 = vmatprep.subr.bf16.mxu0 0
      %934 = vmatpush2.bf16.msra.mxu0 0
      %935 = vmatprep.subr.bf16.mxu0 0
      %936 = vmatpush2.bf16.msra.mxu0 0
      %937 = vmatprep.subr.bf16.mxu0 0
      %938 = vmatpush2.bf16.msra.mxu0 0
      %939 = vmatprep.subr.bf16.mxu0 0
      %940 = vmatpush2.bf16.msra.mxu0 0
      %941 = vmatprep.subr.bf16.mxu0 0
      %942 = vmatpush2.bf16.msra.mxu0 0
      %943 = vmatprep.subr.bf16.mxu0 0
      %944 = vmatpush2.bf16.msra.mxu0 0
      %945 = vmatprep.subr.bf16.mxu0 0
      %946 = vmatpush2.bf16.msra.mxu0 0
      %947 = vmatprep.subr.bf16.mxu0 0
      %948 = vmatpush2.bf16.msra.mxu0 0
      %949 = vmatprep.mubr.bf16.mxu0 0
      %950 = vmatmul.mubr.bf16.gmra.mxu0 %v906
      %v951 = vpop.f32.mrf.mxu0
      %v952 = vadd.f32 0.0, %v951
      %v953 = vpop.f32.mrf.mxu0
      %v954 = vadd.f32 0.0, %v953
      %v955 = vpop.f32.mrf.mxu0
      %v956 = vpop.f32.mrf.mxu0
      %957 = vdwg.mxu0
      %958 = vmatprep.subr.bf16.mxu0 0
      %959 = vmatpush1.bf16.msra.mxu0 0
      %960 = vmatprep.subr.bf16.mxu0 0
      %961 = vmatpush1.bf16.msra.mxu0 0
      %962 = vmatprep.subr.bf16.mxu0 0
      %963 = vmatpush1.bf16.msra.mxu0 0
      %964 = vmatprep.subr.bf16.mxu0 0
      %965 = vmatpush1.bf16.msra.mxu0 0
      %966 = vmatprep.subr.bf16.mxu0 0
      %967 = vmatpush1.bf16.msra.mxu0 0
      %968 = vmatprep.subr.bf16.mxu0 0
      %969 = vmatpush1.bf16.msra.mxu0 0
      %970 = vmatprep.subr.bf16.mxu0 0
      %971 = vmatpush1.bf16.msra.mxu0 0
      %972 = vmatprep.subr.bf16.mxu0 0
      %973 = vmatpush1.bf16.msra.mxu0 %v915
      %974 = vmatprep.subr.bf16.mxu0 0
      %975 = vmatpush2.bf16.msra.mxu0 0
      %976 = vmatprep.subr.bf16.mxu0 0
      %977 = vmatpush2.bf16.msra.mxu0 0
      %978 = vmatprep.subr.bf16.mxu0 0
      %979 = vmatpush2.bf16.msra.mxu0 0
      %980 = vmatprep.subr.bf16.mxu0 0
      %981 = vmatpush2.bf16.msra.mxu0 0
      %982 = vmatprep.subr.bf16.mxu0 0
      %983 = vmatpush2.bf16.msra.mxu0 0
      %984 = vmatprep.subr.bf16.mxu0 0
      %985 = vmatpush2.bf16.msra.mxu0 0
      %986 = vmatprep.subr.bf16.mxu0 0
      %987 = vmatpush2.bf16.msra.mxu0 0
      %988 = vmatprep.subr.bf16.mxu0 0
      %989 = vmatpush2.bf16.msra.mxu0 0
      %990 = vmatprep.mubr.bf16.mxu0 0
      %991 = vmatmul.mubr.bf16.gmra.mxu0 %v906
      %v992 = vpop.f32.mrf.mxu0
      %v993 = vadd.f32 0.0, %v992
      %v994 = vpop.f32.mrf.mxu0
      %v995 = vpop.f32.mrf.mxu0
      %v996 = vpop.f32.mrf.mxu0
      %997 = vdwg.mxu0
      %v998 = vadd.f32 %v891, %v952
      %v999 = vadd.f32 %v892, %v954
      %v1000 = vadd.f32 %v893, %v993
      %s1001 = scalar_lea.vmem %s1, 14
      %v1002 = vld [vmem:[%s1001] sm:$0x3]
      %1003 = vrot.lane.b32.xlu0 %v260, 91
      %v1004 = vpop.permute.xlu0 %1003
      %1005 = vrot.lane.b32.xlu0 %v268, 91
      %v1006 = vpop.permute.xlu0 %1005
      %1007 = vrot.lane.b32.xlu0 %v267, 91
      %v1008 = vpop.permute.xlu0 %1007
      %vm1009 = vcmask 744448
      %v1010 = vsel %vm1009, %v1004, %v1006
      %v1011 = vsel %vm1009, %v1006, %v1008
      %v1013 = vsel %vm278, %v1002, 0
      %v1016 = vsel %vm282, %v1010, 0
      %v1019 = vsel %vm282, %v1011, 0
      %v1022 = vsel %vm282, %v1008, 0
      %1024 = vmatprep.subr.bf16.mxu0 0
      %1025 = vmatpush1.bf16.msra.mxu0 0
      %1026 = vmatprep.subr.bf16.mxu0 0
      %1027 = vmatpush1.bf16.msra.mxu0 0
      %1028 = vmatprep.subr.bf16.mxu0 0
      %1029 = vmatpush1.bf16.msra.mxu0 0
      %1030 = vmatprep.subr.bf16.mxu0 0
      %1031 = vmatpush1.bf16.msra.mxu0 0
      %1032 = vmatprep.subr.bf16.mxu0 0
      %1033 = vmatpush1.bf16.msra.mxu0 0
      %1034 = vmatprep.subr.bf16.mxu0 0
      %1035 = vmatpush1.bf16.msra.mxu0 0
      %1036 = vmatprep.subr.bf16.mxu0 0
      %1037 = vmatpush1.bf16.msra.mxu0 0
      %1038 = vmatprep.subr.bf16.mxu0 %v1019
      %1039 = vmatpush1.bf16.msra.mxu0 %v1016
      %1040 = vmatprep.subr.bf16.mxu0 0
      %1041 = vmatpush2.bf16.msra.mxu0 0
      %1042 = vmatprep.subr.bf16.mxu0 0
      %1043 = vmatpush2.bf16.msra.mxu0 0
      %1044 = vmatprep.subr.bf16.mxu0 0
      %1045 = vmatpush2.bf16.msra.mxu0 0
      %1046 = vmatprep.subr.bf16.mxu0 0
      %1047 = vmatpush2.bf16.msra.mxu0 0
      %1048 = vmatprep.subr.bf16.mxu0 0
      %1049 = vmatpush2.bf16.msra.mxu0 0
      %1050 = vmatprep.subr.bf16.mxu0 0
      %1051 = vmatpush2.bf16.msra.mxu0 0
      %1052 = vmatprep.subr.bf16.mxu0 0
      %1053 = vmatpush2.bf16.msra.mxu0 0
      %1054 = vmatprep.subr.bf16.mxu0 0
      %1055 = vmatpush2.bf16.msra.mxu0 0
      %1056 = vmatprep.mubr.bf16.mxu0 0
      %1057 = vmatmul.mubr.bf16.gmra.mxu0 %v1013
      %v1058 = vpop.f32.mrf.mxu0
      %v1059 = vadd.f32 0.0, %v1058
      %v1060 = vpop.f32.mrf.mxu0
      %v1061 = vadd.f32 0.0, %v1060
      %v1062 = vpop.f32.mrf.mxu0
      %v1063 = vpop.f32.mrf.mxu0
      %1064 = vdwg.mxu0
      %1065 = vmatprep.subr.bf16.mxu0 0
      %1066 = vmatpush1.bf16.msra.mxu0 0
      %1067 = vmatprep.subr.bf16.mxu0 0
      %1068 = vmatpush1.bf16.msra.mxu0 0
      %1069 = vmatprep.subr.bf16.mxu0 0
      %1070 = vmatpush1.bf16.msra.mxu0 0
      %1071 = vmatprep.subr.bf16.mxu0 0
      %1072 = vmatpush1.bf16.msra.mxu0 0
      %1073 = vmatprep.subr.bf16.mxu0 0
      %1074 = vmatpush1.bf16.msra.mxu0 0
      %1075 = vmatprep.subr.bf16.mxu0 0
      %1076 = vmatpush1.bf16.msra.mxu0 0
      %1077 = vmatprep.subr.bf16.mxu0 0
      %1078 = vmatpush1.bf16.msra.mxu0 0
      %1079 = vmatprep.subr.bf16.mxu0 0
      %1080 = vmatpush1.bf16.msra.mxu0 %v1022
      %1081 = vmatprep.subr.bf16.mxu0 0
      %1082 = vmatpush2.bf16.msra.mxu0 0
      %1083 = vmatprep.subr.bf16.mxu0 0
      %1084 = vmatpush2.bf16.msra.mxu0 0
      %1085 = vmatprep.subr.bf16.mxu0 0
      %1086 = vmatpush2.bf16.msra.mxu0 0
      %1087 = vmatprep.subr.bf16.mxu0 0
      %1088 = vmatpush2.bf16.msra.mxu0 0
      %1089 = vmatprep.subr.bf16.mxu0 0
      %1090 = vmatpush2.bf16.msra.mxu0 0
      %1091 = vmatprep.subr.bf16.mxu0 0
      %1092 = vmatpush2.bf16.msra.mxu0 0
      %1093 = vmatprep.subr.bf16.mxu0 0
      %1094 = vmatpush2.bf16.msra.mxu0 0
      %1095 = vmatprep.subr.bf16.mxu0 0
      %1096 = vmatpush2.bf16.msra.mxu0 0
      %1097 = vmatprep.mubr.bf16.mxu0 0
      %1098 = vmatmul.mubr.bf16.gmra.mxu0 %v1013
      %v1099 = vpop.f32.mrf.mxu0
      %v1100 = vadd.f32 0.0, %v1099
      %v1101 = vpop.f32.mrf.mxu0
      %v1102 = vpop.f32.mrf.mxu0
      %v1103 = vpop.f32.mrf.mxu0
      %1104 = vdwg.mxu0
      %v1105 = vadd.f32 %v998, %v1059
      %v1106 = vadd.f32 %v999, %v1061
      %v1107 = vadd.f32 %v1000, %v1100
      %s1108 = scalar_lea.vmem %s1, 16
      %v1109 = vld [vmem:[%s1108] sm:$0x3]
      %1110 = vrot.lane.b32.xlu0 %v260, 90
      %v1111 = vpop.permute.xlu0 %1110
      %1112 = vrot.lane.b32.xlu0 %v268, 90
      %v1113 = vpop.permute.xlu0 %1112
      %1114 = vrot.lane.b32.xlu0 %v267, 90
      %v1115 = vpop.permute.xlu0 %1114
      %vm1116 = vcmask 736256
      %v1117 = vsel %vm1116, %v1111, %v1113
      %v1118 = vsel %vm1116, %v1113, %v1115
      %v1120 = vsel %vm278, %v1109, 0
      %v1123 = vsel %vm282, %v1117, 0
      %v1126 = vsel %vm282, %v1118, 0
      %v1129 = vsel %vm282, %v1115, 0
      %1131 = vmatprep.subr.bf16.mxu0 0
      %1132 = vmatpush1.bf16.msra.mxu0 0
      %1133 = vmatprep.subr.bf16.mxu0 0
      %1134 = vmatpush1.bf16.msra.mxu0 0
      %1135 = vmatprep.subr.bf16.mxu0 0
      %1136 = vmatpush1.bf16.msra.mxu0 0
      %1137 = vmatprep.subr.bf16.mxu0 0
      %1138 = vmatpush1.bf16.msra.mxu0 0
      %1139 = vmatprep.subr.bf16.mxu0 0
      %1140 = vmatpush1.bf16.msra.mxu0 0
      %1141 = vmatprep.subr.bf16.mxu0 0
      %1142 = vmatpush1.bf16.msra.mxu0 0
      %1143 = vmatprep.subr.bf16.mxu0 0
      %1144 = vmatpush1.bf16.msra.mxu0 0
      %1145 = vmatprep.subr.bf16.mxu0 %v1126
      %1146 = vmatpush1.bf16.msra.mxu0 %v1123
      %1147 = vmatprep.subr.bf16.mxu0 0
      %1148 = vmatpush2.bf16.msra.mxu0 0
      %1149 = vmatprep.subr.bf16.mxu0 0
      %1150 = vmatpush2.bf16.msra.mxu0 0
      %1151 = vmatprep.subr.bf16.mxu0 0
      %1152 = vmatpush2.bf16.msra.mxu0 0
      %1153 = vmatprep.subr.bf16.mxu0 0
      %1154 = vmatpush2.bf16.msra.mxu0 0
      %1155 = vmatprep.subr.bf16.mxu0 0
      %1156 = vmatpush2.bf16.msra.mxu0 0
      %1157 = vmatprep.subr.bf16.mxu0 0
      %1158 = vmatpush2.bf16.msra.mxu0 0
      %1159 = vmatprep.subr.bf16.mxu0 0
      %1160 = vmatpush2.bf16.msra.mxu0 0
      %1161 = vmatprep.subr.bf16.mxu0 0
      %1162 = vmatpush2.bf16.msra.mxu0 0
      %1163 = vmatprep.mubr.bf16.mxu0 0
      %1164 = vmatmul.mubr.bf16.gmra.mxu0 %v1120
      %v1165 = vpop.f32.mrf.mxu0
      %v1166 = vadd.f32 0.0, %v1165
      %v1167 = vpop.f32.mrf.mxu0
      %v1168 = vadd.f32 0.0, %v1167
      %v1169 = vpop.f32.mrf.mxu0
      %v1170 = vpop.f32.mrf.mxu0
      %1171 = vdwg.mxu0
      %1172 = vmatprep.subr.bf16.mxu0 0
      %1173 = vmatpush1.bf16.msra.mxu0 0
      %1174 = vmatprep.subr.bf16.mxu0 0
      %1175 = vmatpush1.bf16.msra.mxu0 0
      %1176 = vmatprep.subr.bf16.mxu0 0
      %1177 = vmatpush1.bf16.msra.mxu0 0
      %1178 = vmatprep.subr.bf16.mxu0 0
      %1179 = vmatpush1.bf16.msra.mxu0 0
      %1180 = vmatprep.subr.bf16.mxu0 0
      %1181 = vmatpush1.bf16.msra.mxu0 0
      %1182 = vmatprep.subr.bf16.mxu0 0
      %1183 = vmatpush1.bf16.msra.mxu0 0
      %1184 = vmatprep.subr.bf16.mxu0 0
      %1185 = vmatpush1.bf16.msra.mxu0 0
      %1186 = vmatprep.subr.bf16.mxu0 0
      %1187 = vmatpush1.bf16.msra.mxu0 %v1129
      %1188 = vmatprep.subr.bf16.mxu0 0
      %1189 = vmatpush2.bf16.msra.mxu0 0
      %1190 = vmatprep.subr.bf16.mxu0 0
      %1191 = vmatpush2.bf16.msra.mxu0 0
      %1192 = vmatprep.subr.bf16.mxu0 0
      %1193 = vmatpush2.bf16.msra.mxu0 0
      %1194 = vmatprep.subr.bf16.mxu0 0
      %1195 = vmatpush2.bf16.msra.mxu0 0
      %1196 = vmatprep.subr.bf16.mxu0 0
      %1197 = vmatpush2.bf16.msra.mxu0 0
      %1198 = vmatprep.subr.bf16.mxu0 0
      %1199 = vmatpush2.bf16.msra.mxu0 0
      %1200 = vmatprep.subr.bf16.mxu0 0
      %1201 = vmatpush2.bf16.msra.mxu0 0
      %1202 = vmatprep.subr.bf16.mxu0 0
      %1203 = vmatpush2.bf16.msra.mxu0 0
      %1204 = vmatprep.mubr.bf16.mxu0 0
      %1205 = vmatmul.mubr.bf16.gmra.mxu0 %v1120
      %v1206 = vpop.f32.mrf.mxu0
      %v1207 = vadd.f32 0.0, %v1206
      %v1208 = vpop.f32.mrf.mxu0
      %v1209 = vpop.f32.mrf.mxu0
      %v1210 = vpop.f32.mrf.mxu0
      %1211 = vdwg.mxu0
      %v1212 = vadd.f32 %v1105, %v1166
      %v1213 = vadd.f32 %v1106, %v1168
      %v1214 = vadd.f32 %v1107, %v1207
      %v1215 = vld [vmem:[%s2] sm:$0xf]
      %1217 = vset.pattern.permute.xlu0 0
      %1218 = vperm.xlu0 %1217, %v1215
      %v1219 = vpop.permute.xlu0 %1218
      %v1221 = vadd.f32 %v1212, %v1219
      %v1222 = vadd.f32 %v1213, %v1219
      %v1223 = vadd.f32 %v1214, %v1219
      %v1226 = vcombine.low %v1221, %v1222
      %1228 = vst [vmem:[%s246] sm:$0xff] %v1226
      %vm1229 = vcmask 257024
      %1230 = vst.msk [vmem:[%s246 + $0x8] sm:$0xf] %vm1229, %v1223
      %p1231 = scmp.eq.s32.totalorder %s18, 0
      // Predicated region
      $region37: #{up_block_skip_forward.4} parent=35 // pred_check
        %p1232 = pneg %p1231
      $region38: #{up_block_skip_forward.4} parent=35 // pred_check_branch
        %1234 = sbr.rel (%p1232) target = $region40
      $region39: #{up_block_skip_forward.4} parent=35 // pred_region
        %vm1235 = vcmask 3072
        %1236 = vst.msk [vmem:[%s5] sm:$0xf] %vm1235, 0.0
        %1237 = vst.msk [vmem:[%s6] sm:$0xf] %vm1235, 0.0
      $region40: #{up_block_skip_forward.4} parent=35 // pred_fallthru
        _
      %v1238 = vld [vmem:[%s3] sm:$0x7]
      %v1240 = vlaneseq
      %v1241 = vshrl.u32 %v1240, 7
      %v1242 = vsub.s32 0, %v1241
      %v1243 = vrot.slane %v1238, %v1242
      %v1244 = vlaneseq
      %v1245 = vshrl.u32 %v1244, 7
      %v1246 = vsub.s32 1, %v1245
      %v1247 = vrot.slane %v1238, %v1246
      %v1248 = vlaneseq
      %v1249 = vshrl.u32 %v1248, 7
      %v1250 = vsub.s32 2, %v1249
      %v1251 = vrot.slane %v1238, %v1250
      %v1255 = vmul.f32 %v1221, %v1243
      %v1256 = vmul.f32 %v1222, %v1247
      %v1257 = vmul.f32 %v1223, %v1251
      %v1258 = vld [vmem:[%s5] sm:$0xf]
      %vm1259 = vcmask 1043456
      %v1260 = vsel %vm1259, %v1255, 0.0
      %v1261 = vsel %vm1259, %v1256, 0.0
      %v1262 = vadd.f32 %v1260, %v1261
      %v1263 = vsel %vm1229, %v1257, 0.0
      %v1264 = vadd.f32 %v1262, %v1263
      %1265 = vadd.xlane.f32.xlu0 %v1264
      %v1266 = vpop.xlane.xlu0 %1265
      %v1267 = vadd.f32 %v1258, %v1266
      %vm1268 = vcmask 3072
      %1269 = vst.msk [vmem:[%s5] sm:$0xf] %vm1268, %v1267
      %v1270 = vld [vmem:[%s6] sm:$0xf]
      %v1271 = vmul.f32 %v1255, %v1221
      %v1272 = vmul.f32 %v1256, %v1222
      %v1273 = vmul.f32 %v1257, %v1223
      %v1274 = vsel %vm1259, %v1271, 0.0
      %v1275 = vsel %vm1259, %v1272, 0.0
      %v1276 = vadd.f32 %v1274, %v1275
      %v1277 = vsel %vm1229, %v1273, 0.0
      %v1278 = vadd.f32 %v1276, %v1277
      %1279 = vadd.xlane.f32.xlu0 %v1278
      %v1280 = vpop.xlane.xlu0 %1279
      %v1281 = vadd.f32 %v1270, %v1280
      %1282 = vst.msk [vmem:[%s6] sm:$0xf] %vm1268, %v1281
      %p1283 = scmp.lt.s32.totalorder %s18, 1
      %s1284 = scalar_select %p1283, %s18, 1
      %s1285 = smul.addr %s1284, 3
      %s1286 = smul.addr %s1285, 4
      %s1287 = scalar_lea.vmem %s4, %s1286
      // Predicated region
      $region41: #{up_block_skip_forward.4} parent=35 // pred_check
        %p1288 = pneg %p125
      $region42: #{up_block_skip_forward.4} parent=35 // pred_check_branch
        %1290 = sbr.rel (%p1288) target = $region44
      $region43: #{up_block_skip_forward.4} parent=35 // pred_region
        _
      $region44: #{up_block_skip_forward.4} parent=35 // pred_fallthru
        _
      // Predicated region
      $region45: #{up_block_skip_forward.4} parent=35 // pred_check
        %p1291 = pneg %p146
      $region46: #{up_block_skip_forward.4} parent=35 // pred_check_branch
        %1293 = sbr.rel (%p1291) target = $region48
      $region47: #{up_block_skip_forward.4} parent=35 // pred_region
        _
      $region48: #{up_block_skip_forward.4} parent=35 // pred_fallthru
        _
      // Predicated region
      $region49: #{up_block_skip_forward.4} parent=35 // pred_check
        %p1294 = pneg %p167
      $region50: #{up_block_skip_forward.4} parent=35 // pred_check_branch
        %1296 = sbr.rel (%p1294) target = $region52
      $region51: #{up_block_skip_forward.4} parent=35 // pred_region
        _
      $region52: #{up_block_skip_forward.4} parent=35 // pred_fallthru
        _
      // Predicated region
      $region53: #{up_block_skip_forward.4} parent=35 // pred_check
        %p1297 = pneg %p146
      $region54: #{up_block_skip_forward.4} parent=35 // pred_check_branch
        %1299 = sbr.rel (%p1297) target = $region56
      $region55: #{up_block_skip_forward.4} parent=35 // pred_region
        _
      $region56: #{up_block_skip_forward.4} parent=35 // pred_fallthru
        _
      // Predicated region
      $region57: #{up_block_skip_forward.4} parent=35 // pred_check
        %p1300 = pneg %p167
      $region58: #{up_block_skip_forward.4} parent=35 // pred_check_branch
        %1302 = sbr.rel (%p1300) target = $region60
      $region59: #{up_block_skip_forward.4} parent=35 // pred_region
        _
      $region60: #{up_block_skip_forward.4} parent=35 // pred_fallthru
        _
    $region36: #{up_block_skip_forward.4} parent=5 // pred_fallthru
      _
    %p1303 = scmp.le.s32.totalorder 2, %s13
    // Predicated region
    $region61: #{up_block_skip_forward.4} parent=5 // pred_check
      %p1304 = pneg %p1303
    $region62: #{up_block_skip_forward.4} parent=5 // pred_check_branch
      %1306 = sbr.rel (%p1304) target = $region64
    $region63: #{up_block_skip_forward.4} parent=5 // pred_region
      %s1307 = ssub.s32 %s13, 2
      // Predicated region
      $region65: #{up_block_skip_forward.4} parent=63 // pred_check
        %p1308 = pneg %p131
      $region66: #{up_block_skip_forward.4} parent=63 // pred_check_branch
        %1310 = sbr.rel (%p1308) target = $region68
      $region67: #{up_block_skip_forward.4} parent=63 // pred_region
        %p1311 = scmp.lt.s32.totalorder %s19, 1
        %s1312 = scalar_select %p1311, %s19, 1
        %s1313 = smul.addr %s1312, 3
        %s1314 = smul.addr %s1313, 4
        %s1315 = scalar_lea.vmem %s4, %s1314
      $region68: #{up_block_skip_forward.4} parent=63 // pred_fallthru
        _
    $region64: #{up_block_skip_forward.4} parent=5 // pred_fallthru
      _
  $region6: #{up_block_skip_forward.4} parent=0 // loop_footer
    %s17 = sadd.s32 1, %s13
  $region7: #{up_block_skip_forward.4} parent=0 // loop_footer_branch
    %12 = sbr.rel target = $region3
  $region8: #{up_block_skip_forward.4} parent=0 // loop_exit
    _

</llo_original>
